<compile_context>
chip_gen: v6e
topology: v6e:2x2x1
jax: 0.10.0
libtpu: 0.0.40
codegen_flags: <defaults>
</compile_context>

<pallas_src>
import numpy as np
import jax
import jax.numpy as jnp
from jax import lax
from jax.experimental import pallas as pl
from jax.experimental.pallas import tpu as pltpu

F32 = jnp.float32

# ------------------------- model sizes (small) -------------------------
VOCAB_WORD   = 20   # len(word_dict)
NEMBED_WORD  = 32   # args.nembed_word
LEN_CUTOFF   = 10
NHID_POS     = 32
NHID_SPEAKER = 32
CTX_VOCAB    = 11   # len(context_dict)
CTX_ITEMS    = 3    # count/value pairs -> ctx length 6
NEMBED_CTX   = 16   # args.nembed_ctx
NHID_CTX     = 32   # args.nhid_ctx  (query_size Q)
NHID_ATTN    = 32   # args.nhid_attn (hidden_size H, per GRU direction)
NHID_SEL     = 32   # args.nhid_sel
VALUE_SIZE   = NEMBED_WORD + NHID_POS + NHID_SPEAKER   # 96
INIT_RANGE   = 0.1

H  = NHID_ATTN
H2 = 2 * H
GW = 256            # packed gate width: fwd r,z,n lanes 0:96 | bwd 128:224
EMB_ROWS = 64       # folded (word|speaker|pos) table rows (50 used)
CTX_ROWS = 64       # block-diag ctx tables rows (33 used)

# ---- packed-weight row offsets (all multiples of 8 sublanes) ----
R_WIH   = 0     # (64, 256)  folded emb @ W_ih  (gates lane-aligned)
R_WHH   = 64    # (64, 256)  block-diag [fwd_whh | bwd_whh]
R_BIH   = 128   # (1, 256)
R_BHH   = 136   # (1, 256)
R_CTXB  = 144   # (1, 32)
R_WBQ   = 152   # (1, 32)
R_WBV   = 160   # (1, 32)
R_WWO   = 168   # (1, 32)   word_wo row vector (lane reduce)
R_SBQ   = 176   # (1, 32)
R_SBV   = 184   # (1, 32)
R_SWO   = 192   # (1, 32)
R_SELB1 = 200   # (1, 32)
R_SELW2 = 208   # (1, 32)
R_SCAL  = 216   # (1, 3)    [word_bo, sent_bo, sel_b2]
R_CNT   = 224   # (64, 48)  block-diag count embedding
R_VAL   = 288   # (64, 48)  block-diag value embedding
R_CTXW  = 352   # (48, 32)
R_WQW   = 400   # (32, 32)
R_WVW   = 432   # (64, 32)
R_SQW   = 496   # (32, 32)
R_SVW   = 528   # (64, 32)
R_SELW1 = 592   # (96, 32)
PACK_ROWS = 688


def _round_up(x, m):
    return ((x + m - 1) // m) * m


# ------------------------- parameter init -------------------------
def init_params(key):
    def u(k, shape, scale=INIT_RANGE):
        return jax.random.uniform(k, shape, F32, -scale, scale)

    keys = iter(jax.random.split(key, 64))
    p = {}
    p["word_emb"]    = u(next(keys), (VOCAB_WORD, NEMBED_WORD))
    p["pos_emb"]     = u(next(keys), (LEN_CUTOFF, NHID_POS))
    p["speaker_emb"] = u(next(keys), (VOCAB_WORD, NHID_SPEAKER))
    p["ctx_cnt_emb"] = u(next(keys), (CTX_VOCAB, NEMBED_CTX))
    p["ctx_val_emb"] = u(next(keys), (CTX_VOCAB, NEMBED_CTX))
    p["ctx_w"]       = u(next(keys), (CTX_ITEMS * NEMBED_CTX, NHID_CTX))
    p["ctx_b"]       = u(next(keys), (1, NHID_CTX))
    # bidirectional GRU, gate-packed columns = [fwd r,z,n | bwd r,z,n]
    p["gru_wih"]     = u(next(keys), (VALUE_SIZE, 6 * H))
    p["gru_bih"]     = u(next(keys), (1, 6 * H))
    p["gru_fwd_whh"] = u(next(keys), (H, 3 * H))
    p["gru_fwd_bhh"] = u(next(keys), (1, 3 * H))
    p["gru_bwd_whh"] = u(next(keys), (H, 3 * H))
    p["gru_bwd_bhh"] = u(next(keys), (1, 3 * H))
    for lvl in ("word", "sent"):
        p[f"{lvl}_wq"] = u(next(keys), (NHID_CTX, H))
        p[f"{lvl}_bq"] = u(next(keys), (1, H))
        p[f"{lvl}_wv"] = u(next(keys), (2 * H, H))
        p[f"{lvl}_bv"] = u(next(keys), (1, H))
        p[f"{lvl}_wo"] = u(next(keys), (1, H))
        p[f"{lvl}_bo"] = u(next(keys), (1, 1))
    p["sel_w1"] = u(next(keys), (2 * H + NHID_CTX, NHID_SEL))
    p["sel_b1"] = u(next(keys), (1, NHID_SEL))
    p["sel_w2"] = u(next(keys), (1, NHID_SEL))
    p["sel_b2"] = u(next(keys), (1, 1))
    return p


# ------------------------- one-time host-side weight packing ----------------
def pack_params(p):
    """Pre-concatenate every weight into a single 256-lane f32 slab.  The
    word/speaker/pos embedding tables are folded into W_ih (one matmul does
    embedding lookup + GRU input projection) and Whh is block-diagonalised so
    the fwd+bwd recurrence is a single per-step matmul."""
    hp = lax.Precision.HIGHEST
    e_x = jnp.zeros((EMB_ROWS, VALUE_SIZE), F32)
    e_x = e_x.at[0:VOCAB_WORD, 0:NEMBED_WORD].set(p["word_emb"])
    e_x = e_x.at[VOCAB_WORD:2 * VOCAB_WORD,
                 NEMBED_WORD:NEMBED_WORD + NHID_SPEAKER].set(p["speaker_emb"])
    e_x = e_x.at[2 * VOCAB_WORD:2 * VOCAB_WORD + LEN_CUTOFF,
                 NEMBED_WORD + NHID_SPEAKER:VALUE_SIZE].set(p["pos_emb"])
    wih_fold = jnp.dot(e_x, p["gru_wih"], precision=hp)          # (64, 192)

    wpk = jnp.zeros((PACK_ROWS, GW), F32)

    def put(buf, r, c, w):
        return buf.at[r:r + w.shape[0], c:c + w.shape[1]].set(w)

    wpk = put(wpk, R_WIH, 0,   wih_fold[:, 0:3 * H])
    wpk = put(wpk, R_WIH, 128, wih_fold[:, 3 * H:6 * H])
    wpk = put(wpk, R_WHH, 0,       p["gru_fwd_whh"])
    wpk = put(wpk, R_WHH + H, 128, p["gru_bwd_whh"])
    wpk = put(wpk, R_BIH, 0,   p["gru_bih"][:, 0:3 * H])
    wpk = put(wpk, R_BIH, 128, p["gru_bih"][:, 3 * H:6 * H])
    wpk = put(wpk, R_BHH, 0,   p["gru_fwd_bhh"])
    wpk = put(wpk, R_BHH, 128, p["gru_bwd_bhh"])
    wpk = put(wpk, R_CTXB, 0,  p["ctx_b"])
    wpk = put(wpk, R_WBQ, 0,   p["word_bq"])
    wpk = put(wpk, R_WBV, 0,   p["word_bv"])
    wpk = put(wpk, R_WWO, 0,   p["word_wo"])
    wpk = put(wpk, R_SBQ, 0,   p["sent_bq"])
    wpk = put(wpk, R_SBV, 0,   p["sent_bv"])
    wpk = put(wpk, R_SWO, 0,   p["sent_wo"])
    wpk = put(wpk, R_SELB1, 0, p["sel_b1"])
    wpk = put(wpk, R_SELW2, 0, p["sel_w2"])
    scal = jnp.concatenate([p["word_bo"], p["sent_bo"], p["sel_b2"]], axis=1)
    wpk = put(wpk, R_SCAL, 0, scal)
    for k in range(CTX_ITEMS):
        wpk = put(wpk, R_CNT + k * CTX_VOCAB, k * NEMBED_CTX, p["ctx_cnt_emb"])
        wpk = put(wpk, R_VAL + k * CTX_VOCAB, k * NEMBED_CTX, p["ctx_val_emb"])
    wpk = put(wpk, R_CTXW, 0, p["ctx_w"])
    wpk = put(wpk, R_WQW, 0, p["word_wq"])
    wpk = put(wpk, R_WVW, 0, p["word_wv"])
    wpk = put(wpk, R_SQW, 0, p["sent_wq"])
    wpk = put(wpk, R_SVW, 0, p["sent_wv"])
    wpk = put(wpk, R_SELW1, 0, p["sel_w1"])
    return wpk


# ------------------------- the single fused kernel -------------------------
def _build_kernel(T, B, N, MP):
    TM = T * MP
    K = CTX_ITEMS * NEMBED_CTX        # 48

    def kernel(tok_ref, cid_ref, wpk_ref, out_ref, gi_ref, hw_ref):
        # ---- fused embedding lookup + GRU input projection (one matmul) ----
        lane = lax.broadcasted_iota(jnp.int32, (TM, EMB_ROWS), 1)
        wid = tok_ref[:, 0:1]
        sid = tok_ref[:, 1:2]
        pid = tok_ref[:, 2:3]
        mhot = ((lane == wid).astype(F32)
                + (lane == sid + VOCAB_WORD).astype(F32)
                + (lane == pid + 2 * VOCAB_WORD).astype(F32))          # (TM,64)
        gi_ref[...] = (jnp.dot(mhot, wpk_ref[R_WIH:R_WIH + EMB_ROWS, :],
                               preferred_element_type=F32)
                       + wpk_ref[R_BIH:R_BIH + 1, :])                  # (TM,256)

        # ---- MlpContextEncoder (per (sentence, batch) row) ----
        lane_c = lax.broadcasted_iota(jnp.int32, (MP, CTX_ROWS), 1)
        m_cnt = jnp.zeros((MP, CTX_ROWS), F32)
        m_val = jnp.zeros((MP, CTX_ROWS), F32)
        for k in range(CTX_ITEMS):
            m_cnt = m_cnt + (lane_c == cid_ref[:, 2 * k:2 * k + 1]
                             + k * CTX_VOCAB).astype(F32)
            m_val = m_val + (lane_c == cid_ref[:, 2 * k + 1:2 * k + 2]
                             + k * CTX_VOCAB).astype(F32)
        cnt_f = jnp.dot(m_cnt, wpk_ref[R_CNT:R_CNT + CTX_ROWS, 0:K],
                        preferred_element_type=F32)
        val_f = jnp.dot(m_val, wpk_ref[R_VAL:R_VAL + CTX_ROWS, 0:K],
                        preferred_element_type=F32)
        ctx_h = (jnp.dot(jnp.tanh(cnt_f * val_f),
                         wpk_ref[R_CTXW:R_CTXW + K, 0:NHID_CTX],
                         preferred_element_type=F32)
                 + wpk_ref[R_CTXB:R_CTXB + 1, 0:NHID_CTX])             # (MP,Q)

        # ---- bidirectional GRU: one block-diag matmul per step ----
        # Live state across the (statically unrolled) loop is only the
        # (MP, 2H) carry; gi slabs are reloaded from VMEM scratch and the
        # per-step hidden states are stored straight into the hw scratch.
        h = jnp.zeros((MP, H2), F32)
        for s in range(T):
            tf, tb = s, T - 1 - s
            gh = (jnp.dot(h, wpk_ref[R_WHH:R_WHH + H2, :],
                          preferred_element_type=F32)
                  + wpk_ref[R_BHH:R_BHH + 1, :])                       # (MP,256)
            gif = gi_ref[tf * MP:(tf + 1) * MP, :]
            gib = gi_ref[tb * MP:(tb + 1) * MP, :]
            r_f = jax.nn.sigmoid(gif[:, 0:H] + gh[:, 0:H])
            z_f = jax.nn.sigmoid(gif[:, H:2 * H] + gh[:, H:2 * H])
            n_f = jnp.tanh(gif[:, 2 * H:3 * H] + r_f * gh[:, 2 * H:3 * H])
            h_f = (1.0 - z_f) * n_f + z_f * h[:, 0:H]
            r_b = jax.nn.sigmoid(gib[:, 128:128 + H] + gh[:, 128:128 + H])
            z_b = jax.nn.sigmoid(gib[:, 128 + H:128 + 2 * H]
                                 + gh[:, 128 + H:128 + 2 * H])
            n_b = jnp.tanh(gib[:, 128 + 2 * H:128 + 3 * H]
                           + r_b * gh[:, 128 + 2 * H:128 + 3 * H])
            h_b = (1.0 - z_b) * n_b + z_b * h[:, H:H2]
            hw_ref[tf * MP:(tf + 1) * MP, 0:H] = h_f
            hw_ref[tb * MP:(tb + 1) * MP, H:H2] = h_b
            h = jnp.concatenate([h_f, h_b], axis=1)

        # ---- word-level additive attention (batched over all T) ----
        hw = hw_ref[...]                                               # (TM,2H)
        hq_w = (jnp.dot(ctx_h, wpk_ref[R_WQW:R_WQW + NHID_CTX, 0:H],
                        preferred_element_type=F32)
                + wpk_ref[R_WBQ:R_WBQ + 1, 0:H])                       # (MP,H)
        hv_w = (jnp.dot(hw, wpk_ref[R_WVW:R_WVW + H2, 0:H],
                        preferred_element_type=F32)
                + wpk_ref[R_WBV:R_WBV + 1, 0:H])                       # (TM,H)
        t3 = jnp.tanh(hv_w.reshape(T, MP, H) + hq_w[None])             # (T,MP,H)
        wo_w = wpk_ref[R_WWO:R_WWO + 1, 0:H]
        logit_tm = (jnp.sum(t3 * wo_w[None], axis=2)
                    + wpk_ref[R_SCAL:R_SCAL + 1, 0:1])                 # (T,MP)
        logit = jnp.transpose(logit_tm, (1, 0))                        # (MP,T)
        logit = logit - jnp.max(logit, axis=1, keepdims=True)
        e = jnp.exp(logit)
        word_p = e * pl.reciprocal(jnp.sum(e, axis=1, keepdims=True),
                                   approx=True)                        # (MP,T)
        sent_vec = jnp.zeros((MP, H2), F32)
        for t in range(T):
            sent_vec = sent_vec + word_p[:, t:t + 1] * hw[t * MP:(t + 1) * MP, :]

        # ---- sentence-level additive attention (real rows only) ----
        hq_s = (jnp.dot(ctx_h, wpk_ref[R_SQW:R_SQW + NHID_CTX, 0:H],
                        preferred_element_type=F32)
                + wpk_ref[R_SBQ:R_SBQ + 1, 0:H])
        hv_s = (jnp.dot(sent_vec, wpk_ref[R_SVW:R_SVW + H2, 0:H],
                        preferred_element_type=F32)
                + wpk_ref[R_SBV:R_SBV + 1, 0:H])
        lrow = (jnp.sum(jnp.tanh(hv_s + hq_s) * wpk_ref[R_SWO:R_SWO + 1, 0:H],
                        axis=1, keepdims=True)
                + wpk_ref[R_SCAL:R_SCAL + 1, 1:2])                     # (MP,1)
        slog = jnp.concatenate([lrow[n * B:(n + 1) * B] for n in range(N)],
                               axis=1)                                 # (B,N)
        slog = slog - jnp.max(slog, axis=1, keepdims=True)
        es = jnp.exp(slog)
        sent_p = es * pl.reciprocal(jnp.sum(es, axis=1, keepdims=True),
                                    approx=True)
        h_sent = jnp.zeros((B, H2), F32)
        for n in range(N):
            h_sent = h_sent + sent_p[:, n:n + 1] * sent_vec[n * B:(n + 1) * B, :]

        # ---- selection head ----
        sh = jnp.tanh(
            jnp.dot(h_sent, wpk_ref[R_SELW1:R_SELW1 + H2, 0:NHID_SEL],
                    preferred_element_type=F32)
            + jnp.dot(ctx_h[0:B],
                      wpk_ref[R_SELW1 + H2:R_SELW1 + H2 + NHID_CTX, 0:NHID_SEL],
                      preferred_element_type=F32)
            + wpk_ref[R_SELB1:R_SELB1 + 1, 0:NHID_SEL])
        sel = (jnp.sum(sh * wpk_ref[R_SELW2:R_SELW2 + 1, 0:NHID_SEL],
                       axis=1, keepdims=True)
               + wpk_ref[R_SCAL:R_SCAL + 1, 2:3])                      # (B,1)

        # ---- single lane-dense packed output ----
        out_ref[...] = jnp.zeros((MP, 128), F32)
        out_ref[:, 0:T] = word_p
        out_ref[0:B, T:T + N] = sent_p
        out_ref[0:B, T + N:T + N + 1] = sel

    return kernel


# ------------------------- forward pass -------------------------
def _pos_table(T, B, N, MP):
    # static per-sentence position ids (same pos for every time step)
    tbl = np.zeros((T, MP), np.int32)
    for n in range(N):
        tbl[:, n * B:(n + 1) * B] = min(LEN_CUTOFF, N - n) - 1
    return tbl


def critic_model_forward(wpk, inpts, lens, rev_idxs, hid_idxs, ctx):
    del lens, rev_idxs, hid_idxs  # TODO(synk): length masking not applied
    N = len(inpts)
    T, B = inpts[0].shape
    MP = _round_up(N * B, 8)
    pad = MP - N * B
    assert T + N + 1 <= 128

    # tiny int32 id plumbing (all remaining non-kernel work)
    wid = jnp.stack(inpts, axis=1).reshape(T, N * B)
    if pad:
        wid = jnp.pad(wid, ((0, 0), (0, pad)))
    spk = jnp.broadcast_to(wid[0:1], (T, MP))          # speaker = first token
    pos = jnp.asarray(_pos_table(T, B, N, MP))
    tok_ids = jnp.stack([wid, spk, pos], axis=-1).reshape(T * MP, 3)
    tok_ids = tok_ids.astype(jnp.int32)

    cid = jnp.tile(jnp.transpose(ctx), (N, 1))          # (N*B, 2K) cnt/val ids
    if pad:
        cid = jnp.pad(cid, ((0, pad), (0, 0)))
    ctx_ids = cid.astype(jnp.int32)

    vmem = lambda: pl.BlockSpec(memory_space=pltpu.MemorySpace.VMEM)
    out = pl.pallas_call(
        _build_kernel(T, B, N, MP),
        out_shape=jax.ShapeDtypeStruct((MP, 128), F32),
        in_specs=[vmem(), vmem(), vmem()],
        out_specs=vmem(),
        scratch_shapes=[pltpu.VMEM((T * MP, GW), F32),   # gi (input-proj gates)
                        pltpu.VMEM((T * MP, H2), F32)],  # hw (BiGRU outputs)
    )(tok_ids, ctx_ids, wpk)

    sel = out[0:B, T + N:T + N + 1]
    sent_p = out[0:B, T:T + N]
    word_ps = [out[n * B:(n + 1) * B, 0:T] for n in range(N)]
    return sel, sent_p, word_ps


# ------------------------- pure-JAX reference (for checking) ---------------
def ctx_features(p, ctx):
    B = ctx.shape[1]
    cnt_e = jnp.take(p["ctx_cnt_emb"], ctx[0::2], axis=0)
    val_e = jnp.take(p["ctx_val_emb"], ctx[1::2], axis=0)
    cnt_f = jnp.transpose(cnt_e, (1, 0, 2)).reshape(B, -1)
    val_f = jnp.transpose(val_e, (1, 0, 2)).reshape(B, -1)
    return cnt_f, val_f


def forward_inpts(p, inpts):
    hs = []
    N = len(inpts)
    for i, inpt in enumerate(inpts):
        T, B = inpt.shape
        word_e = jnp.take(p["word_emb"], inpt, axis=0)
        spk_e = jnp.take(p["speaker_emb"], inpt[0], axis=0)
        spk_e = jnp.broadcast_to(spk_e[None], (T, B, NHID_SPEAKER))
        pos = min(LEN_CUTOFF, N - i) - 1
        pos_e = jnp.broadcast_to(p["pos_emb"][pos][None, None],
                                 (T, B, NHID_POS))
        hs.append(jnp.concatenate([word_e, spk_e, pos_e], axis=2))
    return hs


def reference_forward(p, inpts, ctx):
    N = len(inpts)
    T, B = inpts[0].shape
    cnt_f, val_f = ctx_features(p, ctx)
    ctx_h = jnp.tanh(cnt_f * val_f) @ p["ctx_w"] + p["ctx_b"]

    def gru_dir(x, wih, bih, whh, bhh):
        gi = jnp.einsum("tbv,vg->tbg", x, wih) + bih
        h = jnp.zeros((B, H), F32)
        outs = []
        for t in range(T):
            gh = h @ whh + bhh
            r = jax.nn.sigmoid(gi[t, :, 0:H] + gh[:, 0:H])
            z = jax.nn.sigmoid(gi[t, :, H:2 * H] + gh[:, H:2 * H])
            n = jnp.tanh(gi[t, :, 2 * H:3 * H] + r * gh[:, 2 * H:3 * H])
            h = (1.0 - z) * n + z * h
            outs.append(h)
        return jnp.stack(outs)

    def attn(lvl, q, v):
        hq = q @ p[f"{lvl}_wq"] + p[f"{lvl}_bq"]
        hv = jnp.einsum("sbv,vh->sbh", v, p[f"{lvl}_wv"]) + p[f"{lvl}_bv"]
        ht = jnp.tanh(hv + hq[None])
        logit = jnp.sum(ht * p[f"{lvl}_wo"][None], axis=-1).T + p[f"{lvl}_bo"]
        pr = jax.nn.softmax(logit, axis=1)
        return jnp.einsum("bs,sbv->bv", pr, v), pr

    hs = forward_inpts(p, inpts)
    sent_vecs, word_ps = [], []
    for x in hs:
        fwd = gru_dir(x, p["gru_wih"][:, :3 * H], p["gru_bih"][:, :3 * H],
                      p["gru_fwd_whh"], p["gru_fwd_bhh"])
        bwd = gru_dir(x[::-1], p["gru_wih"][:, 3 * H:], p["gru_bih"][:, 3 * H:],
                      p["gru_bwd_whh"], p["gru_bwd_bhh"])
        hw = jnp.concatenate([fwd, bwd[::-1]], axis=2)
        sv, wp = attn("word", ctx_h, hw)
        sent_vecs.append(sv)
        word_ps.append(wp)
    h, sent_p = attn("sent", ctx_h, jnp.stack(sent_vecs))
    h_cat = jnp.concatenate([h, ctx_h], axis=1)
    s = jnp.tanh(h_cat @ p["sel_w1"] + p["sel_b1"])
    sel = jnp.sum(s * p["sel_w2"], axis=1, keepdims=True) + p["sel_b2"]
    return sel, sent_p, word_ps


# ------------------------- main -------------------------
if __name__ == "__main__":
    key = jax.random.PRNGKey(0)
    p_key, d_key = jax.random.split(key)
    params = init_params(p_key)
    wpk = pack_params(params)          # one-time host-side packing (1 DMA/call)

    B, T, N_SENT = 2, 8, 3
    dkeys = jax.random.split(d_key, N_SENT + 1)
    inpts = [jax.random.randint(dkeys[i], (T, B), 0, VOCAB_WORD, jnp.int32)
             for i in range(N_SENT)]
    lens = [jnp.full((B,), T, jnp.int32) for _ in range(N_SENT)]
    rev_idxs = [None] * N_SENT
    hid_idxs = [None] * N_SENT
    ctx = jax.random.randint(dkeys[-1], (2 * CTX_ITEMS, B), 0, CTX_VOCAB,
                             jnp.int32)

    fwd = jax.jit(lambda w, xs, c: critic_model_forward(
        w, xs, lens, rev_idxs, hid_idxs, c))
    sel, sent_p, word_ps = fwd(wpk, inpts, ctx)
    jax.block_until_ready((sel, sent_p, word_ps))

    assert sel.shape == (B, 1)
    assert sent_p.shape == (B, N_SENT)
    assert all(wp.shape == (B, T) for wp in word_ps)

    # numerical check of the fused kernel against a pure-JAX reference
    sel_r, sent_p_r, word_ps_r = reference_forward(params, inpts, ctx)
    assert jnp.allclose(sel, sel_r, atol=1e-3, rtol=1e-3)
    assert jnp.allclose(sent_p, sent_p_r, atol=1e-3, rtol=1e-3)
    for wp, wpr in zip(word_ps, word_ps_r):
        assert jnp.allclose(wp, wpr, atol=1e-3, rtol=1e-3)

    print("KERNEL_OK")
</pallas_src>

<mosaic_0001>
module attributes {stable_mosaic.version = 11 : i64} {
  func.func @kernel(%arg0: memref<64x3xi32, #tpu.memory_space<vmem>>, %arg1: memref<8x6xi32, #tpu.memory_space<vmem>>, %arg2: memref<688x256xf32, #tpu.memory_space<vmem>>, %arg3: memref<8x128xf32, #tpu.memory_space<vmem>>, %arg4: memref<64x256xf32, #tpu.memory_space<vmem>>, %arg5: memref<64x64xf32, #tpu.memory_space<vmem>>) attributes {dimension_semantics = [], scalar_prefetch = 0 : i64, scratch_operands = 2 : i64, tpu.core_type = #tpu.core_type<tc>} {
    %0 = tpu.iota {dimensions = array<i32: 1>} : vector<64x64xi32>
    %c0 = arith.constant 0 : index
    %c0_0 = arith.constant 0 : index
    %1 = vector.load %arg0[%c0, %c0_0] : memref<64x3xi32, #tpu.memory_space<vmem>>, vector<64x1xi32>
    %c0_1 = arith.constant 0 : index
    %c1 = arith.constant 1 : index
    %2 = vector.load %arg0[%c0_1, %c1] : memref<64x3xi32, #tpu.memory_space<vmem>>, vector<64x1xi32>
    %c0_2 = arith.constant 0 : index
    %c2 = arith.constant 2 : index
    %3 = vector.load %arg0[%c0_2, %c2] : memref<64x3xi32, #tpu.memory_space<vmem>>, vector<64x1xi32>
    %4 = vector.broadcast %1 : vector<64x1xi32> to vector<64x64xi32>
    %5 = arith.cmpi eq, %0, %4 : vector<64x64xi32>
    %6 = arith.extui %5 : vector<64x64xi1> to vector<64x64xi32>
    %7 = arith.sitofp %6 : vector<64x64xi32> to vector<64x64xf32>
    %c20_i32 = arith.constant 20 : i32
    %8 = vector.broadcast %c20_i32 : i32 to vector<64x1xi32>
    %9 = arith.addi %2, %8 : vector<64x1xi32>
    %10 = vector.broadcast %9 : vector<64x1xi32> to vector<64x64xi32>
    %11 = arith.cmpi eq, %0, %10 : vector<64x64xi32>
    %12 = arith.extui %11 : vector<64x64xi1> to vector<64x64xi32>
    %13 = arith.sitofp %12 : vector<64x64xi32> to vector<64x64xf32>
    %14 = arith.addf %7, %13 : vector<64x64xf32>
    %c40_i32 = arith.constant 40 : i32
    %15 = vector.broadcast %c40_i32 : i32 to vector<64x1xi32>
    %16 = arith.addi %3, %15 : vector<64x1xi32>
    %17 = vector.broadcast %16 : vector<64x1xi32> to vector<64x64xi32>
    %18 = arith.cmpi eq, %0, %17 : vector<64x64xi32>
    %19 = arith.extui %18 : vector<64x64xi1> to vector<64x64xi32>
    %20 = arith.sitofp %19 : vector<64x64xi32> to vector<64x64xf32>
    %21 = arith.addf %14, %20 : vector<64x64xf32>
    %c0_3 = arith.constant 0 : index
    %c0_4 = arith.constant 0 : index
    %22 = vector.load %arg2[%c0_3, %c0_4] : memref<688x256xf32, #tpu.memory_space<vmem>>, vector<64x256xf32>
    %cst = arith.constant dense<0.000000e+00> : vector<64x256xf32>
    %23 = tpu.matmul %21, %22, %cst {dimension_numbers = #tpu.dot_dimension_numbers<[1], [0], [0], [1], [0, 0, 1, 1], [], []>} : vector<64x64xf32>, vector<64x256xf32>, vector<64x256xf32> -> vector<64x256xf32>
    %c128 = arith.constant 128 : index
    %c0_5 = arith.constant 0 : index
    %24 = vector.load %arg2[%c128, %c0_5] : memref<688x256xf32, #tpu.memory_space<vmem>>, vector<1x256xf32>
    %25 = vector.broadcast %24 : vector<1x256xf32> to vector<64x256xf32>
    %26 = arith.addf %23, %25 : vector<64x256xf32>
    %c0_6 = arith.constant 0 : index
    %c0_7 = arith.constant 0 : index
    %27 = vector.load %arg4[%c0_6, %c0_7] : memref<64x256xf32, #tpu.memory_space<vmem>>, vector<64x256xf32>
    tpu.vector_store %arg4[%c0_6, %c0_7], %26 {strides = array<i32>} : memref<64x256xf32, #tpu.memory_space<vmem>>, vector<64x256xf32>,
    %28 = tpu.iota {dimensions = array<i32: 1>} : vector<8x64xi32>
    %cst_8 = arith.constant 0.000000e+00 : f32
    %29 = vector.broadcast %cst_8 : f32 to vector<8x64xf32>
    %cst_9 = arith.constant 0.000000e+00 : f32
    %30 = vector.broadcast %cst_9 : f32 to vector<8x64xf32>
    %c0_10 = arith.constant 0 : index
    %c0_11 = arith.constant 0 : index
    %31 = vector.load %arg1[%c0_10, %c0_11] : memref<8x6xi32, #tpu.memory_space<vmem>>, vector<8x1xi32>
    %c0_i32 = arith.constant 0 : i32
    %32 = vector.broadcast %c0_i32 : i32 to vector<8x1xi32>
    %33 = arith.addi %31, %32 : vector<8x1xi32>
    %34 = vector.broadcast %33 : vector<8x1xi32> to vector<8x64xi32>
    %35 = arith.cmpi eq, %28, %34 : vector<8x64xi32>
    %36 = arith.extui %35 : vector<8x64xi1> to vector<8x64xi32>
    %37 = arith.sitofp %36 : vector<8x64xi32> to vector<8x64xf32>
    %38 = arith.addf %29, %37 : vector<8x64xf32>
    %c0_12 = arith.constant 0 : index
    %c1_13 = arith.constant 1 : index
    %39 = vector.load %arg1[%c0_12, %c1_13] : memref<8x6xi32, #tpu.memory_space<vmem>>, vector<8x1xi32>
    %c0_i32_14 = arith.constant 0 : i32
    %40 = vector.broadcast %c0_i32_14 : i32 to vector<8x1xi32>
    %41 = arith.addi %39, %40 : vector<8x1xi32>
    %42 = vector.broadcast %41 : vector<8x1xi32> to vector<8x64xi32>
    %43 = arith.cmpi eq, %28, %42 : vector<8x64xi32>
    %44 = arith.extui %43 : vector<8x64xi1> to vector<8x64xi32>
    %45 = arith.sitofp %44 : vector<8x64xi32> to vector<8x64xf32>
    %46 = arith.addf %30, %45 : vector<8x64xf32>
    %c0_15 = arith.constant 0 : index
    %c2_16 = arith.constant 2 : index
    %47 = vector.load %arg1[%c0_15, %c2_16] : memref<8x6xi32, #tpu.memory_space<vmem>>, vector<8x1xi32>
    %c11_i32 = arith.constant 11 : i32
    %48 = vector.broadcast %c11_i32 : i32 to vector<8x1xi32>
    %49 = arith.addi %47, %48 : vector<8x1xi32>
    %50 = vector.broadcast %49 : vector<8x1xi32> to vector<8x64xi32>
    %51 = arith.cmpi eq, %28, %50 : vector<8x64xi32>
    %52 = arith.extui %51 : vector<8x64xi1> to vector<8x64xi32>
    %53 = arith.sitofp %52 : vector<8x64xi32> to vector<8x64xf32>
    %54 = arith.addf %38, %53 : vector<8x64xf32>
    %c0_17 = arith.constant 0 : index
    %c3 = arith.constant 3 : index
    %55 = vector.load %arg1[%c0_17, %c3] : memref<8x6xi32, #tpu.memory_space<vmem>>, vector<8x1xi32>
    %c11_i32_18 = arith.constant 11 : i32
    %56 = vector.broadcast %c11_i32_18 : i32 to vector<8x1xi32>
    %57 = arith.addi %55, %56 : vector<8x1xi32>
    %58 = vector.broadcast %57 : vector<8x1xi32> to vector<8x64xi32>
    %59 = arith.cmpi eq, %28, %58 : vector<8x64xi32>
    %60 = arith.extui %59 : vector<8x64xi1> to vector<8x64xi32>
    %61 = arith.sitofp %60 : vector<8x64xi32> to vector<8x64xf32>
    %62 = arith.addf %46, %61 : vector<8x64xf32>
    %c0_19 = arith.constant 0 : index
    %c4 = arith.constant 4 : index
    %63 = vector.load %arg1[%c0_19, %c4] : memref<8x6xi32, #tpu.memory_space<vmem>>, vector<8x1xi32>
    %c22_i32 = arith.constant 22 : i32
    %64 = vector.broadcast %c22_i32 : i32 to vector<8x1xi32>
    %65 = arith.addi %63, %64 : vector<8x1xi32>
    %66 = vector.broadcast %65 : vector<8x1xi32> to vector<8x64xi32>
    %67 = arith.cmpi eq, %28, %66 : vector<8x64xi32>
    %68 = arith.extui %67 : vector<8x64xi1> to vector<8x64xi32>
    %69 = arith.sitofp %68 : vector<8x64xi32> to vector<8x64xf32>
    %70 = arith.addf %54, %69 : vector<8x64xf32>
    %c0_20 = arith.constant 0 : index
    %c5 = arith.constant 5 : index
    %71 = vector.load %arg1[%c0_20, %c5] : memref<8x6xi32, #tpu.memory_space<vmem>>, vector<8x1xi32>
    %c22_i32_21 = arith.constant 22 : i32
    %72 = vector.broadcast %c22_i32_21 : i32 to vector<8x1xi32>
    %73 = arith.addi %71, %72 : vector<8x1xi32>
    %74 = vector.broadcast %73 : vector<8x1xi32> to vector<8x64xi32>
    %75 = arith.cmpi eq, %28, %74 : vector<8x64xi32>
    %76 = arith.extui %75 : vector<8x64xi1> to vector<8x64xi32>
    %77 = arith.sitofp %76 : vector<8x64xi32> to vector<8x64xf32>
    %78 = arith.addf %62, %77 : vector<8x64xf32>
    %c224 = arith.constant 224 : index
    %c0_22 = arith.constant 0 : index
    %79 = vector.load %arg2[%c224, %c0_22] : memref<688x256xf32, #tpu.memory_space<vmem>>, vector<64x48xf32>
    %cst_23 = arith.constant dense<0.000000e+00> : vector<8x48xf32>
    %80 = tpu.matmul %70, %79, %cst_23 {dimension_numbers = #tpu.dot_dimension_numbers<[1], [0], [0], [1], [0, 0, 1, 1], [], []>} : vector<8x64xf32>, vector<64x48xf32>, vector<8x48xf32> -> vector<8x48xf32>
    %c288 = arith.constant 288 : index
    %c0_24 = arith.constant 0 : index
    %81 = vector.load %arg2[%c288, %c0_24] : memref<688x256xf32, #tpu.memory_space<vmem>>, vector<64x48xf32>
    %cst_25 = arith.constant dense<0.000000e+00> : vector<8x48xf32>
    %82 = tpu.matmul %78, %81, %cst_25 {dimension_numbers = #tpu.dot_dimension_numbers<[1], [0], [0], [1], [0, 0, 1, 1], [], []>} : vector<8x64xf32>, vector<64x48xf32>, vector<8x48xf32> -> vector<8x48xf32>
    %83 = arith.mulf %80, %82 : vector<8x48xf32>
    %84 = math.tanh %83 : vector<8x48xf32>
    %c352 = arith.constant 352 : index
    %c0_26 = arith.constant 0 : index
    %85 = vector.load %arg2[%c352, %c0_26] : memref<688x256xf32, #tpu.memory_space<vmem>>, vector<48x32xf32>
    %cst_27 = arith.constant dense<0.000000e+00> : vector<8x32xf32>
    %86 = tpu.matmul %84, %85, %cst_27 {dimension_numbers = #tpu.dot_dimension_numbers<[1], [0], [0], [1], [0, 0, 1, 1], [], []>} : vector<8x48xf32>, vector<48x32xf32>, vector<8x32xf32> -> vector<8x32xf32>
    %c144 = arith.constant 144 : index
    %c0_28 = arith.constant 0 : index
    %87 = vector.load %arg2[%c144, %c0_28] : memref<688x256xf32, #tpu.memory_space<vmem>>, vector<1x32xf32>
    %88 = vector.broadcast %87 : vector<1x32xf32> to vector<8x32xf32>
    %89 = arith.addf %86, %88 : vector<8x32xf32>
    %cst_29 = arith.constant 0.000000e+00 : f32
    %90 = vector.broadcast %cst_29 : f32 to vector<8x64xf32>
    %c64 = arith.constant 64 : index
    %c0_30 = arith.constant 0 : index
    %91 = vector.load %arg2[%c64, %c0_30] : memref<688x256xf32, #tpu.memory_space<vmem>>, vector<64x256xf32>
    %cst_31 = arith.constant dense<0.000000e+00> : vector<8x256xf32>
    %92 = tpu.matmul %90, %91, %cst_31 {dimension_numbers = #tpu.dot_dimension_numbers<[1], [0], [0], [1], [0, 0, 1, 1], [], []>} : vector<8x64xf32>, vector<64x256xf32>, vector<8x256xf32> -> vector<8x256xf32>
    %c136 = arith.constant 136 : index
    %c0_32 = arith.constant 0 : index
    %93 = vector.load %arg2[%c136, %c0_32] : memref<688x256xf32, #tpu.memory_space<vmem>>, vector<1x256xf32>
    %94 = vector.broadcast %93 : vector<1x256xf32> to vector<8x256xf32>
    %95 = arith.addf %92, %94 : vector<8x256xf32>
    %c0_33 = arith.constant 0 : index
    %c0_34 = arith.constant 0 : index
    %96 = vector.load %arg4[%c0_33, %c0_34] : memref<64x256xf32, #tpu.memory_space<vmem>>, vector<8x256xf32>
    %c56 = arith.constant 56 : index
    %c0_35 = arith.constant 0 : index
    %97 = vector.load %arg4[%c56, %c0_35] : memref<64x256xf32, #tpu.memory_space<vmem>>, vector<8x256xf32>
    %98 = vector.extract_strided_slice %96 {offsets = [0, 0], sizes = [8, 32], strides = [1, 1]} : vector<8x256xf32> to vector<8x32xf32>
    %99 = vector.extract_strided_slice %95 {offsets = [0, 0], sizes = [8, 32], strides = [1, 1]} : vector<8x256xf32> to vector<8x32xf32>
    %100 = arith.addf %98, %99 : vector<8x32xf32>
    %101 = arith.negf %100 : vector<8x32xf32>
    %102 = math.exp %101 : vector<8x32xf32>
    %cst_36 = arith.constant 1.000000e+00 : f32
    %103 = vector.broadcast %cst_36 : f32 to vector<8x32xf32>
    %104 = arith.addf %103, %102 : vector<8x32xf32>
    %105 = arith.divf %103, %104 : vector<8x32xf32>
    %106 = vector.extract_strided_slice %96 {offsets = [0, 32], sizes = [8, 32], strides = [1, 1]} : vector<8x256xf32> to vector<8x32xf32>
    %107 = vector.extract_strided_slice %95 {offsets = [0, 32], sizes = [8, 32], strides = [1, 1]} : vector<8x256xf32> to vector<8x32xf32>
    %108 = arith.addf %106, %107 : vector<8x32xf32>
    %109 = arith.negf %108 : vector<8x32xf32>
    %110 = math.exp %109 : vector<8x32xf32>
    %cst_37 = arith.constant 1.000000e+00 : f32
    %111 = vector.broadcast %cst_37 : f32 to vector<8x32xf32>
    %112 = arith.addf %111, %110 : vector<8x32xf32>
    %113 = arith.divf %111, %112 : vector<8x32xf32>
    %114 = vector.extract_strided_slice %96 {offsets = [0, 64], sizes = [8, 32], strides = [1, 1]} : vector<8x256xf32> to vector<8x32xf32>
    %115 = vector.extract_strided_slice %95 {offsets = [0, 64], sizes = [8, 32], strides = [1, 1]} : vector<8x256xf32> to vector<8x32xf32>
    %116 = arith.mulf %105, %115 : vector<8x32xf32>
    %117 = arith.addf %114, %116 : vector<8x32xf32>
    %118 = math.tanh %117 : vector<8x32xf32>
    %cst_38 = arith.constant 1.000000e+00 : f32
    %119 = vector.broadcast %cst_38 : f32 to vector<8x32xf32>
    %120 = arith.subf %119, %113 : vector<8x32xf32>
    %121 = arith.mulf %120, %118 : vector<8x32xf32>
    %122 = vector.extract_strided_slice %90 {offsets = [0, 0], sizes = [8, 32], strides = [1, 1]} : vector<8x64xf32> to vector<8x32xf32>
    %123 = arith.mulf %113, %122 : vector<8x32xf32>
    %124 = arith.addf %121, %123 : vector<8x32xf32>
    %125 = vector.extract_strided_slice %97 {offsets = [0, 128], sizes = [8, 32], strides = [1, 1]} : vector<8x256xf32> to vector<8x32xf32>
    %126 = vector.extract_strided_slice %95 {offsets = [0, 128], sizes = [8, 32], strides = [1, 1]} : vector<8x256xf32> to vector<8x32xf32>
    %127 = arith.addf %125, %126 : vector<8x32xf32>
    %128 = arith.negf %127 : vector<8x32xf32>
    %129 = math.exp %128 : vector<8x32xf32>
    %cst_39 = arith.constant 1.000000e+00 : f32
    %130 = vector.broadcast %cst_39 : f32 to vector<8x32xf32>
    %131 = arith.addf %130, %129 : vector<8x32xf32>
    %132 = arith.divf %130, %131 : vector<8x32xf32>
    %133 = vector.extract_strided_slice %97 {offsets = [0, 160], sizes = [8, 32], strides = [1, 1]} : vector<8x256xf32> to vector<8x32xf32>
    %134 = vector.extract_strided_slice %95 {offsets = [0, 160], sizes = [8, 32], strides = [1, 1]} : vector<8x256xf32> to vector<8x32xf32>
    %135 = arith.addf %133, %134 : vector<8x32xf32>
    %136 = arith.negf %135 : vector<8x32xf32>
    %137 = math.exp %136 : vector<8x32xf32>
    %cst_40 = arith.constant 1.000000e+00 : f32
    %138 = vector.broadcast %cst_40 : f32 to vector<8x32xf32>
    %139 = arith.addf %138, %137 : vector<8x32xf32>
    %140 = arith.divf %138, %139 : vector<8x32xf32>
    %141 = vector.extract_strided_slice %97 {offsets = [0, 192], sizes = [8, 32], strides = [1, 1]} : vector<8x256xf32> to vector<8x32xf32>
    %142 = vector.extract_strided_slice %95 {offsets = [0, 192], sizes = [8, 32], strides = [1, 1]} : vector<8x256xf32> to vector<8x32xf32>
    %143 = arith.mulf %132, %142 : vector<8x32xf32>
    %144 = arith.addf %141, %143 : vector<8x32xf32>
    %145 = math.tanh %144 : vector<8x32xf32>
    %cst_41 = arith.constant 1.000000e+00 : f32
    %146 = vector.broadcast %cst_41 : f32 to vector<8x32xf32>
    %147 = arith.subf %146, %140 : vector<8x32xf32>
    %148 = arith.mulf %147, %145 : vector<8x32xf32>
    %149 = vector.extract_strided_slice %90 {offsets = [0, 32], sizes = [8, 32], strides = [1, 1]} : vector<8x64xf32> to vector<8x32xf32>
    %150 = arith.mulf %140, %149 : vector<8x32xf32>
    %151 = arith.addf %148, %150 : vector<8x32xf32>
    %c0_42 = arith.constant 0 : index
    %c0_43 = arith.constant 0 : index
    %152 = vector.load %arg5[%c0_42, %c0_43] : memref<64x64xf32, #tpu.memory_space<vmem>>, vector<8x32xf32>
    tpu.vector_store %arg5[%c0_42, %c0_43], %124 {strides = array<i32>} : memref<64x64xf32, #tpu.memory_space<vmem>>, vector<8x32xf32>,
    %c56_44 = arith.constant 56 : index
    %c32 = arith.constant 32 : index
    %153 = vector.load %arg5[%c56_44, %c32] : memref<64x64xf32, #tpu.memory_space<vmem>>, vector<8x32xf32>
    tpu.vector_store %arg5[%c56_44, %c32], %151 {strides = array<i32>} : memref<64x64xf32, #tpu.memory_space<vmem>>, vector<8x32xf32>,
    %154 = tpu.concatenate %124, %151 in 1 : vector<8x32xf32>, vector<8x32xf32> -> vector<8x64xf32>
    %c64_45 = arith.constant 64 : index
    %c0_46 = arith.constant 0 : index
    %155 = vector.load %arg2[%c64_45, %c0_46] : memref<688x256xf32, #tpu.memory_space<vmem>>, vector<64x256xf32>
    %cst_47 = arith.constant dense<0.000000e+00> : vector<8x256xf32>
    %156 = tpu.matmul %154, %155, %cst_47 {dimension_numbers = #tpu.dot_dimension_numbers<[1], [0], [0], [1], [0, 0, 1, 1], [], []>} : vector<8x64xf32>, vector<64x256xf32>, vector<8x256xf32> -> vector<8x256xf32>
    %c136_48 = arith.constant 136 : index
    %c0_49 = arith.constant 0 : index
    %157 = vector.load %arg2[%c136_48, %c0_49] : memref<688x256xf32, #tpu.memory_space<vmem>>, vector<1x256xf32>
    %158 = vector.broadcast %157 : vector<1x256xf32> to vector<8x256xf32>
    %159 = arith.addf %156, %158 : vector<8x256xf32>
    %c8 = arith.constant 8 : index
    %c0_50 = arith.constant 0 : index
    %160 = vector.load %arg4[%c8, %c0_50] : memref<64x256xf32, #tpu.memory_space<vmem>>, vector<8x256xf32>
    %c48 = arith.constant 48 : index
    %c0_51 = arith.constant 0 : index
    %161 = vector.load %arg4[%c48, %c0_51] : memref<64x256xf32, #tpu.memory_space<vmem>>, vector<8x256xf32>
    %162 = vector.extract_strided_slice %160 {offsets = [0, 0], sizes = [8, 32], strides = [1, 1]} : vector<8x256xf32> to vector<8x32xf32>
    %163 = vector.extract_strided_slice %159 {offsets = [0, 0], sizes = [8, 32], strides = [1, 1]} : vector<8x256xf32> to vector<8x32xf32>
    %164 = arith.addf %162, %163 : vector<8x32xf32>
    %165 = arith.negf %164 : vector<8x32xf32>
    %166 = math.exp %165 : vector<8x32xf32>
    %cst_52 = arith.constant 1.000000e+00 : f32
    %167 = vector.broadcast %cst_52 : f32 to vector<8x32xf32>
    %168 = arith.addf %167, %166 : vector<8x32xf32>
    %169 = arith.divf %167, %168 : vector<8x32xf32>
    %170 = vector.extract_strided_slice %160 {offsets = [0, 32], sizes = [8, 32], strides = [1, 1]} : vector<8x256xf32> to vector<8x32xf32>
    %171 = vector.extract_strided_slice %159 {offsets = [0, 32], sizes = [8, 32], strides = [1, 1]} : vector<8x256xf32> to vector<8x32xf32>
    %172 = arith.addf %170, %171 : vector<8x32xf32>
    %173 = arith.negf %172 : vector<8x32xf32>
    %174 = math.exp %173 : vector<8x32xf32>
    %cst_53 = arith.constant 1.000000e+00 : f32
    %175 = vector.broadcast %cst_53 : f32 to vector<8x32xf32>
    %176 = arith.addf %175, %174 : vector<8x32xf32>
    %177 = arith.divf %175, %176 : vector<8x32xf32>
    %178 = vector.extract_strided_slice %160 {offsets = [0, 64], sizes = [8, 32], strides = [1, 1]} : vector<8x256xf32> to vector<8x32xf32>
    %179 = vector.extract_strided_slice %159 {offsets = [0, 64], sizes = [8, 32], strides = [1, 1]} : vector<8x256xf32> to vector<8x32xf32>
    %180 = arith.mulf %169, %179 : vector<8x32xf32>
    %181 = arith.addf %178, %180 : vector<8x32xf32>
    %182 = math.tanh %181 : vector<8x32xf32>
    %cst_54 = arith.constant 1.000000e+00 : f32
    %183 = vector.broadcast %cst_54 : f32 to vector<8x32xf32>
    %184 = arith.subf %183, %177 : vector<8x32xf32>
    %185 = arith.mulf %184, %182 : vector<8x32xf32>
    %186 = vector.extract_strided_slice %154 {offsets = [0, 0], sizes = [8, 32], strides = [1, 1]} : vector<8x64xf32> to vector<8x32xf32>
    %187 = arith.mulf %177, %186 : vector<8x32xf32>
    %188 = arith.addf %185, %187 : vector<8x32xf32>
    %189 = vector.extract_strided_slice %161 {offsets = [0, 128], sizes = [8, 32], strides = [1, 1]} : vector<8x256xf32> to vector<8x32xf32>
    %190 = vector.extract_strided_slice %159 {offsets = [0, 128], sizes = [8, 32], strides = [1, 1]} : vector<8x256xf32> to vector<8x32xf32>
    %191 = arith.addf %189, %190 : vector<8x32xf32>
    %192 = arith.negf %191 : vector<8x32xf32>
    %193 = math.exp %192 : vector<8x32xf32>
    %cst_55 = arith.constant 1.000000e+00 : f32
    %194 = vector.broadcast %cst_55 : f32 to vector<8x32xf32>
    %195 = arith.addf %194, %193 : vector<8x32xf32>
    %196 = arith.divf %194, %195 : vector<8x32xf32>
    %197 = vector.extract_strided_slice %161 {offsets = [0, 160], sizes = [8, 32], strides = [1, 1]} : vector<8x256xf32> to vector<8x32xf32>
    %198 = vector.extract_strided_slice %159 {offsets = [0, 160], sizes = [8, 32], strides = [1, 1]} : vector<8x256xf32> to vector<8x32xf32>
    %199 = arith.addf %197, %198 : vector<8x32xf32>
    %200 = arith.negf %199 : vector<8x32xf32>
    %201 = math.exp %200 : vector<8x32xf32>
    %cst_56 = arith.constant 1.000000e+00 : f32
    %202 = vector.broadcast %cst_56 : f32 to vector<8x32xf32>
    %203 = arith.addf %202, %201 : vector<8x32xf32>
    %204 = arith.divf %202, %203 : vector<8x32xf32>
    %205 = vector.extract_strided_slice %161 {offsets = [0, 192], sizes = [8, 32], strides = [1, 1]} : vector<8x256xf32> to vector<8x32xf32>
    %206 = vector.extract_strided_slice %159 {offsets = [0, 192], sizes = [8, 32], strides = [1, 1]} : vector<8x256xf32> to vector<8x32xf32>
    %207 = arith.mulf %196, %206 : vector<8x32xf32>
    %208 = arith.addf %205, %207 : vector<8x32xf32>
    %209 = math.tanh %208 : vector<8x32xf32>
    %cst_57 = arith.constant 1.000000e+00 : f32
    %210 = vector.broadcast %cst_57 : f32 to vector<8x32xf32>
    %211 = arith.subf %210, %204 : vector<8x32xf32>
    %212 = arith.mulf %211, %209 : vector<8x32xf32>
    %213 = vector.extract_strided_slice %154 {offsets = [0, 32], sizes = [8, 32], strides = [1, 1]} : vector<8x64xf32> to vector<8x32xf32>
    %214 = arith.mulf %204, %213 : vector<8x32xf32>
    %215 = arith.addf %212, %214 : vector<8x32xf32>
    %c8_58 = arith.constant 8 : index
    %c0_59 = arith.constant 0 : index
    %216 = vector.load %arg5[%c8_58, %c0_59] : memref<64x64xf32, #tpu.memory_space<vmem>>, vector<8x32xf32>
    tpu.vector_store %arg5[%c8_58, %c0_59], %188 {strides = array<i32>} : memref<64x64xf32, #tpu.memory_space<vmem>>, vector<8x32xf32>,
    %c48_60 = arith.constant 48 : index
    %c32_61 = arith.constant 32 : index
    %217 = vector.load %arg5[%c48_60, %c32_61] : memref<64x64xf32, #tpu.memory_space<vmem>>, vector<8x32xf32>
    tpu.vector_store %arg5[%c48_60, %c32_61], %215 {strides = array<i32>} : memref<64x64xf32, #tpu.memory_space<vmem>>, vector<8x32xf32>,
    %218 = tpu.concatenate %188, %215 in 1 : vector<8x32xf32>, vector<8x32xf32> -> vector<8x64xf32>
    %c64_62 = arith.constant 64 : index
    %c0_63 = arith.constant 0 : index
    %219 = vector.load %arg2[%c64_62, %c0_63] : memref<688x256xf32, #tpu.memory_space<vmem>>, vector<64x256xf32>
    %cst_64 = arith.constant dense<0.000000e+00> : vector<8x256xf32>
    %220 = tpu.matmul %218, %219, %cst_64 {dimension_numbers = #tpu.dot_dimension_numbers<[1], [0], [0], [1], [0, 0, 1, 1], [], []>} : vector<8x64xf32>, vector<64x256xf32>, vector<8x256xf32> -> vector<8x256xf32>
    %c136_65 = arith.constant 136 : index
    %c0_66 = arith.constant 0 : index
    %221 = vector.load %arg2[%c136_65, %c0_66] : memref<688x256xf32, #tpu.memory_space<vmem>>, vector<1x256xf32>
    %222 = vector.broadcast %221 : vector<1x256xf32> to vector<8x256xf32>
    %223 = arith.addf %220, %222 : vector<8x256xf32>
    %c16 = arith.constant 16 : index
    %c0_67 = arith.constant 0 : index
    %224 = vector.load %arg4[%c16, %c0_67] : memref<64x256xf32, #tpu.memory_space<vmem>>, vector<8x256xf32>
    %c40 = arith.constant 40 : index
    %c0_68 = arith.constant 0 : index
    %225 = vector.load %arg4[%c40, %c0_68] : memref<64x256xf32, #tpu.memory_space<vmem>>, vector<8x256xf32>
    %226 = vector.extract_strided_slice %224 {offsets = [0, 0], sizes = [8, 32], strides = [1, 1]} : vector<8x256xf32> to vector<8x32xf32>
    %227 = vector.extract_strided_slice %223 {offsets = [0, 0], sizes = [8, 32], strides = [1, 1]} : vector<8x256xf32> to vector<8x32xf32>
    %228 = arith.addf %226, %227 : vector<8x32xf32>
    %229 = arith.negf %228 : vector<8x32xf32>
    %230 = math.exp %229 : vector<8x32xf32>
    %cst_69 = arith.constant 1.000000e+00 : f32
    %231 = vector.broadcast %cst_69 : f32 to vector<8x32xf32>
    %232 = arith.addf %231, %230 : vector<8x32xf32>
    %233 = arith.divf %231, %232 : vector<8x32xf32>
    %234 = vector.extract_strided_slice %224 {offsets = [0, 32], sizes = [8, 32], strides = [1, 1]} : vector<8x256xf32> to vector<8x32xf32>
    %235 = vector.extract_strided_slice %223 {offsets = [0, 32], sizes = [8, 32], strides = [1, 1]} : vector<8x256xf32> to vector<8x32xf32>
    %236 = arith.addf %234, %235 : vector<8x32xf32>
    %237 = arith.negf %236 : vector<8x32xf32>
    %238 = math.exp %237 : vector<8x32xf32>
    %cst_70 = arith.constant 1.000000e+00 : f32
    %239 = vector.broadcast %cst_70 : f32 to vector<8x32xf32>
    %240 = arith.addf %239, %238 : vector<8x32xf32>
    %241 = arith.divf %239, %240 : vector<8x32xf32>
    %242 = vector.extract_strided_slice %224 {offsets = [0, 64], sizes = [8, 32], strides = [1, 1]} : vector<8x256xf32> to vector<8x32xf32>
    %243 = vector.extract_strided_slice %223 {offsets = [0, 64], sizes = [8, 32], strides = [1, 1]} : vector<8x256xf32> to vector<8x32xf32>
    %244 = arith.mulf %233, %243 : vector<8x32xf32>
    %245 = arith.addf %242, %244 : vector<8x32xf32>
    %246 = math.tanh %245 : vector<8x32xf32>
    %cst_71 = arith.constant 1.000000e+00 : f32
    %247 = vector.broadcast %cst_71 : f32 to vector<8x32xf32>
    %248 = arith.subf %247, %241 : vector<8x32xf32>
    %249 = arith.mulf %248, %246 : vector<8x32xf32>
    %250 = vector.extract_strided_slice %218 {offsets = [0, 0], sizes = [8, 32], strides = [1, 1]} : vector<8x64xf32> to vector<8x32xf32>
    %251 = arith.mulf %241, %250 : vector<8x32xf32>
    %252 = arith.addf %249, %251 : vector<8x32xf32>
    %253 = vector.extract_strided_slice %225 {offsets = [0, 128], sizes = [8, 32], strides = [1, 1]} : vector<8x256xf32> to vector<8x32xf32>
    %254 = vector.extract_strided_slice %223 {offsets = [0, 128], sizes = [8, 32], strides = [1, 1]} : vector<8x256xf32> to vector<8x32xf32>
    %255 = arith.addf %253, %254 : vector<8x32xf32>
    %256 = arith.negf %255 : vector<8x32xf32>
    %257 = math.exp %256 : vector<8x32xf32>
    %cst_72 = arith.constant 1.000000e+00 : f32
    %258 = vector.broadcast %cst_72 : f32 to vector<8x32xf32>
    %259 = arith.addf %258, %257 : vector<8x32xf32>
    %260 = arith.divf %258, %259 : vector<8x32xf32>
    %261 = vector.extract_strided_slice %225 {offsets = [0, 160], sizes = [8, 32], strides = [1, 1]} : vector<8x256xf32> to vector<8x32xf32>
    %262 = vector.extract_strided_slice %223 {offsets = [0, 160], sizes = [8, 32], strides = [1, 1]} : vector<8x256xf32> to vector<8x32xf32>
    %263 = arith.addf %261, %262 : vector<8x32xf32>
    %264 = arith.negf %263 : vector<8x32xf32>
    %265 = math.exp %264 : vector<8x32xf32>
    %cst_73 = arith.constant 1.000000e+00 : f32
    %266 = vector.broadcast %cst_73 : f32 to vector<8x32xf32>
    %267 = arith.addf %266, %265 : vector<8x32xf32>
    %268 = arith.divf %266, %267 : vector<8x32xf32>
    %269 = vector.extract_strided_slice %225 {offsets = [0, 192], sizes = [8, 32], strides = [1, 1]} : vector<8x256xf32> to vector<8x32xf32>
    %270 = vector.extract_strided_slice %223 {offsets = [0, 192], sizes = [8, 32], strides = [1, 1]} : vector<8x256xf32> to vector<8x32xf32>
    %271 = arith.mulf %260, %270 : vector<8x32xf32>
    %272 = arith.addf %269, %271 : vector<8x32xf32>
    %273 = math.tanh %272 : vector<8x32xf32>
    %cst_74 = arith.constant 1.000000e+00 : f32
    %274 = vector.broadcast %cst_74 : f32 to vector<8x32xf32>
    %275 = arith.subf %274, %268 : vector<8x32xf32>
    %276 = arith.mulf %275, %273 : vector<8x32xf32>
    %277 = vector.extract_strided_slice %218 {offsets = [0, 32], sizes = [8, 32], strides = [1, 1]} : vector<8x64xf32> to vector<8x32xf32>
    %278 = arith.mulf %268, %277 : vector<8x32xf32>
    %279 = arith.addf %276, %278 : vector<8x32xf32>
    %c16_75 = arith.constant 16 : index
    %c0_76 = arith.constant 0 : index
    %280 = vector.load %arg5[%c16_75, %c0_76] : memref<64x64xf32, #tpu.memory_space<vmem>>, vector<8x32xf32>
    tpu.vector_store %arg5[%c16_75, %c0_76], %252 {strides = array<i32>} : memref<64x64xf32, #tpu.memory_space<vmem>>, vector<8x32xf32>,
    %c40_77 = arith.constant 40 : index
    %c32_78 = arith.constant 32 : index
    %281 = vector.load %arg5[%c40_77, %c32_78] : memref<64x64xf32, #tpu.memory_space<vmem>>, vector<8x32xf32>
    tpu.vector_store %arg5[%c40_77, %c32_78], %279 {strides = array<i32>} : memref<64x64xf32, #tpu.memory_space<vmem>>, vector<8x32xf32>,
    %282 = tpu.concatenate %252, %279 in 1 : vector<8x32xf32>, vector<8x32xf32> -> vector<8x64xf32>
    %c64_79 = arith.constant 64 : index
    %c0_80 = arith.constant 0 : index
    %283 = vector.load %arg2[%c64_79, %c0_80] : memref<688x256xf32, #tpu.memory_space<vmem>>, vector<64x256xf32>
    %cst_81 = arith.constant dense<0.000000e+00> : vector<8x256xf32>
    %284 = tpu.matmul %282, %283, %cst_81 {dimension_numbers = #tpu.dot_dimension_numbers<[1], [0], [0], [1], [0, 0, 1, 1], [], []>} : vector<8x64xf32>, vector<64x256xf32>, vector<8x256xf32> -> vector<8x256xf32>
    %c136_82 = arith.constant 136 : index
    %c0_83 = arith.constant 0 : index
    %285 = vector.load %arg2[%c136_82, %c0_83] : memref<688x256xf32, #tpu.memory_space<vmem>>, vector<1x256xf32>
    %286 = vector.broadcast %285 : vector<1x256xf32> to vector<8x256xf32>
    %287 = arith.addf %284, %286 : vector<8x256xf32>
    %c24 = arith.constant 24 : index
    %c0_84 = arith.constant 0 : index
    %288 = vector.load %arg4[%c24, %c0_84] : memref<64x256xf32, #tpu.memory_space<vmem>>, vector<8x256xf32>
    %c32_85 = arith.constant 32 : index
    %c0_86 = arith.constant 0 : index
    %289 = vector.load %arg4[%c32_85, %c0_86] : memref<64x256xf32, #tpu.memory_space<vmem>>, vector<8x256xf32>
    %290 = vector.extract_strided_slice %288 {offsets = [0, 0], sizes = [8, 32], strides = [1, 1]} : vector<8x256xf32> to vector<8x32xf32>
    %291 = vector.extract_strided_slice %287 {offsets = [0, 0], sizes = [8, 32], strides = [1, 1]} : vector<8x256xf32> to vector<8x32xf32>
    %292 = arith.addf %290, %291 : vector<8x32xf32>
    %293 = arith.negf %292 : vector<8x32xf32>
    %294 = math.exp %293 : vector<8x32xf32>
    %cst_87 = arith.constant 1.000000e+00 : f32
    %295 = vector.broadcast %cst_87 : f32 to vector<8x32xf32>
    %296 = arith.addf %295, %294 : vector<8x32xf32>
    %297 = arith.divf %295, %296 : vector<8x32xf32>
    %298 = vector.extract_strided_slice %288 {offsets = [0, 32], sizes = [8, 32], strides = [1, 1]} : vector<8x256xf32> to vector<8x32xf32>
    %299 = vector.extract_strided_slice %287 {offsets = [0, 32], sizes = [8, 32], strides = [1, 1]} : vector<8x256xf32> to vector<8x32xf32>
    %300 = arith.addf %298, %299 : vector<8x32xf32>
    %301 = arith.negf %300 : vector<8x32xf32>
    %302 = math.exp %301 : vector<8x32xf32>
    %cst_88 = arith.constant 1.000000e+00 : f32
    %303 = vector.broadcast %cst_88 : f32 to vector<8x32xf32>
    %304 = arith.addf %303, %302 : vector<8x32xf32>
    %305 = arith.divf %303, %304 : vector<8x32xf32>
    %306 = vector.extract_strided_slice %288 {offsets = [0, 64], sizes = [8, 32], strides = [1, 1]} : vector<8x256xf32> to vector<8x32xf32>
    %307 = vector.extract_strided_slice %287 {offsets = [0, 64], sizes = [8, 32], strides = [1, 1]} : vector<8x256xf32> to vector<8x32xf32>
    %308 = arith.mulf %297, %307 : vector<8x32xf32>
    %309 = arith.addf %306, %308 : vector<8x32xf32>
    %310 = math.tanh %309 : vector<8x32xf32>
    %cst_89 = arith.constant 1.000000e+00 : f32
    %311 = vector.broadcast %cst_89 : f32 to vector<8x32xf32>
    %312 = arith.subf %311, %305 : vector<8x32xf32>
    %313 = arith.mulf %312, %310 : vector<8x32xf32>
    %314 = vector.extract_strided_slice %282 {offsets = [0, 0], sizes = [8, 32], strides = [1, 1]} : vector<8x64xf32> to vector<8x32xf32>
    %315 = arith.mulf %305, %314 : vector<8x32xf32>
    %316 = arith.addf %313, %315 : vector<8x32xf32>
    %317 = vector.extract_strided_slice %289 {offsets = [0, 128], sizes = [8, 32], strides = [1, 1]} : vector<8x256xf32> to vector<8x32xf32>
    %318 = vector.extract_strided_slice %287 {offsets = [0, 128], sizes = [8, 32], strides = [1, 1]} : vector<8x256xf32> to vector<8x32xf32>
    %319 = arith.addf %317, %318 : vector<8x32xf32>
    %320 = arith.negf %319 : vector<8x32xf32>
    %321 = math.exp %320 : vector<8x32xf32>
    %cst_90 = arith.constant 1.000000e+00 : f32
    %322 = vector.broadcast %cst_90 : f32 to vector<8x32xf32>
    %323 = arith.addf %322, %321 : vector<8x32xf32>
    %324 = arith.divf %322, %323 : vector<8x32xf32>
    %325 = vector.extract_strided_slice %289 {offsets = [0, 160], sizes = [8, 32], strides = [1, 1]} : vector<8x256xf32> to vector<8x32xf32>
    %326 = vector.extract_strided_slice %287 {offsets = [0, 160], sizes = [8, 32], strides = [1, 1]} : vector<8x256xf32> to vector<8x32xf32>
    %327 = arith.addf %325, %326 : vector<8x32xf32>
    %328 = arith.negf %327 : vector<8x32xf32>
    %329 = math.exp %328 : vector<8x32xf32>
    %cst_91 = arith.constant 1.000000e+00 : f32
    %330 = vector.broadcast %cst_91 : f32 to vector<8x32xf32>
    %331 = arith.addf %330, %329 : vector<8x32xf32>
    %332 = arith.divf %330, %331 : vector<8x32xf32>
    %333 = vector.extract_strided_slice %289 {offsets = [0, 192], sizes = [8, 32], strides = [1, 1]} : vector<8x256xf32> to vector<8x32xf32>
    %334 = vector.extract_strided_slice %287 {offsets = [0, 192], sizes = [8, 32], strides = [1, 1]} : vector<8x256xf32> to vector<8x32xf32>
    %335 = arith.mulf %324, %334 : vector<8x32xf32>
    %336 = arith.addf %333, %335 : vector<8x32xf32>
    %337 = math.tanh %336 : vector<8x32xf32>
    %cst_92 = arith.constant 1.000000e+00 : f32
    %338 = vector.broadcast %cst_92 : f32 to vector<8x32xf32>
    %339 = arith.subf %338, %332 : vector<8x32xf32>
    %340 = arith.mulf %339, %337 : vector<8x32xf32>
    %341 = vector.extract_strided_slice %282 {offsets = [0, 32], sizes = [8, 32], strides = [1, 1]} : vector<8x64xf32> to vector<8x32xf32>
    %342 = arith.mulf %332, %341 : vector<8x32xf32>
    %343 = arith.addf %340, %342 : vector<8x32xf32>
    %c24_93 = arith.constant 24 : index
    %c0_94 = arith.constant 0 : index
    %344 = vector.load %arg5[%c24_93, %c0_94] : memref<64x64xf32, #tpu.memory_space<vmem>>, vector<8x32xf32>
    tpu.vector_store %arg5[%c24_93, %c0_94], %316 {strides = array<i32>} : memref<64x64xf32, #tpu.memory_space<vmem>>, vector<8x32xf32>,
    %c32_95 = arith.constant 32 : index
    %c32_96 = arith.constant 32 : index
    %345 = vector.load %arg5[%c32_95, %c32_96] : memref<64x64xf32, #tpu.memory_space<vmem>>, vector<8x32xf32>
    tpu.vector_store %arg5[%c32_95, %c32_96], %343 {strides = array<i32>} : memref<64x64xf32, #tpu.memory_space<vmem>>, vector<8x32xf32>,
    %346 = tpu.concatenate %316, %343 in 1 : vector<8x32xf32>, vector<8x32xf32> -> vector<8x64xf32>
    %c64_97 = arith.constant 64 : index
    %c0_98 = arith.constant 0 : index
    %347 = vector.load %arg2[%c64_97, %c0_98] : memref<688x256xf32, #tpu.memory_space<vmem>>, vector<64x256xf32>
    %cst_99 = arith.constant dense<0.000000e+00> : vector<8x256xf32>
    %348 = tpu.matmul %346, %347, %cst_99 {dimension_numbers = #tpu.dot_dimension_numbers<[1], [0], [0], [1], [0, 0, 1, 1], [], []>} : vector<8x64xf32>, vector<64x256xf32>, vector<8x256xf32> -> vector<8x256xf32>
    %c136_100 = arith.constant 136 : index
    %c0_101 = arith.constant 0 : index
    %349 = vector.load %arg2[%c136_100, %c0_101] : memref<688x256xf32, #tpu.memory_space<vmem>>, vector<1x256xf32>
    %350 = vector.broadcast %349 : vector<1x256xf32> to vector<8x256xf32>
    %351 = arith.addf %348, %350 : vector<8x256xf32>
    %c32_102 = arith.constant 32 : index
    %c0_103 = arith.constant 0 : index
    %352 = vector.load %arg4[%c32_102, %c0_103] : memref<64x256xf32, #tpu.memory_space<vmem>>, vector<8x256xf32>
    %c24_104 = arith.constant 24 : index
    %c0_105 = arith.constant 0 : index
    %353 = vector.load %arg4[%c24_104, %c0_105] : memref<64x256xf32, #tpu.memory_space<vmem>>, vector<8x256xf32>
    %354 = vector.extract_strided_slice %352 {offsets = [0, 0], sizes = [8, 32], strides = [1, 1]} : vector<8x256xf32> to vector<8x32xf32>
    %355 = vector.extract_strided_slice %351 {offsets = [0, 0], sizes = [8, 32], strides = [1, 1]} : vector<8x256xf32> to vector<8x32xf32>
    %356 = arith.addf %354, %355 : vector<8x32xf32>
    %357 = arith.negf %356 : vector<8x32xf32>
    %358 = math.exp %357 : vector<8x32xf32>
    %cst_106 = arith.constant 1.000000e+00 : f32
    %359 = vector.broadcast %cst_106 : f32 to vector<8x32xf32>
    %360 = arith.addf %359, %358 : vector<8x32xf32>
    %361 = arith.divf %359, %360 : vector<8x32xf32>
    %362 = vector.extract_strided_slice %352 {offsets = [0, 32], sizes = [8, 32], strides = [1, 1]} : vector<8x256xf32> to vector<8x32xf32>
    %363 = vector.extract_strided_slice %351 {offsets = [0, 32], sizes = [8, 32], strides = [1, 1]} : vector<8x256xf32> to vector<8x32xf32>
    %364 = arith.addf %362, %363 : vector<8x32xf32>
    %365 = arith.negf %364 : vector<8x32xf32>
    %366 = math.exp %365 : vector<8x32xf32>
    %cst_107 = arith.constant 1.000000e+00 : f32
    %367 = vector.broadcast %cst_107 : f32 to vector<8x32xf32>
    %368 = arith.addf %367, %366 : vector<8x32xf32>
    %369 = arith.divf %367, %368 : vector<8x32xf32>
    %370 = vector.extract_strided_slice %352 {offsets = [0, 64], sizes = [8, 32], strides = [1, 1]} : vector<8x256xf32> to vector<8x32xf32>
    %371 = vector.extract_strided_slice %351 {offsets = [0, 64], sizes = [8, 32], strides = [1, 1]} : vector<8x256xf32> to vector<8x32xf32>
    %372 = arith.mulf %361, %371 : vector<8x32xf32>
    %373 = arith.addf %370, %372 : vector<8x32xf32>
    %374 = math.tanh %373 : vector<8x32xf32>
    %cst_108 = arith.constant 1.000000e+00 : f32
    %375 = vector.broadcast %cst_108 : f32 to vector<8x32xf32>
    %376 = arith.subf %375, %369 : vector<8x32xf32>
    %377 = arith.mulf %376, %374 : vector<8x32xf32>
    %378 = vector.extract_strided_slice %346 {offsets = [0, 0], sizes = [8, 32], strides = [1, 1]} : vector<8x64xf32> to vector<8x32xf32>
    %379 = arith.mulf %369, %378 : vector<8x32xf32>
    %380 = arith.addf %377, %379 : vector<8x32xf32>
    %381 = vector.extract_strided_slice %353 {offsets = [0, 128], sizes = [8, 32], strides = [1, 1]} : vector<8x256xf32> to vector<8x32xf32>
    %382 = vector.extract_strided_slice %351 {offsets = [0, 128], sizes = [8, 32], strides = [1, 1]} : vector<8x256xf32> to vector<8x32xf32>
    %383 = arith.addf %381, %382 : vector<8x32xf32>
    %384 = arith.negf %383 : vector<8x32xf32>
    %385 = math.exp %384 : vector<8x32xf32>
    %cst_109 = arith.constant 1.000000e+00 : f32
    %386 = vector.broadcast %cst_109 : f32 to vector<8x32xf32>
    %387 = arith.addf %386, %385 : vector<8x32xf32>
    %388 = arith.divf %386, %387 : vector<8x32xf32>
    %389 = vector.extract_strided_slice %353 {offsets = [0, 160], sizes = [8, 32], strides = [1, 1]} : vector<8x256xf32> to vector<8x32xf32>
    %390 = vector.extract_strided_slice %351 {offsets = [0, 160], sizes = [8, 32], strides = [1, 1]} : vector<8x256xf32> to vector<8x32xf32>
    %391 = arith.addf %389, %390 : vector<8x32xf32>
    %392 = arith.negf %391 : vector<8x32xf32>
    %393 = math.exp %392 : vector<8x32xf32>
    %cst_110 = arith.constant 1.000000e+00 : f32
    %394 = vector.broadcast %cst_110 : f32 to vector<8x32xf32>
    %395 = arith.addf %394, %393 : vector<8x32xf32>
    %396 = arith.divf %394, %395 : vector<8x32xf32>
    %397 = vector.extract_strided_slice %353 {offsets = [0, 192], sizes = [8, 32], strides = [1, 1]} : vector<8x256xf32> to vector<8x32xf32>
    %398 = vector.extract_strided_slice %351 {offsets = [0, 192], sizes = [8, 32], strides = [1, 1]} : vector<8x256xf32> to vector<8x32xf32>
    %399 = arith.mulf %388, %398 : vector<8x32xf32>
    %400 = arith.addf %397, %399 : vector<8x32xf32>
    %401 = math.tanh %400 : vector<8x32xf32>
    %cst_111 = arith.constant 1.000000e+00 : f32
    %402 = vector.broadcast %cst_111 : f32 to vector<8x32xf32>
    %403 = arith.subf %402, %396 : vector<8x32xf32>
    %404 = arith.mulf %403, %401 : vector<8x32xf32>
    %405 = vector.extract_strided_slice %346 {offsets = [0, 32], sizes = [8, 32], strides = [1, 1]} : vector<8x64xf32> to vector<8x32xf32>
    %406 = arith.mulf %396, %405 : vector<8x32xf32>
    %407 = arith.addf %404, %406 : vector<8x32xf32>
    %c32_112 = arith.constant 32 : index
    %c0_113 = arith.constant 0 : index
    %408 = vector.load %arg5[%c32_112, %c0_113] : memref<64x64xf32, #tpu.memory_space<vmem>>, vector<8x32xf32>
    tpu.vector_store %arg5[%c32_112, %c0_113], %380 {strides = array<i32>} : memref<64x64xf32, #tpu.memory_space<vmem>>, vector<8x32xf32>,
    %c24_114 = arith.constant 24 : index
    %c32_115 = arith.constant 32 : index
    %409 = vector.load %arg5[%c24_114, %c32_115] : memref<64x64xf32, #tpu.memory_space<vmem>>, vector<8x32xf32>
    tpu.vector_store %arg5[%c24_114, %c32_115], %407 {strides = array<i32>} : memref<64x64xf32, #tpu.memory_space<vmem>>, vector<8x32xf32>,
    %410 = tpu.concatenate %380, %407 in 1 : vector<8x32xf32>, vector<8x32xf32> -> vector<8x64xf32>
    %c64_116 = arith.constant 64 : index
    %c0_117 = arith.constant 0 : index
    %411 = vector.load %arg2[%c64_116, %c0_117] : memref<688x256xf32, #tpu.memory_space<vmem>>, vector<64x256xf32>
    %cst_118 = arith.constant dense<0.000000e+00> : vector<8x256xf32>
    %412 = tpu.matmul %410, %411, %cst_118 {dimension_numbers = #tpu.dot_dimension_numbers<[1], [0], [0], [1], [0, 0, 1, 1], [], []>} : vector<8x64xf32>, vector<64x256xf32>, vector<8x256xf32> -> vector<8x256xf32>
    %c136_119 = arith.constant 136 : index
    %c0_120 = arith.constant 0 : index
    %413 = vector.load %arg2[%c136_119, %c0_120] : memref<688x256xf32, #tpu.memory_space<vmem>>, vector<1x256xf32>
    %414 = vector.broadcast %413 : vector<1x256xf32> to vector<8x256xf32>
    %415 = arith.addf %412, %414 : vector<8x256xf32>
    %c40_121 = arith.constant 40 : index
    %c0_122 = arith.constant 0 : index
    %416 = vector.load %arg4[%c40_121, %c0_122] : memref<64x256xf32, #tpu.memory_space<vmem>>, vector<8x256xf32>
    %c16_123 = arith.constant 16 : index
    %c0_124 = arith.constant 0 : index
    %417 = vector.load %arg4[%c16_123, %c0_124] : memref<64x256xf32, #tpu.memory_space<vmem>>, vector<8x256xf32>
    %418 = vector.extract_strided_slice %416 {offsets = [0, 0], sizes = [8, 32], strides = [1, 1]} : vector<8x256xf32> to vector<8x32xf32>
    %419 = vector.extract_strided_slice %415 {offsets = [0, 0], sizes = [8, 32], strides = [1, 1]} : vector<8x256xf32> to vector<8x32xf32>
    %420 = arith.addf %418, %419 : vector<8x32xf32>
    %421 = arith.negf %420 : vector<8x32xf32>
    %422 = math.exp %421 : vector<8x32xf32>
    %cst_125 = arith.constant 1.000000e+00 : f32
    %423 = vector.broadcast %cst_125 : f32 to vector<8x32xf32>
    %424 = arith.addf %423, %422 : vector<8x32xf32>
    %425 = arith.divf %423, %424 : vector<8x32xf32>
    %426 = vector.extract_strided_slice %416 {offsets = [0, 32], sizes = [8, 32], strides = [1, 1]} : vector<8x256xf32> to vector<8x32xf32>
    %427 = vector.extract_strided_slice %415 {offsets = [0, 32], sizes = [8, 32], strides = [1, 1]} : vector<8x256xf32> to vector<8x32xf32>
    %428 = arith.addf %426, %427 : vector<8x32xf32>
    %429 = arith.negf %428 : vector<8x32xf32>
    %430 = math.exp %429 : vector<8x32xf32>
    %cst_126 = arith.constant 1.000000e+00 : f32
    %431 = vector.broadcast %cst_126 : f32 to vector<8x32xf32>
    %432 = arith.addf %431, %430 : vector<8x32xf32>
    %433 = arith.divf %431, %432 : vector<8x32xf32>
    %434 = vector.extract_strided_slice %416 {offsets = [0, 64], sizes = [8, 32], strides = [1, 1]} : vector<8x256xf32> to vector<8x32xf32>
    %435 = vector.extract_strided_slice %415 {offsets = [0, 64], sizes = [8, 32], strides = [1, 1]} : vector<8x256xf32> to vector<8x32xf32>
    %436 = arith.mulf %425, %435 : vector<8x32xf32>
    %437 = arith.addf %434, %436 : vector<8x32xf32>
    %438 = math.tanh %437 : vector<8x32xf32>
    %cst_127 = arith.constant 1.000000e+00 : f32
    %439 = vector.broadcast %cst_127 : f32 to vector<8x32xf32>
    %440 = arith.subf %439, %433 : vector<8x32xf32>
    %441 = arith.mulf %440, %438 : vector<8x32xf32>
    %442 = vector.extract_strided_slice %410 {offsets = [0, 0], sizes = [8, 32], strides = [1, 1]} : vector<8x64xf32> to vector<8x32xf32>
    %443 = arith.mulf %433, %442 : vector<8x32xf32>
    %444 = arith.addf %441, %443 : vector<8x32xf32>
    %445 = vector.extract_strided_slice %417 {offsets = [0, 128], sizes = [8, 32], strides = [1, 1]} : vector<8x256xf32> to vector<8x32xf32>
    %446 = vector.extract_strided_slice %415 {offsets = [0, 128], sizes = [8, 32], strides = [1, 1]} : vector<8x256xf32> to vector<8x32xf32>
    %447 = arith.addf %445, %446 : vector<8x32xf32>
    %448 = arith.negf %447 : vector<8x32xf32>
    %449 = math.exp %448 : vector<8x32xf32>
    %cst_128 = arith.constant 1.000000e+00 : f32
    %450 = vector.broadcast %cst_128 : f32 to vector<8x32xf32>
    %451 = arith.addf %450, %449 : vector<8x32xf32>
    %452 = arith.divf %450, %451 : vector<8x32xf32>
    %453 = vector.extract_strided_slice %417 {offsets = [0, 160], sizes = [8, 32], strides = [1, 1]} : vector<8x256xf32> to vector<8x32xf32>
    %454 = vector.extract_strided_slice %415 {offsets = [0, 160], sizes = [8, 32], strides = [1, 1]} : vector<8x256xf32> to vector<8x32xf32>
    %455 = arith.addf %453, %454 : vector<8x32xf32>
    %456 = arith.negf %455 : vector<8x32xf32>
    %457 = math.exp %456 : vector<8x32xf32>
    %cst_129 = arith.constant 1.000000e+00 : f32
    %458 = vector.broadcast %cst_129 : f32 to vector<8x32xf32>
    %459 = arith.addf %458, %457 : vector<8x32xf32>
    %460 = arith.divf %458, %459 : vector<8x32xf32>
    %461 = vector.extract_strided_slice %417 {offsets = [0, 192], sizes = [8, 32], strides = [1, 1]} : vector<8x256xf32> to vector<8x32xf32>
    %462 = vector.extract_strided_slice %415 {offsets = [0, 192], sizes = [8, 32], strides = [1, 1]} : vector<8x256xf32> to vector<8x32xf32>
    %463 = arith.mulf %452, %462 : vector<8x32xf32>
    %464 = arith.addf %461, %463 : vector<8x32xf32>
    %465 = math.tanh %464 : vector<8x32xf32>
    %cst_130 = arith.constant 1.000000e+00 : f32
    %466 = vector.broadcast %cst_130 : f32 to vector<8x32xf32>
    %467 = arith.subf %466, %460 : vector<8x32xf32>
    %468 = arith.mulf %467, %465 : vector<8x32xf32>
    %469 = vector.extract_strided_slice %410 {offsets = [0, 32], sizes = [8, 32], strides = [1, 1]} : vector<8x64xf32> to vector<8x32xf32>
    %470 = arith.mulf %460, %469 : vector<8x32xf32>
    %471 = arith.addf %468, %470 : vector<8x32xf32>
    %c40_131 = arith.constant 40 : index
    %c0_132 = arith.constant 0 : index
    %472 = vector.load %arg5[%c40_131, %c0_132] : memref<64x64xf32, #tpu.memory_space<vmem>>, vector<8x32xf32>
    tpu.vector_store %arg5[%c40_131, %c0_132], %444 {strides = array<i32>} : memref<64x64xf32, #tpu.memory_space<vmem>>, vector<8x32xf32>,
    %c16_133 = arith.constant 16 : index
    %c32_134 = arith.constant 32 : index
    %473 = vector.load %arg5[%c16_133, %c32_134] : memref<64x64xf32, #tpu.memory_space<vmem>>, vector<8x32xf32>
    tpu.vector_store %arg5[%c16_133, %c32_134], %471 {strides = array<i32>} : memref<64x64xf32, #tpu.memory_space<vmem>>, vector<8x32xf32>,
    %474 = tpu.concatenate %444, %471 in 1 : vector<8x32xf32>, vector<8x32xf32> -> vector<8x64xf32>
    %c64_135 = arith.constant 64 : index
    %c0_136 = arith.constant 0 : index
    %475 = vector.load %arg2[%c64_135, %c0_136] : memref<688x256xf32, #tpu.memory_space<vmem>>, vector<64x256xf32>
    %cst_137 = arith.constant dense<0.000000e+00> : vector<8x256xf32>
    %476 = tpu.matmul %474, %475, %cst_137 {dimension_numbers = #tpu.dot_dimension_numbers<[1], [0], [0], [1], [0, 0, 1, 1], [], []>} : vector<8x64xf32>, vector<64x256xf32>, vector<8x256xf32> -> vector<8x256xf32>
    %c136_138 = arith.constant 136 : index
    %c0_139 = arith.constant 0 : index
    %477 = vector.load %arg2[%c136_138, %c0_139] : memref<688x256xf32, #tpu.memory_space<vmem>>, vector<1x256xf32>
    %478 = vector.broadcast %477 : vector<1x256xf32> to vector<8x256xf32>
    %479 = arith.addf %476, %478 : vector<8x256xf32>
    %c48_140 = arith.constant 48 : index
    %c0_141 = arith.constant 0 : index
    %480 = vector.load %arg4[%c48_140, %c0_141] : memref<64x256xf32, #tpu.memory_space<vmem>>, vector<8x256xf32>
    %c8_142 = arith.constant 8 : index
    %c0_143 = arith.constant 0 : index
    %481 = vector.load %arg4[%c8_142, %c0_143] : memref<64x256xf32, #tpu.memory_space<vmem>>, vector<8x256xf32>
    %482 = vector.extract_strided_slice %480 {offsets = [0, 0], sizes = [8, 32], strides = [1, 1]} : vector<8x256xf32> to vector<8x32xf32>
    %483 = vector.extract_strided_slice %479 {offsets = [0, 0], sizes = [8, 32], strides = [1, 1]} : vector<8x256xf32> to vector<8x32xf32>
    %484 = arith.addf %482, %483 : vector<8x32xf32>
    %485 = arith.negf %484 : vector<8x32xf32>
    %486 = math.exp %485 : vector<8x32xf32>
    %cst_144 = arith.constant 1.000000e+00 : f32
    %487 = vector.broadcast %cst_144 : f32 to vector<8x32xf32>
    %488 = arith.addf %487, %486 : vector<8x32xf32>
    %489 = arith.divf %487, %488 : vector<8x32xf32>
    %490 = vector.extract_strided_slice %480 {offsets = [0, 32], sizes = [8, 32], strides = [1, 1]} : vector<8x256xf32> to vector<8x32xf32>
    %491 = vector.extract_strided_slice %479 {offsets = [0, 32], sizes = [8, 32], strides = [1, 1]} : vector<8x256xf32> to vector<8x32xf32>
    %492 = arith.addf %490, %491 : vector<8x32xf32>
    %493 = arith.negf %492 : vector<8x32xf32>
    %494 = math.exp %493 : vector<8x32xf32>
    %cst_145 = arith.constant 1.000000e+00 : f32
    %495 = vector.broadcast %cst_145 : f32 to vector<8x32xf32>
    %496 = arith.addf %495, %494 : vector<8x32xf32>
    %497 = arith.divf %495, %496 : vector<8x32xf32>
    %498 = vector.extract_strided_slice %480 {offsets = [0, 64], sizes = [8, 32], strides = [1, 1]} : vector<8x256xf32> to vector<8x32xf32>
    %499 = vector.extract_strided_slice %479 {offsets = [0, 64], sizes = [8, 32], strides = [1, 1]} : vector<8x256xf32> to vector<8x32xf32>
    %500 = arith.mulf %489, %499 : vector<8x32xf32>
    %501 = arith.addf %498, %500 : vector<8x32xf32>
    %502 = math.tanh %501 : vector<8x32xf32>
    %cst_146 = arith.constant 1.000000e+00 : f32
    %503 = vector.broadcast %cst_146 : f32 to vector<8x32xf32>
    %504 = arith.subf %503, %497 : vector<8x32xf32>
    %505 = arith.mulf %504, %502 : vector<8x32xf32>
    %506 = vector.extract_strided_slice %474 {offsets = [0, 0], sizes = [8, 32], strides = [1, 1]} : vector<8x64xf32> to vector<8x32xf32>
    %507 = arith.mulf %497, %506 : vector<8x32xf32>
    %508 = arith.addf %505, %507 : vector<8x32xf32>
    %509 = vector.extract_strided_slice %481 {offsets = [0, 128], sizes = [8, 32], strides = [1, 1]} : vector<8x256xf32> to vector<8x32xf32>
    %510 = vector.extract_strided_slice %479 {offsets = [0, 128], sizes = [8, 32], strides = [1, 1]} : vector<8x256xf32> to vector<8x32xf32>
    %511 = arith.addf %509, %510 : vector<8x32xf32>
    %512 = arith.negf %511 : vector<8x32xf32>
    %513 = math.exp %512 : vector<8x32xf32>
    %cst_147 = arith.constant 1.000000e+00 : f32
    %514 = vector.broadcast %cst_147 : f32 to vector<8x32xf32>
    %515 = arith.addf %514, %513 : vector<8x32xf32>
    %516 = arith.divf %514, %515 : vector<8x32xf32>
    %517 = vector.extract_strided_slice %481 {offsets = [0, 160], sizes = [8, 32], strides = [1, 1]} : vector<8x256xf32> to vector<8x32xf32>
    %518 = vector.extract_strided_slice %479 {offsets = [0, 160], sizes = [8, 32], strides = [1, 1]} : vector<8x256xf32> to vector<8x32xf32>
    %519 = arith.addf %517, %518 : vector<8x32xf32>
    %520 = arith.negf %519 : vector<8x32xf32>
    %521 = math.exp %520 : vector<8x32xf32>
    %cst_148 = arith.constant 1.000000e+00 : f32
    %522 = vector.broadcast %cst_148 : f32 to vector<8x32xf32>
    %523 = arith.addf %522, %521 : vector<8x32xf32>
    %524 = arith.divf %522, %523 : vector<8x32xf32>
    %525 = vector.extract_strided_slice %481 {offsets = [0, 192], sizes = [8, 32], strides = [1, 1]} : vector<8x256xf32> to vector<8x32xf32>
    %526 = vector.extract_strided_slice %479 {offsets = [0, 192], sizes = [8, 32], strides = [1, 1]} : vector<8x256xf32> to vector<8x32xf32>
    %527 = arith.mulf %516, %526 : vector<8x32xf32>
    %528 = arith.addf %525, %527 : vector<8x32xf32>
    %529 = math.tanh %528 : vector<8x32xf32>
    %cst_149 = arith.constant 1.000000e+00 : f32
    %530 = vector.broadcast %cst_149 : f32 to vector<8x32xf32>
    %531 = arith.subf %530, %524 : vector<8x32xf32>
    %532 = arith.mulf %531, %529 : vector<8x32xf32>
    %533 = vector.extract_strided_slice %474 {offsets = [0, 32], sizes = [8, 32], strides = [1, 1]} : vector<8x64xf32> to vector<8x32xf32>
    %534 = arith.mulf %524, %533 : vector<8x32xf32>
    %535 = arith.addf %532, %534 : vector<8x32xf32>
    %c48_150 = arith.constant 48 : index
    %c0_151 = arith.constant 0 : index
    %536 = vector.load %arg5[%c48_150, %c0_151] : memref<64x64xf32, #tpu.memory_space<vmem>>, vector<8x32xf32>
    tpu.vector_store %arg5[%c48_150, %c0_151], %508 {strides = array<i32>} : memref<64x64xf32, #tpu.memory_space<vmem>>, vector<8x32xf32>,
    %c8_152 = arith.constant 8 : index
    %c32_153 = arith.constant 32 : index
    %537 = vector.load %arg5[%c8_152, %c32_153] : memref<64x64xf32, #tpu.memory_space<vmem>>, vector<8x32xf32>
    tpu.vector_store %arg5[%c8_152, %c32_153], %535 {strides = array<i32>} : memref<64x64xf32, #tpu.memory_space<vmem>>, vector<8x32xf32>,
    %538 = tpu.concatenate %508, %535 in 1 : vector<8x32xf32>, vector<8x32xf32> -> vector<8x64xf32>
    %c64_154 = arith.constant 64 : index
    %c0_155 = arith.constant 0 : index
    %539 = vector.load %arg2[%c64_154, %c0_155] : memref<688x256xf32, #tpu.memory_space<vmem>>, vector<64x256xf32>
    %cst_156 = arith.constant dense<0.000000e+00> : vector<8x256xf32>
    %540 = tpu.matmul %538, %539, %cst_156 {dimension_numbers = #tpu.dot_dimension_numbers<[1], [0], [0], [1], [0, 0, 1, 1], [], []>} : vector<8x64xf32>, vector<64x256xf32>, vector<8x256xf32> -> vector<8x256xf32>
    %c136_157 = arith.constant 136 : index
    %c0_158 = arith.constant 0 : index
    %541 = vector.load %arg2[%c136_157, %c0_158] : memref<688x256xf32, #tpu.memory_space<vmem>>, vector<1x256xf32>
    %542 = vector.broadcast %541 : vector<1x256xf32> to vector<8x256xf32>
    %543 = arith.addf %540, %542 : vector<8x256xf32>
    %c56_159 = arith.constant 56 : index
    %c0_160 = arith.constant 0 : index
    %544 = vector.load %arg4[%c56_159, %c0_160] : memref<64x256xf32, #tpu.memory_space<vmem>>, vector<8x256xf32>
    %c0_161 = arith.constant 0 : index
    %c0_162 = arith.constant 0 : index
    %545 = vector.load %arg4[%c0_161, %c0_162] : memref<64x256xf32, #tpu.memory_space<vmem>>, vector<8x256xf32>
    %546 = vector.extract_strided_slice %544 {offsets = [0, 0], sizes = [8, 32], strides = [1, 1]} : vector<8x256xf32> to vector<8x32xf32>
    %547 = vector.extract_strided_slice %543 {offsets = [0, 0], sizes = [8, 32], strides = [1, 1]} : vector<8x256xf32> to vector<8x32xf32>
    %548 = arith.addf %546, %547 : vector<8x32xf32>
    %549 = arith.negf %548 : vector<8x32xf32>
    %550 = math.exp %549 : vector<8x32xf32>
    %cst_163 = arith.constant 1.000000e+00 : f32
    %551 = vector.broadcast %cst_163 : f32 to vector<8x32xf32>
    %552 = arith.addf %551, %550 : vector<8x32xf32>
    %553 = arith.divf %551, %552 : vector<8x32xf32>
    %554 = vector.extract_strided_slice %544 {offsets = [0, 32], sizes = [8, 32], strides = [1, 1]} : vector<8x256xf32> to vector<8x32xf32>
    %555 = vector.extract_strided_slice %543 {offsets = [0, 32], sizes = [8, 32], strides = [1, 1]} : vector<8x256xf32> to vector<8x32xf32>
    %556 = arith.addf %554, %555 : vector<8x32xf32>
    %557 = arith.negf %556 : vector<8x32xf32>
    %558 = math.exp %557 : vector<8x32xf32>
    %cst_164 = arith.constant 1.000000e+00 : f32
    %559 = vector.broadcast %cst_164 : f32 to vector<8x32xf32>
    %560 = arith.addf %559, %558 : vector<8x32xf32>
    %561 = arith.divf %559, %560 : vector<8x32xf32>
    %562 = vector.extract_strided_slice %544 {offsets = [0, 64], sizes = [8, 32], strides = [1, 1]} : vector<8x256xf32> to vector<8x32xf32>
    %563 = vector.extract_strided_slice %543 {offsets = [0, 64], sizes = [8, 32], strides = [1, 1]} : vector<8x256xf32> to vector<8x32xf32>
    %564 = arith.mulf %553, %563 : vector<8x32xf32>
    %565 = arith.addf %562, %564 : vector<8x32xf32>
    %566 = math.tanh %565 : vector<8x32xf32>
    %cst_165 = arith.constant 1.000000e+00 : f32
    %567 = vector.broadcast %cst_165 : f32 to vector<8x32xf32>
    %568 = arith.subf %567, %561 : vector<8x32xf32>
    %569 = arith.mulf %568, %566 : vector<8x32xf32>
    %570 = vector.extract_strided_slice %538 {offsets = [0, 0], sizes = [8, 32], strides = [1, 1]} : vector<8x64xf32> to vector<8x32xf32>
    %571 = arith.mulf %561, %570 : vector<8x32xf32>
    %572 = arith.addf %569, %571 : vector<8x32xf32>
    %573 = vector.extract_strided_slice %545 {offsets = [0, 128], sizes = [8, 32], strides = [1, 1]} : vector<8x256xf32> to vector<8x32xf32>
    %574 = vector.extract_strided_slice %543 {offsets = [0, 128], sizes = [8, 32], strides = [1, 1]} : vector<8x256xf32> to vector<8x32xf32>
    %575 = arith.addf %573, %574 : vector<8x32xf32>
    %576 = arith.negf %575 : vector<8x32xf32>
    %577 = math.exp %576 : vector<8x32xf32>
    %cst_166 = arith.constant 1.000000e+00 : f32
    %578 = vector.broadcast %cst_166 : f32 to vector<8x32xf32>
    %579 = arith.addf %578, %577 : vector<8x32xf32>
    %580 = arith.divf %578, %579 : vector<8x32xf32>
    %581 = vector.extract_strided_slice %545 {offsets = [0, 160], sizes = [8, 32], strides = [1, 1]} : vector<8x256xf32> to vector<8x32xf32>
    %582 = vector.extract_strided_slice %543 {offsets = [0, 160], sizes = [8, 32], strides = [1, 1]} : vector<8x256xf32> to vector<8x32xf32>
    %583 = arith.addf %581, %582 : vector<8x32xf32>
    %584 = arith.negf %583 : vector<8x32xf32>
    %585 = math.exp %584 : vector<8x32xf32>
    %cst_167 = arith.constant 1.000000e+00 : f32
    %586 = vector.broadcast %cst_167 : f32 to vector<8x32xf32>
    %587 = arith.addf %586, %585 : vector<8x32xf32>
    %588 = arith.divf %586, %587 : vector<8x32xf32>
    %589 = vector.extract_strided_slice %545 {offsets = [0, 192], sizes = [8, 32], strides = [1, 1]} : vector<8x256xf32> to vector<8x32xf32>
    %590 = vector.extract_strided_slice %543 {offsets = [0, 192], sizes = [8, 32], strides = [1, 1]} : vector<8x256xf32> to vector<8x32xf32>
    %591 = arith.mulf %580, %590 : vector<8x32xf32>
    %592 = arith.addf %589, %591 : vector<8x32xf32>
    %593 = math.tanh %592 : vector<8x32xf32>
    %cst_168 = arith.constant 1.000000e+00 : f32
    %594 = vector.broadcast %cst_168 : f32 to vector<8x32xf32>
    %595 = arith.subf %594, %588 : vector<8x32xf32>
    %596 = arith.mulf %595, %593 : vector<8x32xf32>
    %597 = vector.extract_strided_slice %538 {offsets = [0, 32], sizes = [8, 32], strides = [1, 1]} : vector<8x64xf32> to vector<8x32xf32>
    %598 = arith.mulf %588, %597 : vector<8x32xf32>
    %599 = arith.addf %596, %598 : vector<8x32xf32>
    %c56_169 = arith.constant 56 : index
    %c0_170 = arith.constant 0 : index
    %600 = vector.load %arg5[%c56_169, %c0_170] : memref<64x64xf32, #tpu.memory_space<vmem>>, vector<8x32xf32>
    tpu.vector_store %arg5[%c56_169, %c0_170], %572 {strides = array<i32>} : memref<64x64xf32, #tpu.memory_space<vmem>>, vector<8x32xf32>,
    %c0_171 = arith.constant 0 : index
    %c32_172 = arith.constant 32 : index
    %601 = vector.load %arg5[%c0_171, %c32_172] : memref<64x64xf32, #tpu.memory_space<vmem>>, vector<8x32xf32>
    tpu.vector_store %arg5[%c0_171, %c32_172], %599 {strides = array<i32>} : memref<64x64xf32, #tpu.memory_space<vmem>>, vector<8x32xf32>,
    %c0_173 = arith.constant 0 : index
    %c0_174 = arith.constant 0 : index
    %602 = vector.load %arg5[%c0_173, %c0_174] : memref<64x64xf32, #tpu.memory_space<vmem>>, vector<64x64xf32>
    %c400 = arith.constant 400 : index
    %c0_175 = arith.constant 0 : index
    %603 = vector.load %arg2[%c400, %c0_175] : memref<688x256xf32, #tpu.memory_space<vmem>>, vector<32x32xf32>
    %cst_176 = arith.constant dense<0.000000e+00> : vector<8x32xf32>
    %604 = tpu.matmul %89, %603, %cst_176 {dimension_numbers = #tpu.dot_dimension_numbers<[1], [0], [0], [1], [0, 0, 1, 1], [], []>} : vector<8x32xf32>, vector<32x32xf32>, vector<8x32xf32> -> vector<8x32xf32>
    %c152 = arith.constant 152 : index
    %c0_177 = arith.constant 0 : index
    %605 = vector.load %arg2[%c152, %c0_177] : memref<688x256xf32, #tpu.memory_space<vmem>>, vector<1x32xf32>
    %606 = vector.broadcast %605 : vector<1x32xf32> to vector<8x32xf32>
    %607 = arith.addf %604, %606 : vector<8x32xf32>
    %c432 = arith.constant 432 : index
    %c0_178 = arith.constant 0 : index
    %608 = vector.load %arg2[%c432, %c0_178] : memref<688x256xf32, #tpu.memory_space<vmem>>, vector<64x32xf32>
    %cst_179 = arith.constant dense<0.000000e+00> : vector<64x32xf32>
    %609 = tpu.matmul %602, %608, %cst_179 {dimension_numbers = #tpu.dot_dimension_numbers<[1], [0], [0], [1], [0, 0, 1, 1], [], []>} : vector<64x64xf32>, vector<64x32xf32>, vector<64x32xf32> -> vector<64x32xf32>
    %c160 = arith.constant 160 : index
    %c0_180 = arith.constant 0 : index
    %610 = vector.load %arg2[%c160, %c0_180] : memref<688x256xf32, #tpu.memory_space<vmem>>, vector<1x32xf32>
    %611 = vector.broadcast %610 : vector<1x32xf32> to vector<64x32xf32>
    %612 = arith.addf %609, %611 : vector<64x32xf32>
    %613 = vector.shape_cast %612 : vector<64x32xf32> to vector<8x8x32xf32>
    %614 = vector.shape_cast %607 : vector<8x32xf32> to vector<1x8x32xf32>
    %615 = vector.broadcast %614 : vector<1x8x32xf32> to vector<8x8x32xf32>
    %616 = arith.addf %613, %615 : vector<8x8x32xf32>
    %617 = math.tanh %616 : vector<8x8x32xf32>
    %c168 = arith.constant 168 : index
    %c0_181 = arith.constant 0 : index
    %618 = vector.load %arg2[%c168, %c0_181] : memref<688x256xf32, #tpu.memory_space<vmem>>, vector<1x32xf32>
    %619 = vector.shape_cast %618 : vector<1x32xf32> to vector<1x1x32xf32>
    %620 = vector.broadcast %619 : vector<1x1x32xf32> to vector<8x8x32xf32>
    %621 = arith.mulf %617, %620 : vector<8x8x32xf32>
    %cst_182 = arith.constant dense<0.000000e+00> : vector<8x8xf32>
    %622 = vector.multi_reduction <add>, %621, %cst_182 [2] : vector<8x8x32xf32> to vector<8x8xf32>
    %c216 = arith.constant 216 : index
    %c0_183 = arith.constant 0 : index
    %623 = vector.load %arg2[%c216, %c0_183] : memref<688x256xf32, #tpu.memory_space<vmem>>, vector<1x1xf32>
    %624 = vector.broadcast %623 : vector<1x1xf32> to vector<8x8xf32>
    %625 = arith.addf %622, %624 : vector<8x8xf32>
    %626 = tpu.transpose %625, [1, 0] : vector<8x8xf32> -> vector<8x8xf32>
    %cst_184 = arith.constant dense<0xFF800000> : vector<8xf32>
    %627 = vector.multi_reduction <maximumf>, %626, %cst_184 [1] : vector<8x8xf32> to vector<8xf32>
    %628 = vector.shape_cast %627 : vector<8xf32> to vector<8x1xf32>
    %629 = vector.broadcast %628 : vector<8x1xf32> to vector<8x8xf32>
    %630 = arith.subf %626, %629 : vector<8x8xf32>
    %631 = math.exp %630 : vector<8x8xf32>
    %cst_185 = arith.constant dense<0.000000e+00> : vector<8xf32>
    %632 = vector.multi_reduction <add>, %631, %cst_185 [1] : vector<8x8xf32> to vector<8xf32>
    %633 = vector.shape_cast %632 : vector<8xf32> to vector<8x1xf32>
    %634 = tpu.reciprocal %633 {approx = true} : vector<8x1xf32> -> vector<8x1xf32>
    %635 = vector.broadcast %634 : vector<8x1xf32> to vector<8x8xf32>
    %636 = arith.mulf %631, %635 : vector<8x8xf32>
    %cst_186 = arith.constant 0.000000e+00 : f32
    %637 = vector.broadcast %cst_186 : f32 to vector<8x64xf32>
    %638 = vector.extract_strided_slice %636 {offsets = [0, 0], sizes = [8, 1], strides = [1, 1]} : vector<8x8xf32> to vector<8x1xf32>
    %639 = vector.extract_strided_slice %602 {offsets = [0, 0], sizes = [8, 64], strides = [1, 1]} : vector<64x64xf32> to vector<8x64xf32>
    %640 = vector.broadcast %638 : vector<8x1xf32> to vector<8x64xf32>
    %641 = arith.mulf %640, %639 : vector<8x64xf32>
    %642 = arith.addf %637, %641 : vector<8x64xf32>
    %643 = vector.extract_strided_slice %636 {offsets = [0, 1], sizes = [8, 1], strides = [1, 1]} : vector<8x8xf32> to vector<8x1xf32>
    %644 = vector.extract_strided_slice %602 {offsets = [8, 0], sizes = [8, 64], strides = [1, 1]} : vector<64x64xf32> to vector<8x64xf32>
    %645 = vector.broadcast %643 : vector<8x1xf32> to vector<8x64xf32>
    %646 = arith.mulf %645, %644 : vector<8x64xf32>
    %647 = arith.addf %642, %646 : vector<8x64xf32>
    %648 = vector.extract_strided_slice %636 {offsets = [0, 2], sizes = [8, 1], strides = [1, 1]} : vector<8x8xf32> to vector<8x1xf32>
    %649 = vector.extract_strided_slice %602 {offsets = [16, 0], sizes = [8, 64], strides = [1, 1]} : vector<64x64xf32> to vector<8x64xf32>
    %650 = vector.broadcast %648 : vector<8x1xf32> to vector<8x64xf32>
    %651 = arith.mulf %650, %649 : vector<8x64xf32>
    %652 = arith.addf %647, %651 : vector<8x64xf32>
    %653 = vector.extract_strided_slice %636 {offsets = [0, 3], sizes = [8, 1], strides = [1, 1]} : vector<8x8xf32> to vector<8x1xf32>
    %654 = vector.extract_strided_slice %602 {offsets = [24, 0], sizes = [8, 64], strides = [1, 1]} : vector<64x64xf32> to vector<8x64xf32>
    %655 = vector.broadcast %653 : vector<8x1xf32> to vector<8x64xf32>
    %656 = arith.mulf %655, %654 : vector<8x64xf32>
    %657 = arith.addf %652, %656 : vector<8x64xf32>
    %658 = vector.extract_strided_slice %636 {offsets = [0, 4], sizes = [8, 1], strides = [1, 1]} : vector<8x8xf32> to vector<8x1xf32>
    %659 = vector.extract_strided_slice %602 {offsets = [32, 0], sizes = [8, 64], strides = [1, 1]} : vector<64x64xf32> to vector<8x64xf32>
    %660 = vector.broadcast %658 : vector<8x1xf32> to vector<8x64xf32>
    %661 = arith.mulf %660, %659 : vector<8x64xf32>
    %662 = arith.addf %657, %661 : vector<8x64xf32>
    %663 = vector.extract_strided_slice %636 {offsets = [0, 5], sizes = [8, 1], strides = [1, 1]} : vector<8x8xf32> to vector<8x1xf32>
    %664 = vector.extract_strided_slice %602 {offsets = [40, 0], sizes = [8, 64], strides = [1, 1]} : vector<64x64xf32> to vector<8x64xf32>
    %665 = vector.broadcast %663 : vector<8x1xf32> to vector<8x64xf32>
    %666 = arith.mulf %665, %664 : vector<8x64xf32>
    %667 = arith.addf %662, %666 : vector<8x64xf32>
    %668 = vector.extract_strided_slice %636 {offsets = [0, 6], sizes = [8, 1], strides = [1, 1]} : vector<8x8xf32> to vector<8x1xf32>
    %669 = vector.extract_strided_slice %602 {offsets = [48, 0], sizes = [8, 64], strides = [1, 1]} : vector<64x64xf32> to vector<8x64xf32>
    %670 = vector.broadcast %668 : vector<8x1xf32> to vector<8x64xf32>
    %671 = arith.mulf %670, %669 : vector<8x64xf32>
    %672 = arith.addf %667, %671 : vector<8x64xf32>
    %673 = vector.extract_strided_slice %636 {offsets = [0, 7], sizes = [8, 1], strides = [1, 1]} : vector<8x8xf32> to vector<8x1xf32>
    %674 = vector.extract_strided_slice %602 {offsets = [56, 0], sizes = [8, 64], strides = [1, 1]} : vector<64x64xf32> to vector<8x64xf32>
    %675 = vector.broadcast %673 : vector<8x1xf32> to vector<8x64xf32>
    %676 = arith.mulf %675, %674 : vector<8x64xf32>
    %677 = arith.addf %672, %676 : vector<8x64xf32>
    %c496 = arith.constant 496 : index
    %c0_187 = arith.constant 0 : index
    %678 = vector.load %arg2[%c496, %c0_187] : memref<688x256xf32, #tpu.memory_space<vmem>>, vector<32x32xf32>
    %cst_188 = arith.constant dense<0.000000e+00> : vector<8x32xf32>
    %679 = tpu.matmul %89, %678, %cst_188 {dimension_numbers = #tpu.dot_dimension_numbers<[1], [0], [0], [1], [0, 0, 1, 1], [], []>} : vector<8x32xf32>, vector<32x32xf32>, vector<8x32xf32> -> vector<8x32xf32>
    %c176 = arith.constant 176 : index
    %c0_189 = arith.constant 0 : index
    %680 = vector.load %arg2[%c176, %c0_189] : memref<688x256xf32, #tpu.memory_space<vmem>>, vector<1x32xf32>
    %681 = vector.broadcast %680 : vector<1x32xf32> to vector<8x32xf32>
    %682 = arith.addf %679, %681 : vector<8x32xf32>
    %c528 = arith.constant 528 : index
    %c0_190 = arith.constant 0 : index
    %683 = vector.load %arg2[%c528, %c0_190] : memref<688x256xf32, #tpu.memory_space<vmem>>, vector<64x32xf32>
    %cst_191 = arith.constant dense<0.000000e+00> : vector<8x32xf32>
    %684 = tpu.matmul %677, %683, %cst_191 {dimension_numbers = #tpu.dot_dimension_numbers<[1], [0], [0], [1], [0, 0, 1, 1], [], []>} : vector<8x64xf32>, vector<64x32xf32>, vector<8x32xf32> -> vector<8x32xf32>
    %c184 = arith.constant 184 : index
    %c0_192 = arith.constant 0 : index
    %685 = vector.load %arg2[%c184, %c0_192] : memref<688x256xf32, #tpu.memory_space<vmem>>, vector<1x32xf32>
    %686 = vector.broadcast %685 : vector<1x32xf32> to vector<8x32xf32>
    %687 = arith.addf %684, %686 : vector<8x32xf32>
    %688 = arith.addf %687, %682 : vector<8x32xf32>
    %689 = math.tanh %688 : vector<8x32xf32>
    %c192 = arith.constant 192 : index
    %c0_193 = arith.constant 0 : index
    %690 = vector.load %arg2[%c192, %c0_193] : memref<688x256xf32, #tpu.memory_space<vmem>>, vector<1x32xf32>
    %691 = vector.broadcast %690 : vector<1x32xf32> to vector<8x32xf32>
    %692 = arith.mulf %689, %691 : vector<8x32xf32>
    %cst_194 = arith.constant dense<0.000000e+00> : vector<8xf32>
    %693 = vector.multi_reduction <add>, %692, %cst_194 [1] : vector<8x32xf32> to vector<8xf32>
    %694 = vector.shape_cast %693 : vector<8xf32> to vector<8x1xf32>
    %c216_195 = arith.constant 216 : index
    %c1_196 = arith.constant 1 : index
    %695 = vector.load %arg2[%c216_195, %c1_196] : memref<688x256xf32, #tpu.memory_space<vmem>>, vector<1x1xf32>
    %696 = vector.broadcast %695 : vector<1x1xf32> to vector<8x1xf32>
    %697 = arith.addf %694, %696 : vector<8x1xf32>
    %698 = vector.extract_strided_slice %697 {offsets = [0, 0], sizes = [2, 1], strides = [1, 1]} : vector<8x1xf32> to vector<2x1xf32>
    %699 = vector.extract_strided_slice %697 {offsets = [2, 0], sizes = [2, 1], strides = [1, 1]} : vector<8x1xf32> to vector<2x1xf32>
    %700 = vector.extract_strided_slice %697 {offsets = [4, 0], sizes = [2, 1], strides = [1, 1]} : vector<8x1xf32> to vector<2x1xf32>
    %701 = tpu.concatenate %698, %699, %700 in 1 : vector<2x1xf32>, vector<2x1xf32>, vector<2x1xf32> -> vector<2x3xf32>
    %cst_197 = arith.constant dense<0xFF800000> : vector<2xf32>
    %702 = vector.multi_reduction <maximumf>, %701, %cst_197 [1] : vector<2x3xf32> to vector<2xf32>
    %703 = vector.shape_cast %702 : vector<2xf32> to vector<2x1xf32>
    %704 = vector.broadcast %703 : vector<2x1xf32> to vector<2x3xf32>
    %705 = arith.subf %701, %704 : vector<2x3xf32>
    %706 = math.exp %705 : vector<2x3xf32>
    %cst_198 = arith.constant dense<0.000000e+00> : vector<2xf32>
    %707 = vector.multi_reduction <add>, %706, %cst_198 [1] : vector<2x3xf32> to vector<2xf32>
    %708 = vector.shape_cast %707 : vector<2xf32> to vector<2x1xf32>
    %709 = tpu.reciprocal %708 {approx = true} : vector<2x1xf32> -> vector<2x1xf32>
    %710 = vector.broadcast %709 : vector<2x1xf32> to vector<2x3xf32>
    %711 = arith.mulf %706, %710 : vector<2x3xf32>
    %cst_199 = arith.constant 0.000000e+00 : f32
    %712 = vector.broadcast %cst_199 : f32 to vector<2x64xf32>
    %713 = vector.extract_strided_slice %711 {offsets = [0, 0], sizes = [2, 1], strides = [1, 1]} : vector<2x3xf32> to vector<2x1xf32>
    %714 = vector.extract_strided_slice %677 {offsets = [0, 0], sizes = [2, 64], strides = [1, 1]} : vector<8x64xf32> to vector<2x64xf32>
    %715 = vector.broadcast %713 : vector<2x1xf32> to vector<2x64xf32>
    %716 = arith.mulf %715, %714 : vector<2x64xf32>
    %717 = arith.addf %712, %716 : vector<2x64xf32>
    %718 = vector.extract_strided_slice %711 {offsets = [0, 1], sizes = [2, 1], strides = [1, 1]} : vector<2x3xf32> to vector<2x1xf32>
    %719 = vector.extract_strided_slice %677 {offsets = [2, 0], sizes = [2, 64], strides = [1, 1]} : vector<8x64xf32> to vector<2x64xf32>
    %720 = vector.broadcast %718 : vector<2x1xf32> to vector<2x64xf32>
    %721 = arith.mulf %720, %719 : vector<2x64xf32>
    %722 = arith.addf %717, %721 : vector<2x64xf32>
    %723 = vector.extract_strided_slice %711 {offsets = [0, 2], sizes = [2, 1], strides = [1, 1]} : vector<2x3xf32> to vector<2x1xf32>
    %724 = vector.extract_strided_slice %677 {offsets = [4, 0], sizes = [2, 64], strides = [1, 1]} : vector<8x64xf32> to vector<2x64xf32>
    %725 = vector.broadcast %723 : vector<2x1xf32> to vector<2x64xf32>
    %726 = arith.mulf %725, %724 : vector<2x64xf32>
    %727 = arith.addf %722, %726 : vector<2x64xf32>
    %c592 = arith.constant 592 : index
    %c0_200 = arith.constant 0 : index
    %728 = vector.load %arg2[%c592, %c0_200] : memref<688x256xf32, #tpu.memory_space<vmem>>, vector<64x32xf32>
    %cst_201 = arith.constant dense<0.000000e+00> : vector<2x32xf32>
    %729 = tpu.matmul %727, %728, %cst_201 {dimension_numbers = #tpu.dot_dimension_numbers<[1], [0], [0], [1], [0, 0, 1, 1], [], []>} : vector<2x64xf32>, vector<64x32xf32>, vector<2x32xf32> -> vector<2x32xf32>
    %730 = vector.extract_strided_slice %89 {offsets = [0, 0], sizes = [2, 32], strides = [1, 1]} : vector<8x32xf32> to vector<2x32xf32>
    %c656 = arith.constant 656 : index
    %c0_202 = arith.constant 0 : index
    %731 = vector.load %arg2[%c656, %c0_202] : memref<688x256xf32, #tpu.memory_space<vmem>>, vector<32x32xf32>
    %cst_203 = arith.constant dense<0.000000e+00> : vector<2x32xf32>
    %732 = tpu.matmul %730, %731, %cst_203 {dimension_numbers = #tpu.dot_dimension_numbers<[1], [0], [0], [1], [0, 0, 1, 1], [], []>} : vector<2x32xf32>, vector<32x32xf32>, vector<2x32xf32> -> vector<2x32xf32>
    %733 = arith.addf %729, %732 : vector<2x32xf32>
    %c200 = arith.constant 200 : index
    %c0_204 = arith.constant 0 : index
    %734 = vector.load %arg2[%c200, %c0_204] : memref<688x256xf32, #tpu.memory_space<vmem>>, vector<1x32xf32>
    %735 = vector.broadcast %734 : vector<1x32xf32> to vector<2x32xf32>
    %736 = arith.addf %733, %735 : vector<2x32xf32>
    %737 = math.tanh %736 : vector<2x32xf32>
    %c208 = arith.constant 208 : index
    %c0_205 = arith.constant 0 : index
    %738 = vector.load %arg2[%c208, %c0_205] : memref<688x256xf32, #tpu.memory_space<vmem>>, vector<1x32xf32>
    %739 = vector.broadcast %738 : vector<1x32xf32> to vector<2x32xf32>
    %740 = arith.mulf %737, %739 : vector<2x32xf32>
    %cst_206 = arith.constant dense<0.000000e+00> : vector<2xf32>
    %741 = vector.multi_reduction <add>, %740, %cst_206 [1] : vector<2x32xf32> to vector<2xf32>
    %742 = vector.shape_cast %741 : vector<2xf32> to vector<2x1xf32>
    %c216_207 = arith.constant 216 : index
    %c2_208 = arith.constant 2 : index
    %743 = vector.load %arg2[%c216_207, %c2_208] : memref<688x256xf32, #tpu.memory_space<vmem>>, vector<1x1xf32>
    %744 = vector.broadcast %743 : vector<1x1xf32> to vector<2x1xf32>
    %745 = arith.addf %742, %744 : vector<2x1xf32>
    %cst_209 = arith.constant 0.000000e+00 : f32
    %746 = vector.broadcast %cst_209 : f32 to vector<8x128xf32>
    %c0_210 = arith.constant 0 : index
    %c0_211 = arith.constant 0 : index
    %747 = vector.load %arg3[%c0_210, %c0_211] : memref<8x128xf32, #tpu.memory_space<vmem>>, vector<8x128xf32>
    tpu.vector_store %arg3[%c0_210, %c0_211], %746 {strides = array<i32>} : memref<8x128xf32, #tpu.memory_space<vmem>>, vector<8x128xf32>,
    %c0_212 = arith.constant 0 : index
    %c0_213 = arith.constant 0 : index
    %748 = vector.load %arg3[%c0_212, %c0_213] : memref<8x128xf32, #tpu.memory_space<vmem>>, vector<8x8xf32>
    tpu.vector_store %arg3[%c0_212, %c0_213], %636 {strides = array<i32>} : memref<8x128xf32, #tpu.memory_space<vmem>>, vector<8x8xf32>,
    %c0_214 = arith.constant 0 : index
    %c8_215 = arith.constant 8 : index
    %749 = vector.load %arg3[%c0_214, %c8_215] : memref<8x128xf32, #tpu.memory_space<vmem>>, vector<2x3xf32>
    tpu.vector_store %arg3[%c0_214, %c8_215], %711 {strides = array<i32>} : memref<8x128xf32, #tpu.memory_space<vmem>>, vector<2x3xf32>,
    %c0_216 = arith.constant 0 : index
    %c11 = arith.constant 11 : index
    %750 = vector.load %arg3[%c0_216, %c11] : memref<8x128xf32, #tpu.memory_space<vmem>>, vector<2x1xf32>
    tpu.vector_store %arg3[%c0_216, %c11], %745 {strides = array<i32>} : memref<8x128xf32, #tpu.memory_space<vmem>>, vector<2x1xf32>,
    return
  }
}

</mosaic_0001>

<llo_original>
// kernel: tile.9
$region0: #{tile.9}
  %s0 = inlined_call_operand.vmem [shape: s32[3,2,6], index: 0, kind: input, shape index: {}]
  %s1 = inlined_call_operand.vmem [shape: s32[6,6], index: 1, kind: output, shape index: {}]
  $region1: #{tile.9} parent=0
    #allocation0 [shape = 'u8[12288]{0}', space=vmem, size = 0x3000, scoped, tag = 'scoped mem for input reshape']
    %s3 = sshll.u32 1, 2
    %s4 = ssub.s32 %s3, 1
    %s5 = smul.addr 2, 2
    %s6 = scalar_lea.vmem %s0, %s5
    %v7 = vld [vmem:[%s6] sm:%s4]
    %s8 = scalar_lea.vmem [#allocation0], 16
    %9 = vst [vmem:[%s8] sm:%s4] %v7
    %s10 = scalar_lea.vmem %s0, 2
    %v11 = vld [vmem:[%s10] sm:%s4]
    %s12 = scalar_lea.vmem [#allocation0], 8
    %13 = vst [vmem:[%s12] sm:%s4] %v11
    %v14 = vld [vmem:[%s0] sm:%s4]
    %15 = vst [vmem:[#allocation0] sm:%s4] %v14
    %v16 = vld [vmem:[#allocation0] sm:$0x3]
    %vm17 = vcmask 48128
    %18 = vst.msk [vmem:[%s1] sm:$0x3] %vm17, %v16
    %s19 = scalar_lea.vmem [#allocation0], 8
    %v20 = vld [vmem:[%s19] sm:$0x3]
    %vm21 = vcmask 48128
    %s22 = scalar_lea.vmem %s1, 2
    %23 = vst.msk [vmem:[%s22] sm:$0x3] %vm21, %v20
    %s24 = scalar_lea.vmem [#allocation0], 16
    %v25 = vld [vmem:[%s24] sm:$0x3]
    %vm26 = vcmask 48128
    %s27 = scalar_lea.vmem %s1, 4
    %28 = vst.msk [vmem:[%s27] sm:$0x3] %vm26, %v25

// kernel: _lambda_.1
$region0: #{_lambda_.1}
  #allocation0 [shape = 'u32[]', space=smem, size = 0x4, offset = 0x4, fixed_abs, tag = 'smem constant byte address 0x4 - core index']
  #allocation1 [shape = 'u32[144,128]{1,0:T(1,128)}', space=vmem, size = 0x12000, scoped, tag = 'internal scratch']
  #allocation2 [shape = 'f32[64,256]{1,0:T(8,128)}', space=vmem, size = 0x10000, scoped, tag = 'scratch operand']
  #allocation3 [shape = 'f32[64,64]{1,0:T(8,128)}', space=vmem, size = 0x8000, scoped, tag = 'scratch operand']
  %s0 = inlined_call_operand.vmem [shape: s32[64,3], index: 0, kind: input, shape index: {}]
  %s1 = inlined_call_operand.vmem [shape: s32[8,6], index: 1, kind: input, shape index: {}]
  %s2 = inlined_call_operand.hbm [shape: f32[688,256], index: 2, kind: input, shape index: {}]
  %s3 = inlined_call_operand.vmem [shape: f32[8,128], index: 3, kind: output, shape index: {}]
  %s4 = sld [smem:[#allocation0]]
  $region26: #{_lambda_.1} parent=0
    _
  %s6 = ssub.s32 1, %s4
  %s7 = scalar_select 0, %s6, %s4
  $region1: #{_lambda_.1} parent=0
    #allocation4 [shape = 'u8[704512]{0}', space=vmem, size = 0xac000, scoped, tag = 'input window, operand 2, single buffered']
    #allocation5 [shape = 's32[1]{0}', space=sflag, size = 0x4, scoped, tag = 'scoped memory for _lambda_.1']
    %8 = vsyncpa [#allocation5], 0
    // Predicated region
    $region2: #{_lambda_.1} parent=1 // pred_check
      _
    $region3: #{_lambda_.1} parent=1 // pred_check_branch
      %10 = sbr.rel (0) target = $region5
    $region4: #{_lambda_.1} parent=1 // pred_region
      _
    $region5: #{_lambda_.1} parent=1 // pred_fallthru
      _
    // Predicated region
    $region6: #{_lambda_.1} parent=1 // pred_check
      _
    $region7: #{_lambda_.1} parent=1 // pred_check_branch
      %12 = sbr.rel (0) target = $region9
    $region8: #{_lambda_.1} parent=1 // pred_region
      _
    $region9: #{_lambda_.1} parent=1 // pred_fallthru
      _
    // Predicated region
    $region10: #{_lambda_.1} parent=1 // pred_check
      _
    $region11: #{_lambda_.1} parent=1 // pred_check_branch
      %14 = sbr.rel (0) target = $region13
    $region12: #{_lambda_.1} parent=1 // pred_region
      %s16 = ssub.s32 22016, 22016
      %17 = vsyncadd [#allocation5], %s16
      %s18 = sshll.u32 [#allocation4], 4
      %s19 = int_to_ptr.vmem [resolvable:$true] %s18
      %24 = dma.hbm_to_vmem [thread:$0]  %s2, 22016, %s19, [#allocation5], 256, 256, 16
    $region13: #{_lambda_.1} parent=1 // pred_fallthru
      _
    // Predicated region
    $region14: #{_lambda_.1} parent=1 // pred_check
      _
    $region15: #{_lambda_.1} parent=1 // pred_check_branch
      %26 = sbr.rel (0) target = $region17
    $region16: #{_lambda_.1} parent=1 // pred_region
      %27 = dma.done [#allocation5], 22016
    $region17: #{_lambda_.1} parent=1 // pred_fallthru
      _
    %v28 = vlaneseq
    %v29 = vand.u32 %v28, 127
    %v30 = vld [vmem:[%s0] sm:$0xff]
    %v31 = vld [vmem:[%s0 + $0x8] sm:$0xff]
    %v32 = vld [vmem:[%s0 + $0x10] sm:$0xff]
    %v33 = vld [vmem:[%s0 + $0x18] sm:$0xff]
    %v34 = vld [vmem:[%s0 + $0x20] sm:$0xff]
    %v35 = vld [vmem:[%s0 + $0x28] sm:$0xff]
    %v36 = vld [vmem:[%s0 + $0x30] sm:$0xff]
    %v37 = vld [vmem:[%s0 + $0x38] sm:$0xff]
    %38 = vset.pattern.permute.xlu0 0
    %39 = vperm.xlu0 %38, %v30
    %v40 = vpop.permute.xlu0 %39
    %41 = vset.pattern.permute.xlu0 0
    %42 = vperm.xlu0 %41, %v31
    %v43 = vpop.permute.xlu0 %42
    %44 = vset.pattern.permute.xlu0 0
    %45 = vperm.xlu0 %44, %v32
    %v46 = vpop.permute.xlu0 %45
    %47 = vset.pattern.permute.xlu0 0
    %48 = vperm.xlu0 %47, %v33
    %v49 = vpop.permute.xlu0 %48
    %50 = vset.pattern.permute.xlu0 0
    %51 = vperm.xlu0 %50, %v34
    %v52 = vpop.permute.xlu0 %51
    %53 = vset.pattern.permute.xlu0 0
    %54 = vperm.xlu0 %53, %v35
    %v55 = vpop.permute.xlu0 %54
    %56 = vset.pattern.permute.xlu0 0
    %57 = vperm.xlu0 %56, %v36
    %v58 = vpop.permute.xlu0 %57
    %59 = vset.pattern.permute.xlu0 0
    %60 = vperm.xlu0 %59, %v37
    %v61 = vpop.permute.xlu0 %60
    %vm62 = vcmp.eq.s32.totalorder %v29, %v40
    %vm63 = vcmp.eq.s32.totalorder %v29, %v43
    %vm64 = vcmp.eq.s32.totalorder %v29, %v46
    %vm65 = vcmp.eq.s32.totalorder %v29, %v49
    %vm66 = vcmp.eq.s32.totalorder %v29, %v52
    %vm67 = vcmp.eq.s32.totalorder %v29, %v55
    %vm68 = vcmp.eq.s32.totalorder %v29, %v58
    %vm69 = vcmp.eq.s32.totalorder %v29, %v61
    %v70 = vsel %vm62, 1, 0
    %v71 = vsel %vm63, 1, 0
    %v72 = vsel %vm64, 1, 0
    %v73 = vsel %vm65, 1, 0
    %v74 = vsel %vm66, 1, 0
    %v75 = vsel %vm67, 1, 0
    %v76 = vsel %vm68, 1, 0
    %v77 = vsel %vm69, 1, 0
    %v78 = vcvt.s32.f32 %v70
    %v79 = vcvt.s32.f32 %v71
    %v80 = vcvt.s32.f32 %v72
    %v81 = vcvt.s32.f32 %v73
    %v82 = vcvt.s32.f32 %v74
    %v83 = vcvt.s32.f32 %v75
    %v84 = vcvt.s32.f32 %v76
    %v85 = vcvt.s32.f32 %v77
    %v86 = vadd.s32 %v30, 20
    %v87 = vadd.s32 %v31, 20
    %v88 = vadd.s32 %v32, 20
    %v89 = vadd.s32 %v33, 20
    %v90 = vadd.s32 %v34, 20
    %v91 = vadd.s32 %v35, 20
    %v92 = vadd.s32 %v36, 20
    %v93 = vadd.s32 %v37, 20
    %94 = vset.pattern.permute.xlu0 1
    %95 = vperm.xlu0 %94, %v86
    %v96 = vpop.permute.xlu0 %95
    %97 = vset.pattern.permute.xlu0 1
    %98 = vperm.xlu0 %97, %v87
    %v99 = vpop.permute.xlu0 %98
    %100 = vset.pattern.permute.xlu0 1
    %101 = vperm.xlu0 %100, %v88
    %v102 = vpop.permute.xlu0 %101
    %103 = vset.pattern.permute.xlu0 1
    %104 = vperm.xlu0 %103, %v89
    %v105 = vpop.permute.xlu0 %104
    %106 = vset.pattern.permute.xlu0 1
    %107 = vperm.xlu0 %106, %v90
    %v108 = vpop.permute.xlu0 %107
    %109 = vset.pattern.permute.xlu0 1
    %110 = vperm.xlu0 %109, %v91
    %v111 = vpop.permute.xlu0 %110
    %112 = vset.pattern.permute.xlu0 1
    %113 = vperm.xlu0 %112, %v92
    %v114 = vpop.permute.xlu0 %113
    %115 = vset.pattern.permute.xlu0 1
    %116 = vperm.xlu0 %115, %v93
    %v117 = vpop.permute.xlu0 %116
    %vm118 = vcmp.eq.s32.totalorder %v29, %v96
    %vm119 = vcmp.eq.s32.totalorder %v29, %v99
    %vm120 = vcmp.eq.s32.totalorder %v29, %v102
    %vm121 = vcmp.eq.s32.totalorder %v29, %v105
    %vm122 = vcmp.eq.s32.totalorder %v29, %v108
    %vm123 = vcmp.eq.s32.totalorder %v29, %v111
    %vm124 = vcmp.eq.s32.totalorder %v29, %v114
    %vm125 = vcmp.eq.s32.totalorder %v29, %v117
    %v126 = vsel %vm118, 1, 0
    %v127 = vsel %vm119, 1, 0
    %v128 = vsel %vm120, 1, 0
    %v129 = vsel %vm121, 1, 0
    %v130 = vsel %vm122, 1, 0
    %v131 = vsel %vm123, 1, 0
    %v132 = vsel %vm124, 1, 0
    %v133 = vsel %vm125, 1, 0
    %v134 = vcvt.s32.f32 %v126
    %v135 = vcvt.s32.f32 %v127
    %v136 = vcvt.s32.f32 %v128
    %v137 = vcvt.s32.f32 %v129
    %v138 = vcvt.s32.f32 %v130
    %v139 = vcvt.s32.f32 %v131
    %v140 = vcvt.s32.f32 %v132
    %v141 = vcvt.s32.f32 %v133
    %v142 = vadd.f32 %v78, %v134
    %v143 = vadd.f32 %v79, %v135
    %v144 = vadd.f32 %v80, %v136
    %v145 = vadd.f32 %v81, %v137
    %v146 = vadd.f32 %v82, %v138
    %v147 = vadd.f32 %v83, %v139
    %v148 = vadd.f32 %v84, %v140
    %v149 = vadd.f32 %v85, %v141
    %v150 = vadd.s32 %v30, 40
    %v151 = vadd.s32 %v31, 40
    %v152 = vadd.s32 %v32, 40
    %v153 = vadd.s32 %v33, 40
    %v154 = vadd.s32 %v34, 40
    %v155 = vadd.s32 %v35, 40
    %v156 = vadd.s32 %v36, 40
    %v157 = vadd.s32 %v37, 40
    %158 = vset.pattern.permute.xlu0 2
    %159 = vperm.xlu0 %158, %v150
    %v160 = vpop.permute.xlu0 %159
    %161 = vset.pattern.permute.xlu0 2
    %162 = vperm.xlu0 %161, %v151
    %v163 = vpop.permute.xlu0 %162
    %164 = vset.pattern.permute.xlu0 2
    %165 = vperm.xlu0 %164, %v152
    %v166 = vpop.permute.xlu0 %165
    %167 = vset.pattern.permute.xlu0 2
    %168 = vperm.xlu0 %167, %v153
    %v169 = vpop.permute.xlu0 %168
    %170 = vset.pattern.permute.xlu0 2
    %171 = vperm.xlu0 %170, %v154
    %v172 = vpop.permute.xlu0 %171
    %173 = vset.pattern.permute.xlu0 2
    %174 = vperm.xlu0 %173, %v155
    %v175 = vpop.permute.xlu0 %174
    %176 = vset.pattern.permute.xlu0 2
    %177 = vperm.xlu0 %176, %v156
    %v178 = vpop.permute.xlu0 %177
    %179 = vset.pattern.permute.xlu0 2
    %180 = vperm.xlu0 %179, %v157
    %v181 = vpop.permute.xlu0 %180
    %vm182 = vcmp.eq.s32.totalorder %v29, %v160
    %vm183 = vcmp.eq.s32.totalorder %v29, %v163
    %vm184 = vcmp.eq.s32.totalorder %v29, %v166
    %vm185 = vcmp.eq.s32.totalorder %v29, %v169
    %vm186 = vcmp.eq.s32.totalorder %v29, %v172
    %vm187 = vcmp.eq.s32.totalorder %v29, %v175
    %vm188 = vcmp.eq.s32.totalorder %v29, %v178
    %vm189 = vcmp.eq.s32.totalorder %v29, %v181
    %v190 = vsel %vm182, 1, 0
    %v191 = vsel %vm183, 1, 0
    %v192 = vsel %vm184, 1, 0
    %v193 = vsel %vm185, 1, 0
    %v194 = vsel %vm186, 1, 0
    %v195 = vsel %vm187, 1, 0
    %v196 = vsel %vm188, 1, 0
    %v197 = vsel %vm189, 1, 0
    %v198 = vcvt.s32.f32 %v190
    %v199 = vcvt.s32.f32 %v191
    %v200 = vcvt.s32.f32 %v192
    %v201 = vcvt.s32.f32 %v193
    %v202 = vcvt.s32.f32 %v194
    %v203 = vcvt.s32.f32 %v195
    %v204 = vcvt.s32.f32 %v196
    %v205 = vcvt.s32.f32 %v197
    %v206 = vadd.f32 %v142, %v198
    %v207 = vadd.f32 %v143, %v199
    %v208 = vadd.f32 %v144, %v200
    %v209 = vadd.f32 %v145, %v201
    %v210 = vadd.f32 %v146, %v202
    %v211 = vadd.f32 %v147, %v203
    %v212 = vadd.f32 %v148, %v204
    %v213 = vadd.f32 %v149, %v205
    %v214 = vld [vmem:[#allocation4] sm:$0xff]
    %v215 = vld [vmem:[#allocation4 + $0x8] sm:$0xff]
    %v216 = vld [vmem:[#allocation4 + $0x10] sm:$0xff]
    %v217 = vld [vmem:[#allocation4 + $0x18] sm:$0xff]
    %v218 = vld [vmem:[#allocation4 + $0x20] sm:$0xff]
    %v219 = vld [vmem:[#allocation4 + $0x28] sm:$0xff]
    %v220 = vld [vmem:[#allocation4 + $0x30] sm:$0xff]
    %v221 = vld [vmem:[#allocation4 + $0x38] sm:$0xff]
    %v222 = vld [vmem:[#allocation4 + $0x40] sm:$0xff]
    %v223 = vld [vmem:[#allocation4 + $0x48] sm:$0xff]
    %v224 = vld [vmem:[#allocation4 + $0x50] sm:$0xff]
    %v225 = vld [vmem:[#allocation4 + $0x58] sm:$0xff]
    %v226 = vld [vmem:[#allocation4 + $0x60] sm:$0xff]
    %v227 = vld [vmem:[#allocation4 + $0x68] sm:$0xff]
    %v228 = vld [vmem:[#allocation4 + $0x70] sm:$0xff]
    %v229 = vld [vmem:[#allocation4 + $0x78] sm:$0xff]
    %s230 = scalar_lea.vmem [#allocation4], 256
    %v231 = vld [vmem:[%s230] ss:$8 sm:$0x3]
    %v233 = vlaneseq
    %v234 = vshrl.u32 %v233, 7
    %v235 = vsub.s32 0, %v234
    %v236 = vrot.slane %v231, %v235
    %v237 = vlaneseq
    %v238 = vshrl.u32 %v237, 7
    %v239 = vsub.s32 1, %v238
    %v240 = vrot.slane %v231, %v239
    %vm243 = vcmask 523264
    %v245 = vsel %vm243, %v206, 0
    %v248 = vsel %vm243, %v207, 0
    %v251 = vsel %vm243, %v208, 0
    %v254 = vsel %vm243, %v209, 0
    %v257 = vsel %vm243, %v210, 0
    %v260 = vsel %vm243, %v211, 0
    %v263 = vsel %vm243, %v212, 0
    %v266 = vsel %vm243, %v213, 0
    %268 = vmatprep.subr.mxu0 0.0
    %269 = vmatpush1.msra.mxu0 0.0
    %270 = vmatprep.subr.mxu0 0.0
    %271 = vmatpush1.msra.mxu0 0.0
    %272 = vmatprep.subr.mxu0 0.0
    %273 = vmatpush1.msra.mxu0 0.0
    %274 = vmatprep.subr.mxu0 0.0
    %275 = vmatpush1.msra.mxu0 0.0
    %276 = vmatprep.subr.mxu0 0.0
    %277 = vmatpush1.msra.mxu0 0.0
    %278 = vmatprep.subr.mxu0 0.0
    %279 = vmatpush1.msra.mxu0 0.0
    %280 = vmatprep.subr.mxu0 0.0
    %281 = vmatpush1.msra.mxu0 0.0
    %282 = vmatprep.subr.mxu0 0.0
    %283 = vmatpush1.msra.mxu0 0.0
    %284 = vmatprep.subr.mxu0 %v229
    %285 = vmatpush1.msra.mxu0 %v228
    %286 = vmatprep.subr.mxu0 %v227
    %287 = vmatpush1.msra.mxu0 %v226
    %288 = vmatprep.subr.mxu0 %v225
    %289 = vmatpush1.msra.mxu0 %v224
    %290 = vmatprep.subr.mxu0 %v223
    %291 = vmatpush1.msra.mxu0 %v222
    %292 = vmatprep.subr.mxu0 %v221
    %293 = vmatpush1.msra.mxu0 %v220
    %294 = vmatprep.subr.mxu0 %v219
    %295 = vmatpush1.msra.mxu0 %v218
    %296 = vmatprep.subr.mxu0 %v217
    %297 = vmatpush1.msra.mxu0 %v216
    %298 = vmatprep.subr.mxu0 %v215
    %299 = vmatpush1.msra.mxu0 %v214
    %300 = vmatprep.subr.mxu0 0.0
    %301 = vmatpush2.msra.mxu0 0.0
    %302 = vmatprep.subr.mxu0 0.0
    %303 = vmatpush2.msra.mxu0 0.0
    %304 = vmatprep.subr.mxu0 0.0
    %305 = vmatpush2.msra.mxu0 0.0
    %306 = vmatprep.subr.mxu0 0.0
    %307 = vmatpush2.msra.mxu0 0.0
    %308 = vmatprep.subr.mxu0 0.0
    %309 = vmatpush2.msra.mxu0 0.0
    %310 = vmatprep.subr.mxu0 0.0
    %311 = vmatpush2.msra.mxu0 0.0
    %312 = vmatprep.subr.mxu0 0.0
    %313 = vmatpush2.msra.mxu0 0.0
    %314 = vmatprep.subr.mxu0 0.0
    %315 = vmatpush2.msra.mxu0 0.0
    %316 = vmatprep.subr.mxu0 0.0
    %317 = vmatpush2.msra.mxu0 0.0
    %318 = vmatprep.subr.mxu0 0.0
    %319 = vmatpush2.msra.mxu0 0.0
    %320 = vmatprep.subr.mxu0 0.0
    %321 = vmatpush2.msra.mxu0 0.0
    %322 = vmatprep.subr.mxu0 0.0
    %323 = vmatpush2.msra.mxu0 0.0
    %324 = vmatprep.subr.mxu0 0.0
    %325 = vmatpush2.msra.mxu0 0.0
    %326 = vmatprep.subr.mxu0 0.0
    %327 = vmatpush2.msra.mxu0 0.0
    %328 = vmatprep.subr.mxu0 0.0
    %329 = vmatpush2.msra.mxu0 0.0
    %330 = vmatprep.subr.mxu0 0.0
    %331 = vmatpush2.msra.mxu0 0.0
    %332 = vmatprep.mubr.f32.mxu0 0.0
    %333 = vmatmul.mubr.f32.gmra.mxu0 %v245
    %v334 = vpop.f32.mrf.mxu0
    %v335 = vadd.f32 %v236, %v334
    %v336 = vpop.f32.mrf.mxu0
    %v337 = vadd.f32 %v240, %v336
    %338 = vmatprep.mubr.f32.mxu0 0.0
    %339 = vmatmul.mubr.f32.gmra.mxu0 %v248
    %v340 = vpop.f32.mrf.mxu0
    %v341 = vadd.f32 %v236, %v340
    %v342 = vpop.f32.mrf.mxu0
    %v343 = vadd.f32 %v240, %v342
    %344 = vmatprep.mubr.f32.mxu0 0.0
    %345 = vmatmul.mubr.f32.gmra.mxu0 %v251
    %v346 = vpop.f32.mrf.mxu0
    %v347 = vadd.f32 %v236, %v346
    %v348 = vpop.f32.mrf.mxu0
    %v349 = vadd.f32 %v240, %v348
    %350 = vmatprep.mubr.f32.mxu0 0.0
    %351 = vmatmul.mubr.f32.gmra.mxu0 %v254
    %v352 = vpop.f32.mrf.mxu0
    %v353 = vadd.f32 %v236, %v352
    %v354 = vpop.f32.mrf.mxu0
    %v355 = vadd.f32 %v240, %v354
    %356 = vmatprep.mubr.f32.mxu0 0.0
    %357 = vmatmul.mubr.f32.gmra.mxu0 %v257
    %v358 = vpop.f32.mrf.mxu0
    %v359 = vadd.f32 %v236, %v358
    %v360 = vpop.f32.mrf.mxu0
    %v361 = vadd.f32 %v240, %v360
    %362 = vmatprep.mubr.f32.mxu0 0.0
    %363 = vmatmul.mubr.f32.gmra.mxu0 %v260
    %v364 = vpop.f32.mrf.mxu0
    %v365 = vadd.f32 %v236, %v364
    %v366 = vpop.f32.mrf.mxu0
    %v367 = vadd.f32 %v240, %v366
    %368 = vmatprep.mubr.f32.mxu0 0.0
    %369 = vmatmul.mubr.f32.gmra.mxu0 %v263
    %v370 = vpop.f32.mrf.mxu0
    %v371 = vadd.f32 %v236, %v370
    %v372 = vpop.f32.mrf.mxu0
    %v373 = vadd.f32 %v240, %v372
    %374 = vmatprep.mubr.f32.mxu0 0.0
    %375 = vmatmul.mubr.f32.gmra.mxu0 %v266
    %v376 = vpop.f32.mrf.mxu0
    %v377 = vadd.f32 %v236, %v376
    %v378 = vpop.f32.mrf.mxu0
    %v379 = vadd.f32 %v240, %v378
    %380 = vdwg.mxu0
    %381 = vst [vmem:[#allocation2] sm:$0xff] %v335
    %382 = vst [vmem:[#allocation2 + $0x8] sm:$0xff] %v337
    %383 = vst [vmem:[#allocation2 + $0x10] sm:$0xff] %v341
    %384 = vst [vmem:[#allocation2 + $0x18] sm:$0xff] %v343
    %385 = vst [vmem:[#allocation2 + $0x20] sm:$0xff] %v347
    %386 = vst [vmem:[#allocation2 + $0x28] sm:$0xff] %v349
    %387 = vst [vmem:[#allocation2 + $0x30] sm:$0xff] %v353
    %388 = vst [vmem:[#allocation2 + $0x38] sm:$0xff] %v355
    %389 = vst [vmem:[#allocation2 + $0x40] sm:$0xff] %v359
    %390 = vst [vmem:[#allocation2 + $0x48] sm:$0xff] %v361
    %391 = vst [vmem:[#allocation2 + $0x50] sm:$0xff] %v365
    %392 = vst [vmem:[#allocation2 + $0x58] sm:$0xff] %v367
    %393 = vst [vmem:[#allocation2 + $0x60] sm:$0xff] %v371
    %394 = vst [vmem:[#allocation2 + $0x68] sm:$0xff] %v373
    %395 = vst [vmem:[#allocation2 + $0x70] sm:$0xff] %v377
    %396 = vst [vmem:[#allocation2 + $0x78] sm:$0xff] %v379
    %v397 = vld [vmem:[%s1] sm:$0xff]
    %398 = vset.pattern.permute.xlu0 0
    %399 = vperm.xlu0 %398, %v397
    %v400 = vpop.permute.xlu0 %399
    %vm401 = vcmp.eq.s32.totalorder %v29, %v400
    %v402 = vsel %vm401, 1, 0
    %v403 = vcvt.s32.f32 %v402
    %v404 = vadd.f32 %v403, 0.0
    %405 = vset.pattern.permute.xlu0 1
    %406 = vperm.xlu0 %405, %v397
    %v407 = vpop.permute.xlu0 %406
    %vm408 = vcmp.eq.s32.totalorder %v29, %v407
    %v409 = vsel %vm408, 1, 0
    %v410 = vcvt.s32.f32 %v409
    %v411 = vadd.f32 %v410, 0.0
    %v412 = vadd.s32 %v397, 11
    %413 = vset.pattern.permute.xlu0 2
    %414 = vperm.xlu0 %413, %v412
    %v415 = vpop.permute.xlu0 %414
    %vm416 = vcmp.eq.s32.totalorder %v29, %v415
    %v417 = vsel %vm416, 1, 0
    %v418 = vcvt.s32.f32 %v417
    %v419 = vadd.f32 %v404, %v418
    %420 = vset.pattern.permute.xlu0 3
    %421 = vperm.xlu0 %420, %v412
    %v422 = vpop.permute.xlu0 %421
    %vm423 = vcmp.eq.s32.totalorder %v29, %v422
    %v424 = vsel %vm423, 1, 0
    %v425 = vcvt.s32.f32 %v424
    %v426 = vadd.f32 %v411, %v425
    %v427 = vadd.s32 %v397, 22
    %428 = vset.pattern.permute.xlu0 4
    %429 = vperm.xlu0 %428, %v427
    %v430 = vpop.permute.xlu0 %429
    %vm431 = vcmp.eq.s32.totalorder %v29, %v430
    %v432 = vsel %vm431, 1, 0
    %v433 = vcvt.s32.f32 %v432
    %v434 = vadd.f32 %v419, %v433
    %435 = vset.pattern.permute.xlu0 5
    %436 = vperm.xlu0 %435, %v427
    %v437 = vpop.permute.xlu0 %436
    %vm438 = vcmp.eq.s32.totalorder %v29, %v437
    %v439 = vsel %vm438, 1, 0
    %v440 = vcvt.s32.f32 %v439
    %v441 = vadd.f32 %v426, %v440
    %v442 = vld [vmem:[#allocation4 + $0x1c0] sm:$0xff]
    %v443 = vld [vmem:[#allocation4 + $0x1d0] sm:$0xff]
    %v444 = vld [vmem:[#allocation4 + $0x1e0] sm:$0xff]
    %v445 = vld [vmem:[#allocation4 + $0x1f0] sm:$0xff]
    %v446 = vld [vmem:[#allocation4 + $0x200] sm:$0xff]
    %v447 = vld [vmem:[#allocation4 + $0x210] sm:$0xff]
    %v448 = vld [vmem:[#allocation4 + $0x220] sm:$0xff]
    %v449 = vld [vmem:[#allocation4 + $0x230] sm:$0xff]
    %v451 = vsel %vm243, %v434, 0
    %453 = vmatprep.subr.mxu0 0.0
    %454 = vmatpush1.msra.mxu0 0.0
    %455 = vmatprep.subr.mxu0 0.0
    %456 = vmatpush1.msra.mxu0 0.0
    %457 = vmatprep.subr.mxu0 0.0
    %458 = vmatpush1.msra.mxu0 0.0
    %459 = vmatprep.subr.mxu0 0.0
    %460 = vmatpush1.msra.mxu0 0.0
    %461 = vmatprep.subr.mxu0 0.0
    %462 = vmatpush1.msra.mxu0 0.0
    %463 = vmatprep.subr.mxu0 0.0
    %464 = vmatpush1.msra.mxu0 0.0
    %465 = vmatprep.subr.mxu0 0.0
    %466 = vmatpush1.msra.mxu0 0.0
    %467 = vmatprep.subr.mxu0 0.0
    %468 = vmatpush1.msra.mxu0 0.0
    %469 = vmatprep.subr.mxu0 0.0
    %470 = vmatpush1.msra.mxu0 %v449
    %471 = vmatprep.subr.mxu0 0.0
    %472 = vmatpush1.msra.mxu0 %v448
    %473 = vmatprep.subr.mxu0 0.0
    %474 = vmatpush1.msra.mxu0 %v447
    %475 = vmatprep.subr.mxu0 0.0
    %476 = vmatpush1.msra.mxu0 %v446
    %477 = vmatprep.subr.mxu0 0.0
    %478 = vmatpush1.msra.mxu0 %v445
    %479 = vmatprep.subr.mxu0 0.0
    %480 = vmatpush1.msra.mxu0 %v444
    %481 = vmatprep.subr.mxu0 0.0
    %482 = vmatpush1.msra.mxu0 %v443
    %483 = vmatprep.subr.mxu0 0.0
    %484 = vmatpush1.msra.mxu0 %v442
    %485 = vmatprep.subr.mxu0 0.0
    %486 = vmatpush2.msra.mxu0 0.0
    %487 = vmatprep.subr.mxu0 0.0
    %488 = vmatpush2.msra.mxu0 0.0
    %489 = vmatprep.subr.mxu0 0.0
    %490 = vmatpush2.msra.mxu0 0.0
    %491 = vmatprep.subr.mxu0 0.0
    %492 = vmatpush2.msra.mxu0 0.0
    %493 = vmatprep.subr.mxu0 0.0
    %494 = vmatpush2.msra.mxu0 0.0
    %495 = vmatprep.subr.mxu0 0.0
    %496 = vmatpush2.msra.mxu0 0.0
    %497 = vmatprep.subr.mxu0 0.0
    %498 = vmatpush2.msra.mxu0 0.0
    %499 = vmatprep.subr.mxu0 0.0
    %500 = vmatpush2.msra.mxu0 0.0
    %501 = vmatprep.subr.mxu0 0.0
    %502 = vmatpush2.msra.mxu0 0.0
    %503 = vmatprep.subr.mxu0 0.0
    %504 = vmatpush2.msra.mxu0 0.0
    %505 = vmatprep.subr.mxu0 0.0
    %506 = vmatpush2.msra.mxu0 0.0
    %507 = vmatprep.subr.mxu0 0.0
    %508 = vmatpush2.msra.mxu0 0.0
    %509 = vmatprep.subr.mxu0 0.0
    %510 = vmatpush2.msra.mxu0 0.0
    %511 = vmatprep.subr.mxu0 0.0
    %512 = vmatpush2.msra.mxu0 0.0
    %513 = vmatprep.subr.mxu0 0.0
    %514 = vmatpush2.msra.mxu0 0.0
    %515 = vmatprep.subr.mxu0 0.0
    %516 = vmatpush2.msra.mxu0 0.0
    %517 = vmatprep.mubr.f32.mxu0 0.0
    %518 = vmatmul.mubr.f32.gmra.mxu0 %v451
    %v519 = vpop.f32.mrf.mxu0
    %v520 = vadd.f32 0.0, %v519
    %v521 = vpop.f32.mrf.mxu0
    %522 = vdwg.mxu0
    %v523 = vld [vmem:[#allocation4 + $0x240] sm:$0xff]
    %v524 = vld [vmem:[#allocation4 + $0x250] sm:$0xff]
    %v525 = vld [vmem:[#allocation4 + $0x260] sm:$0xff]
    %v526 = vld [vmem:[#allocation4 + $0x270] sm:$0xff]
    %v527 = vld [vmem:[#allocation4 + $0x280] sm:$0xff]
    %v528 = vld [vmem:[#allocation4 + $0x290] sm:$0xff]
    %v529 = vld [vmem:[#allocation4 + $0x2a0] sm:$0xff]
    %v530 = vld [vmem:[#allocation4 + $0x2b0] sm:$0xff]
    %v532 = vsel %vm243, %v441, 0
    %534 = vmatprep.subr.mxu0 0.0
    %535 = vmatpush1.msra.mxu0 0.0
    %536 = vmatprep.subr.mxu0 0.0
    %537 = vmatpush1.msra.mxu0 0.0
    %538 = vmatprep.subr.mxu0 0.0
    %539 = vmatpush1.msra.mxu0 0.0
    %540 = vmatprep.subr.mxu0 0.0
    %541 = vmatpush1.msra.mxu0 0.0
    %542 = vmatprep.subr.mxu0 0.0
    %543 = vmatpush1.msra.mxu0 0.0
    %544 = vmatprep.subr.mxu0 0.0
    %545 = vmatpush1.msra.mxu0 0.0
    %546 = vmatprep.subr.mxu0 0.0
    %547 = vmatpush1.msra.mxu0 0.0
    %548 = vmatprep.subr.mxu0 0.0
    %549 = vmatpush1.msra.mxu0 0.0
    %550 = vmatprep.subr.mxu0 0.0
    %551 = vmatpush1.msra.mxu0 %v530
    %552 = vmatprep.subr.mxu0 0.0
    %553 = vmatpush1.msra.mxu0 %v529
    %554 = vmatprep.subr.mxu0 0.0
    %555 = vmatpush1.msra.mxu0 %v528
    %556 = vmatprep.subr.mxu0 0.0
    %557 = vmatpush1.msra.mxu0 %v527
    %558 = vmatprep.subr.mxu0 0.0
    %559 = vmatpush1.msra.mxu0 %v526
    %560 = vmatprep.subr.mxu0 0.0
    %561 = vmatpush1.msra.mxu0 %v525
    %562 = vmatprep.subr.mxu0 0.0
    %563 = vmatpush1.msra.mxu0 %v524
    %564 = vmatprep.subr.mxu0 0.0
    %565 = vmatpush1.msra.mxu0 %v523
    %566 = vmatprep.subr.mxu0 0.0
    %567 = vmatpush2.msra.mxu0 0.0
    %568 = vmatprep.subr.mxu0 0.0
    %569 = vmatpush2.msra.mxu0 0.0
    %570 = vmatprep.subr.mxu0 0.0
    %571 = vmatpush2.msra.mxu0 0.0
    %572 = vmatprep.subr.mxu0 0.0
    %573 = vmatpush2.msra.mxu0 0.0
    %574 = vmatprep.subr.mxu0 0.0
    %575 = vmatpush2.msra.mxu0 0.0
    %576 = vmatprep.subr.mxu0 0.0
    %577 = vmatpush2.msra.mxu0 0.0
    %578 = vmatprep.subr.mxu0 0.0
    %579 = vmatpush2.msra.mxu0 0.0
    %580 = vmatprep.subr.mxu0 0.0
    %581 = vmatpush2.msra.mxu0 0.0
    %582 = vmatprep.subr.mxu0 0.0
    %583 = vmatpush2.msra.mxu0 0.0
    %584 = vmatprep.subr.mxu0 0.0
    %585 = vmatpush2.msra.mxu0 0.0
    %586 = vmatprep.subr.mxu0 0.0
    %587 = vmatpush2.msra.mxu0 0.0
    %588 = vmatprep.subr.mxu0 0.0
    %589 = vmatpush2.msra.mxu0 0.0
    %590 = vmatprep.subr.mxu0 0.0
    %591 = vmatpush2.msra.mxu0 0.0
    %592 = vmatprep.subr.mxu0 0.0
    %593 = vmatpush2.msra.mxu0 0.0
    %594 = vmatprep.subr.mxu0 0.0
    %595 = vmatpush2.msra.mxu0 0.0
    %596 = vmatprep.subr.mxu0 0.0
    %597 = vmatpush2.msra.mxu0 0.0
    %598 = vmatprep.mubr.f32.mxu0 0.0
    %599 = vmatmul.mubr.f32.gmra.mxu0 %v532
    %v600 = vpop.f32.mrf.mxu0
    %v601 = vadd.f32 0.0, %v600
    %v602 = vpop.f32.mrf.mxu0
    %603 = vdwg.mxu0
    %v604 = vmul.f32 %v520, %v601
    %v605 = vtanh.pop %v604
    %v606 = vld [vmem:[#allocation4 + $0x2c0] sm:$0xff]
    %v607 = vld [vmem:[#allocation4 + $0x2d0] sm:$0xff]
    %v608 = vld [vmem:[#allocation4 + $0x2e0] sm:$0xff]
    %v609 = vld [vmem:[#allocation4 + $0x2f0] sm:$0xff]
    %v610 = vld [vmem:[#allocation4 + $0x300] sm:$0xff]
    %v611 = vld [vmem:[#allocation4 + $0x310] sm:$0xff]
    %v612 = vld [vmem:[#allocation4 + $0x120] ss:$0 sm:$0xff]
    %vm613 = vcmask 392192
    %v615 = vsel %vm613, %v605, 0
    %617 = vmatprep.subr.mxu0 0.0
    %618 = vmatpush1.msra.mxu0 0.0
    %619 = vmatprep.subr.mxu0 0.0
    %620 = vmatpush1.msra.mxu0 0.0
    %621 = vmatprep.subr.mxu0 0.0
    %622 = vmatpush1.msra.mxu0 0.0
    %623 = vmatprep.subr.mxu0 0.0
    %624 = vmatpush1.msra.mxu0 0.0
    %625 = vmatprep.subr.mxu0 0.0
    %626 = vmatpush1.msra.mxu0 0.0
    %627 = vmatprep.subr.mxu0 0.0
    %628 = vmatpush1.msra.mxu0 0.0
    %629 = vmatprep.subr.mxu0 0.0
    %630 = vmatpush1.msra.mxu0 0.0
    %631 = vmatprep.subr.mxu0 0.0
    %632 = vmatpush1.msra.mxu0 0.0
    %633 = vmatprep.subr.mxu0 0.0
    %634 = vmatpush1.msra.mxu0 0.0
    %635 = vmatprep.subr.mxu0 0.0
    %636 = vmatpush1.msra.mxu0 0.0
    %637 = vmatprep.subr.mxu0 0.0
    %638 = vmatpush1.msra.mxu0 %v611
    %639 = vmatprep.subr.mxu0 0.0
    %640 = vmatpush1.msra.mxu0 %v610
    %641 = vmatprep.subr.mxu0 0.0
    %642 = vmatpush1.msra.mxu0 %v609
    %643 = vmatprep.subr.mxu0 0.0
    %644 = vmatpush1.msra.mxu0 %v608
    %645 = vmatprep.subr.mxu0 0.0
    %646 = vmatpush1.msra.mxu0 %v607
    %647 = vmatprep.subr.mxu0 0.0
    %648 = vmatpush1.msra.mxu0 %v606
    %649 = vmatprep.subr.mxu0 0.0
    %650 = vmatpush2.msra.mxu0 0.0
    %651 = vmatprep.subr.mxu0 0.0
    %652 = vmatpush2.msra.mxu0 0.0
    %653 = vmatprep.subr.mxu0 0.0
    %654 = vmatpush2.msra.mxu0 0.0
    %655 = vmatprep.subr.mxu0 0.0
    %656 = vmatpush2.msra.mxu0 0.0
    %657 = vmatprep.subr.mxu0 0.0
    %658 = vmatpush2.msra.mxu0 0.0
    %659 = vmatprep.subr.mxu0 0.0
    %660 = vmatpush2.msra.mxu0 0.0
    %661 = vmatprep.subr.mxu0 0.0
    %662 = vmatpush2.msra.mxu0 0.0
    %663 = vmatprep.subr.mxu0 0.0
    %664 = vmatpush2.msra.mxu0 0.0
    %665 = vmatprep.subr.mxu0 0.0
    %666 = vmatpush2.msra.mxu0 0.0
    %667 = vmatprep.subr.mxu0 0.0
    %668 = vmatpush2.msra.mxu0 0.0
    %669 = vmatprep.subr.mxu0 0.0
    %670 = vmatpush2.msra.mxu0 0.0
    %671 = vmatprep.subr.mxu0 0.0
    %672 = vmatpush2.msra.mxu0 0.0
    %673 = vmatprep.subr.mxu0 0.0
    %674 = vmatpush2.msra.mxu0 0.0
    %675 = vmatprep.subr.mxu0 0.0
    %676 = vmatpush2.msra.mxu0 0.0
    %677 = vmatprep.subr.mxu0 0.0
    %678 = vmatpush2.msra.mxu0 0.0
    %679 = vmatprep.subr.mxu0 0.0
    %680 = vmatpush2.msra.mxu0 0.0
    %681 = vmatprep.mubr.f32.mxu0 0.0
    %682 = vmatmul.mubr.f32.gmra.mxu0 %v615
    %v683 = vpop.f32.mrf.mxu0
    %v684 = vadd.f32 %v612, %v683
    %v685 = vpop.f32.mrf.mxu0
    %686 = vdwg.mxu0
    %v687 = vld [vmem:[#allocation4 + $0x80] sm:$0xff]
    %v688 = vld [vmem:[#allocation4 + $0x88] sm:$0xff]
    %v689 = vld [vmem:[#allocation4 + $0x90] sm:$0xff]
    %v690 = vld [vmem:[#allocation4 + $0x98] sm:$0xff]
    %v691 = vld [vmem:[#allocation4 + $0xa0] sm:$0xff]
    %v692 = vld [vmem:[#allocation4 + $0xa8] sm:$0xff]
    %v693 = vld [vmem:[#allocation4 + $0xb0] sm:$0xff]
    %v694 = vld [vmem:[#allocation4 + $0xb8] sm:$0xff]
    %v695 = vld [vmem:[#allocation4 + $0xc0] sm:$0xff]
    %v696 = vld [vmem:[#allocation4 + $0xc8] sm:$0xff]
    %v697 = vld [vmem:[#allocation4 + $0xd0] sm:$0xff]
    %v698 = vld [vmem:[#allocation4 + $0xd8] sm:$0xff]
    %v699 = vld [vmem:[#allocation4 + $0xe0] sm:$0xff]
    %v700 = vld [vmem:[#allocation4 + $0xe8] sm:$0xff]
    %v701 = vld [vmem:[#allocation4 + $0xf0] sm:$0xff]
    %v702 = vld [vmem:[#allocation4 + $0xf8] sm:$0xff]
    %s703 = scalar_lea.vmem [#allocation4], 272
    %v704 = vld [vmem:[%s703] ss:$8 sm:$0x3]
    %v706 = vlaneseq
    %v707 = vshrl.u32 %v706, 7
    %v708 = vsub.s32 0, %v707
    %v709 = vrot.slane %v704, %v708
    %v710 = vlaneseq
    %v711 = vshrl.u32 %v710, 7
    %v712 = vsub.s32 1, %v711
    %v713 = vrot.slane %v704, %v712
    %v717 = vsel %vm243, 0.0, 0
    %719 = vmatprep.subr.mxu0 0.0
    %720 = vmatpush1.msra.mxu0 0.0
    %721 = vmatprep.subr.mxu0 0.0
    %722 = vmatpush1.msra.mxu0 0.0
    %723 = vmatprep.subr.mxu0 0.0
    %724 = vmatpush1.msra.mxu0 0.0
    %725 = vmatprep.subr.mxu0 0.0
    %726 = vmatpush1.msra.mxu0 0.0
    %727 = vmatprep.subr.mxu0 0.0
    %728 = vmatpush1.msra.mxu0 0.0
    %729 = vmatprep.subr.mxu0 0.0
    %730 = vmatpush1.msra.mxu0 0.0
    %731 = vmatprep.subr.mxu0 0.0
    %732 = vmatpush1.msra.mxu0 0.0
    %733 = vmatprep.subr.mxu0 0.0
    %734 = vmatpush1.msra.mxu0 0.0
    %735 = vmatprep.subr.mxu0 %v702
    %736 = vmatpush1.msra.mxu0 %v701
    %737 = vmatprep.subr.mxu0 %v700
    %738 = vmatpush1.msra.mxu0 %v699
    %739 = vmatprep.subr.mxu0 %v698
    %740 = vmatpush1.msra.mxu0 %v697
    %741 = vmatprep.subr.mxu0 %v696
    %742 = vmatpush1.msra.mxu0 %v695
    %743 = vmatprep.subr.mxu0 %v694
    %744 = vmatpush1.msra.mxu0 %v693
    %745 = vmatprep.subr.mxu0 %v692
    %746 = vmatpush1.msra.mxu0 %v691
    %747 = vmatprep.subr.mxu0 %v690
    %748 = vmatpush1.msra.mxu0 %v689
    %749 = vmatprep.subr.mxu0 %v688
    %750 = vmatpush1.msra.mxu0 %v687
    %751 = vmatprep.subr.mxu0 0.0
    %752 = vmatpush2.msra.mxu0 0.0
    %753 = vmatprep.subr.mxu0 0.0
    %754 = vmatpush2.msra.mxu0 0.0
    %755 = vmatprep.subr.mxu0 0.0
    %756 = vmatpush2.msra.mxu0 0.0
    %757 = vmatprep.subr.mxu0 0.0
    %758 = vmatpush2.msra.mxu0 0.0
    %759 = vmatprep.subr.mxu0 0.0
    %760 = vmatpush2.msra.mxu0 0.0
    %761 = vmatprep.subr.mxu0 0.0
    %762 = vmatpush2.msra.mxu0 0.0
    %763 = vmatprep.subr.mxu0 0.0
    %764 = vmatpush2.msra.mxu0 0.0
    %765 = vmatprep.subr.mxu0 0.0
    %766 = vmatpush2.msra.mxu0 0.0
    %767 = vmatprep.subr.mxu0 0.0
    %768 = vmatpush2.msra.mxu0 0.0
    %769 = vmatprep.subr.mxu0 0.0
    %770 = vmatpush2.msra.mxu0 0.0
    %771 = vmatprep.subr.mxu0 0.0
    %772 = vmatpush2.msra.mxu0 0.0
    %773 = vmatprep.subr.mxu0 0.0
    %774 = vmatpush2.msra.mxu0 0.0
    %775 = vmatprep.subr.mxu0 0.0
    %776 = vmatpush2.msra.mxu0 0.0
    %777 = vmatprep.subr.mxu0 0.0
    %778 = vmatpush2.msra.mxu0 0.0
    %779 = vmatprep.subr.mxu0 0.0
    %780 = vmatpush2.msra.mxu0 0.0
    %781 = vmatprep.subr.mxu0 0.0
    %782 = vmatpush2.msra.mxu0 0.0
    %783 = vmatprep.mubr.f32.mxu0 0.0
    %784 = vmatmul.mubr.f32.gmra.mxu0 %v717
    %v785 = vpop.f32.mrf.mxu0
    %v786 = vadd.f32 %v709, %v785
    %v787 = vpop.f32.mrf.mxu0
    %v788 = vadd.f32 %v713, %v787
    %789 = vdwg.mxu0
    %v790 = vld [vmem:[#allocation2] sm:$0xff]
    %v791 = vld [vmem:[#allocation2 + $0x78] sm:$0xff]
    %v792 = vadd.f32 %v790, %v786
    %v793 = vxor.u32 %v792, 2147483648
    %v794 = vmul.f32 %v793, 1.442695
    %v795 = vpow.pop %v794
    %v796 = vadd.f32 %v795, 1.0
    %v797 = vrcp.pop %v796
    %v798 = vmul.f32 1.0, %v797
    %800 = vrot.lane.b32.xlu0 %v786, 64
    %v801 = vpop.permute.xlu0 %800
    %v803 = vmul.f32 %v798, %v801
    %805 = vrot.lane.b32.xlu0 %v803, 64
    %v806 = vpop.permute.xlu0 %805
    %v808 = vadd.f32 %v790, %v806
    %v809 = vtanh.pop %v808
    %v810 = vsub.f32 1.0, %v798
    %812 = vrot.lane.b32.xlu0 %v809, 96
    %v813 = vpop.permute.xlu0 %812
    %v815 = vmul.f32 %v810, %v813
    %v816 = vmul.f32 %v798, 0.0
    %v817 = vadd.f32 %v815, %v816
    %v818 = vadd.f32 %v791, %v788
    %v819 = vxor.u32 %v818, 2147483648
    %v820 = vmul.f32 %v819, 1.442695
    %v821 = vpow.pop %v820
    %v822 = vadd.f32 %v821, 1.0
    %v823 = vrcp.pop %v822
    %v824 = vmul.f32 1.0, %v823
    %826 = vrot.lane.b32.xlu0 %v788, 64
    %v827 = vpop.permute.xlu0 %826
    %v829 = vmul.f32 %v824, %v827
    %831 = vrot.lane.b32.xlu0 %v829, 64
    %v832 = vpop.permute.xlu0 %831
    %v834 = vadd.f32 %v791, %v832
    %v835 = vtanh.pop %v834
    %v836 = vsub.f32 1.0, %v824
    %838 = vrot.lane.b32.xlu0 %v835, 96
    %v839 = vpop.permute.xlu0 %838
    %v841 = vmul.f32 %v836, %v839
    %v842 = vmul.f32 %v824, 0.0
    %v843 = vadd.f32 %v841, %v842
    %845 = vrot.lane.b32.xlu0 %v817, 96
    %v846 = vpop.permute.xlu0 %845
    %vm848 = vcmask 261120
    %849 = vst.msk [vmem:[#allocation3] sm:$0xff] %vm848, %v846
    %vm850 = vcmask 523520
    %851 = vst.msk [vmem:[#allocation3 + $0x38] sm:$0xff] %vm850, %v843
    %v852 = vsel %vm848, %v846, %v843
    %v853 = vld [vmem:[#allocation4 + $0x80] sm:$0xff]
    %v854 = vld [vmem:[#allocation4 + $0x88] sm:$0xff]
    %v855 = vld [vmem:[#allocation4 + $0x90] sm:$0xff]
    %v856 = vld [vmem:[#allocation4 + $0x98] sm:$0xff]
    %v857 = vld [vmem:[#allocation4 + $0xa0] sm:$0xff]
    %v858 = vld [vmem:[#allocation4 + $0xa8] sm:$0xff]
    %v859 = vld [vmem:[#allocation4 + $0xb0] sm:$0xff]
    %v860 = vld [vmem:[#allocation4 + $0xb8] sm:$0xff]
    %v861 = vld [vmem:[#allocation4 + $0xc0] sm:$0xff]
    %v862 = vld [vmem:[#allocation4 + $0xc8] sm:$0xff]
    %v863 = vld [vmem:[#allocation4 + $0xd0] sm:$0xff]
    %v864 = vld [vmem:[#allocation4 + $0xd8] sm:$0xff]
    %v865 = vld [vmem:[#allocation4 + $0xe0] sm:$0xff]
    %v866 = vld [vmem:[#allocation4 + $0xe8] sm:$0xff]
    %v867 = vld [vmem:[#allocation4 + $0xf0] sm:$0xff]
    %v868 = vld [vmem:[#allocation4 + $0xf8] sm:$0xff]
    %v869 = vld [vmem:[%s703] ss:$8 sm:$0x3]
    %v871 = vlaneseq
    %v872 = vshrl.u32 %v871, 7
    %v873 = vsub.s32 0, %v872
    %v874 = vrot.slane %v869, %v873
    %v875 = vlaneseq
    %v876 = vshrl.u32 %v875, 7
    %v877 = vsub.s32 1, %v876
    %v878 = vrot.slane %v869, %v877
    %v882 = vsel %vm243, %v852, 0
    %884 = vmatprep.subr.mxu0 0.0
    %885 = vmatpush1.msra.mxu0 0.0
    %886 = vmatprep.subr.mxu0 0.0
    %887 = vmatpush1.msra.mxu0 0.0
    %888 = vmatprep.subr.mxu0 0.0
    %889 = vmatpush1.msra.mxu0 0.0
    %890 = vmatprep.subr.mxu0 0.0
    %891 = vmatpush1.msra.mxu0 0.0
    %892 = vmatprep.subr.mxu0 0.0
    %893 = vmatpush1.msra.mxu0 0.0
    %894 = vmatprep.subr.mxu0 0.0
    %895 = vmatpush1.msra.mxu0 0.0
    %896 = vmatprep.subr.mxu0 0.0
    %897 = vmatpush1.msra.mxu0 0.0
    %898 = vmatprep.subr.mxu0 0.0
    %899 = vmatpush1.msra.mxu0 0.0
    %900 = vmatprep.subr.mxu0 %v868
    %901 = vmatpush1.msra.mxu0 %v867
    %902 = vmatprep.subr.mxu0 %v866
    %903 = vmatpush1.msra.mxu0 %v865
    %904 = vmatprep.subr.mxu0 %v864
    %905 = vmatpush1.msra.mxu0 %v863
    %906 = vmatprep.subr.mxu0 %v862
    %907 = vmatpush1.msra.mxu0 %v861
    %908 = vmatprep.subr.mxu0 %v860
    %909 = vmatpush1.msra.mxu0 %v859
    %910 = vmatprep.subr.mxu0 %v858
    %911 = vmatpush1.msra.mxu0 %v857
    %912 = vmatprep.subr.mxu0 %v856
    %913 = vmatpush1.msra.mxu0 %v855
    %914 = vmatprep.subr.mxu0 %v854
    %915 = vmatpush1.msra.mxu0 %v853
    %916 = vmatprep.subr.mxu0 0.0
    %917 = vmatpush2.msra.mxu0 0.0
    %918 = vmatprep.subr.mxu0 0.0
    %919 = vmatpush2.msra.mxu0 0.0
    %920 = vmatprep.subr.mxu0 0.0
    %921 = vmatpush2.msra.mxu0 0.0
    %922 = vmatprep.subr.mxu0 0.0
    %923 = vmatpush2.msra.mxu0 0.0
    %924 = vmatprep.subr.mxu0 0.0
    %925 = vmatpush2.msra.mxu0 0.0
    %926 = vmatprep.subr.mxu0 0.0
    %927 = vmatpush2.msra.mxu0 0.0
    %928 = vmatprep.subr.mxu0 0.0
    %929 = vmatpush2.msra.mxu0 0.0
    %930 = vmatprep.subr.mxu0 0.0
    %931 = vmatpush2.msra.mxu0 0.0
    %932 = vmatprep.subr.mxu0 0.0
    %933 = vmatpush2.msra.mxu0 0.0
    %934 = vmatprep.subr.mxu0 0.0
    %935 = vmatpush2.msra.mxu0 0.0
    %936 = vmatprep.subr.mxu0 0.0
    %937 = vmatpush2.msra.mxu0 0.0
    %938 = vmatprep.subr.mxu0 0.0
    %939 = vmatpush2.msra.mxu0 0.0
    %940 = vmatprep.subr.mxu0 0.0
    %941 = vmatpush2.msra.mxu0 0.0
    %942 = vmatprep.subr.mxu0 0.0
    %943 = vmatpush2.msra.mxu0 0.0
    %944 = vmatprep.subr.mxu0 0.0
    %945 = vmatpush2.msra.mxu0 0.0
    %946 = vmatprep.subr.mxu0 0.0
    %947 = vmatpush2.msra.mxu0 0.0
    %948 = vmatprep.mubr.f32.mxu0 0.0
    %949 = vmatmul.mubr.f32.gmra.mxu0 %v882
    %v950 = vpop.f32.mrf.mxu0
    %v951 = vadd.f32 %v874, %v950
    %v952 = vpop.f32.mrf.mxu0
    %v953 = vadd.f32 %v878, %v952
    %954 = vdwg.mxu0
    %v955 = vld [vmem:[#allocation2 + $0x10] sm:$0xff]
    %v956 = vld [vmem:[#allocation2 + $0x68] sm:$0xff]
    %v957 = vadd.f32 %v955, %v951
    %v958 = vxor.u32 %v957, 2147483648
    %v959 = vmul.f32 %v958, 1.442695
    %v960 = vpow.pop %v959
    %v961 = vadd.f32 %v960, 1.0
    %v962 = vrcp.pop %v961
    %v963 = vmul.f32 1.0, %v962
    %965 = vrot.lane.b32.xlu0 %v951, 64
    %v966 = vpop.permute.xlu0 %965
    %v968 = vmul.f32 %v963, %v966
    %970 = vrot.lane.b32.xlu0 %v968, 64
    %v971 = vpop.permute.xlu0 %970
    %v973 = vadd.f32 %v955, %v971
    %v974 = vtanh.pop %v973
    %v975 = vsub.f32 1.0, %v963
    %977 = vrot.lane.b32.xlu0 %v974, 96
    %v978 = vpop.permute.xlu0 %977
    %v980 = vmul.f32 %v975, %v978
    %981 = vrot.lane.b32.xlu0 %v852, 32
    %v982 = vpop.permute.xlu0 %981
    %v984 = vmul.f32 %v963, %v982
    %v985 = vadd.f32 %v980, %v984
    %v986 = vadd.f32 %v956, %v953
    %v987 = vxor.u32 %v986, 2147483648
    %v988 = vmul.f32 %v987, 1.442695
    %v989 = vpow.pop %v988
    %v990 = vadd.f32 %v989, 1.0
    %v991 = vrcp.pop %v990
    %v992 = vmul.f32 1.0, %v991
    %994 = vrot.lane.b32.xlu0 %v953, 64
    %v995 = vpop.permute.xlu0 %994
    %v997 = vmul.f32 %v992, %v995
    %999 = vrot.lane.b32.xlu0 %v997, 64
    %v1000 = vpop.permute.xlu0 %999
    %v1002 = vadd.f32 %v956, %v1000
    %v1003 = vtanh.pop %v1002
    %v1004 = vsub.f32 1.0, %v992
    %1006 = vrot.lane.b32.xlu0 %v1003, 96
    %v1007 = vpop.permute.xlu0 %1006
    %v1009 = vmul.f32 %v1004, %v1007
    %v1010 = vmul.f32 %v992, %v852
    %v1011 = vadd.f32 %v1009, %v1010
    %1013 = vrot.lane.b32.xlu0 %v985, 96
    %v1014 = vpop.permute.xlu0 %1013
    %1016 = vst.msk [vmem:[#allocation3 + $0x8] sm:$0xff] %vm848, %v1014
    %1017 = vst.msk [vmem:[#allocation3 + $0x30] sm:$0xff] %vm850, %v1011
    %v1018 = vsel %vm848, %v1014, %v1011
    %v1019 = vld [vmem:[#allocation4 + $0x80] sm:$0xff]
    %v1020 = vld [vmem:[#allocation4 + $0x88] sm:$0xff]
    %v1021 = vld [vmem:[#allocation4 + $0x90] sm:$0xff]
    %v1022 = vld [vmem:[#allocation4 + $0x98] sm:$0xff]
    %v1023 = vld [vmem:[#allocation4 + $0xa0] sm:$0xff]
    %v1024 = vld [vmem:[#allocation4 + $0xa8] sm:$0xff]
    %v1025 = vld [vmem:[#allocation4 + $0xb0] sm:$0xff]
    %v1026 = vld [vmem:[#allocation4 + $0xb8] sm:$0xff]
    %v1027 = vld [vmem:[#allocation4 + $0xc0] sm:$0xff]
    %v1028 = vld [vmem:[#allocation4 + $0xc8] sm:$0xff]
    %v1029 = vld [vmem:[#allocation4 + $0xd0] sm:$0xff]
    %v1030 = vld [vmem:[#allocation4 + $0xd8] sm:$0xff]
    %v1031 = vld [vmem:[#allocation4 + $0xe0] sm:$0xff]
    %v1032 = vld [vmem:[#allocation4 + $0xe8] sm:$0xff]
    %v1033 = vld [vmem:[#allocation4 + $0xf0] sm:$0xff]
    %v1034 = vld [vmem:[#allocation4 + $0xf8] sm:$0xff]
    %v1035 = vld [vmem:[%s703] ss:$8 sm:$0x3]
    %v1037 = vlaneseq
    %v1038 = vshrl.u32 %v1037, 7
    %v1039 = vsub.s32 0, %v1038
    %v1040 = vrot.slane %v1035, %v1039
    %v1041 = vlaneseq
    %v1042 = vshrl.u32 %v1041, 7
    %v1043 = vsub.s32 1, %v1042
    %v1044 = vrot.slane %v1035, %v1043
    %v1048 = vsel %vm243, %v1018, 0
    %1050 = vmatprep.subr.mxu0 0.0
    %1051 = vmatpush1.msra.mxu0 0.0
    %1052 = vmatprep.subr.mxu0 0.0
    %1053 = vmatpush1.msra.mxu0 0.0
    %1054 = vmatprep.subr.mxu0 0.0
    %1055 = vmatpush1.msra.mxu0 0.0
    %1056 = vmatprep.subr.mxu0 0.0
    %1057 = vmatpush1.msra.mxu0 0.0
    %1058 = vmatprep.subr.mxu0 0.0
    %1059 = vmatpush1.msra.mxu0 0.0
    %1060 = vmatprep.subr.mxu0 0.0
    %1061 = vmatpush1.msra.mxu0 0.0
    %1062 = vmatprep.subr.mxu0 0.0
    %1063 = vmatpush1.msra.mxu0 0.0
    %1064 = vmatprep.subr.mxu0 0.0
    %1065 = vmatpush1.msra.mxu0 0.0
    %1066 = vmatprep.subr.mxu0 %v1034
    %1067 = vmatpush1.msra.mxu0 %v1033
    %1068 = vmatprep.subr.mxu0 %v1032
    %1069 = vmatpush1.msra.mxu0 %v1031
    %1070 = vmatprep.subr.mxu0 %v1030
    %1071 = vmatpush1.msra.mxu0 %v1029
    %1072 = vmatprep.subr.mxu0 %v1028
    %1073 = vmatpush1.msra.mxu0 %v1027
    %1074 = vmatprep.subr.mxu0 %v1026
    %1075 = vmatpush1.msra.mxu0 %v1025
    %1076 = vmatprep.subr.mxu0 %v1024
    %1077 = vmatpush1.msra.mxu0 %v1023
    %1078 = vmatprep.subr.mxu0 %v1022
    %1079 = vmatpush1.msra.mxu0 %v1021
    %1080 = vmatprep.subr.mxu0 %v1020
    %1081 = vmatpush1.msra.mxu0 %v1019
    %1082 = vmatprep.subr.mxu0 0.0
    %1083 = vmatpush2.msra.mxu0 0.0
    %1084 = vmatprep.subr.mxu0 0.0
    %1085 = vmatpush2.msra.mxu0 0.0
    %1086 = vmatprep.subr.mxu0 0.0
    %1087 = vmatpush2.msra.mxu0 0.0
    %1088 = vmatprep.subr.mxu0 0.0
    %1089 = vmatpush2.msra.mxu0 0.0
    %1090 = vmatprep.subr.mxu0 0.0
    %1091 = vmatpush2.msra.mxu0 0.0
    %1092 = vmatprep.subr.mxu0 0.0
    %1093 = vmatpush2.msra.mxu0 0.0
    %1094 = vmatprep.subr.mxu0 0.0
    %1095 = vmatpush2.msra.mxu0 0.0
    %1096 = vmatprep.subr.mxu0 0.0
    %1097 = vmatpush2.msra.mxu0 0.0
    %1098 = vmatprep.subr.mxu0 0.0
    %1099 = vmatpush2.msra.mxu0 0.0
    %1100 = vmatprep.subr.mxu0 0.0
    %1101 = vmatpush2.msra.mxu0 0.0
    %1102 = vmatprep.subr.mxu0 0.0
    %1103 = vmatpush2.msra.mxu0 0.0
    %1104 = vmatprep.subr.mxu0 0.0
    %1105 = vmatpush2.msra.mxu0 0.0
    %1106 = vmatprep.subr.mxu0 0.0
    %1107 = vmatpush2.msra.mxu0 0.0
    %1108 = vmatprep.subr.mxu0 0.0
    %1109 = vmatpush2.msra.mxu0 0.0
    %1110 = vmatprep.subr.mxu0 0.0
    %1111 = vmatpush2.msra.mxu0 0.0
    %1112 = vmatprep.subr.mxu0 0.0
    %1113 = vmatpush2.msra.mxu0 0.0
    %1114 = vmatprep.mubr.f32.mxu0 0.0
    %1115 = vmatmul.mubr.f32.gmra.mxu0 %v1048
    %v1116 = vpop.f32.mrf.mxu0
    %v1117 = vadd.f32 %v1040, %v1116
    %v1118 = vpop.f32.mrf.mxu0
    %v1119 = vadd.f32 %v1044, %v1118
    %1120 = vdwg.mxu0
    %v1121 = vld [vmem:[#allocation2 + $0x20] sm:$0xff]
    %v1122 = vld [vmem:[#allocation2 + $0x58] sm:$0xff]
    %v1123 = vadd.f32 %v1121, %v1117
    %v1124 = vxor.u32 %v1123, 2147483648
    %v1125 = vmul.f32 %v1124, 1.442695
    %v1126 = vpow.pop %v1125
    %v1127 = vadd.f32 %v1126, 1.0
    %v1128 = vrcp.pop %v1127
    %v1129 = vmul.f32 1.0, %v1128
    %1131 = vrot.lane.b32.xlu0 %v1117, 64
    %v1132 = vpop.permute.xlu0 %1131
    %v1134 = vmul.f32 %v1129, %v1132
    %1136 = vrot.lane.b32.xlu0 %v1134, 64
    %v1137 = vpop.permute.xlu0 %1136
    %v1139 = vadd.f32 %v1121, %v1137
    %v1140 = vtanh.pop %v1139
    %v1141 = vsub.f32 1.0, %v1129
    %1143 = vrot.lane.b32.xlu0 %v1140, 96
    %v1144 = vpop.permute.xlu0 %1143
    %v1146 = vmul.f32 %v1141, %v1144
    %1147 = vrot.lane.b32.xlu0 %v1018, 32
    %v1148 = vpop.permute.xlu0 %1147
    %v1150 = vmul.f32 %v1129, %v1148
    %v1151 = vadd.f32 %v1146, %v1150
    %v1152 = vadd.f32 %v1122, %v1119
    %v1153 = vxor.u32 %v1152, 2147483648
    %v1154 = vmul.f32 %v1153, 1.442695
    %v1155 = vpow.pop %v1154
    %v1156 = vadd.f32 %v1155, 1.0
    %v1157 = vrcp.pop %v1156
    %v1158 = vmul.f32 1.0, %v1157
    %1160 = vrot.lane.b32.xlu0 %v1119, 64
    %v1161 = vpop.permute.xlu0 %1160
    %v1163 = vmul.f32 %v1158, %v1161
    %1165 = vrot.lane.b32.xlu0 %v1163, 64
    %v1166 = vpop.permute.xlu0 %1165
    %v1168 = vadd.f32 %v1122, %v1166
    %v1169 = vtanh.pop %v1168
    %v1170 = vsub.f32 1.0, %v1158
    %1172 = vrot.lane.b32.xlu0 %v1169, 96
    %v1173 = vpop.permute.xlu0 %1172
    %v1175 = vmul.f32 %v1170, %v1173
    %v1176 = vmul.f32 %v1158, %v1018
    %v1177 = vadd.f32 %v1175, %v1176
    %1179 = vrot.lane.b32.xlu0 %v1151, 96
    %v1180 = vpop.permute.xlu0 %1179
    %1182 = vst.msk [vmem:[#allocation3 + $0x10] sm:$0xff] %vm848, %v1180
    %1183 = vst.msk [vmem:[#allocation3 + $0x28] sm:$0xff] %vm850, %v1177
    %v1184 = vsel %vm848, %v1180, %v1177
    %v1185 = vld [vmem:[#allocation4 + $0x80] sm:$0xff]
    %v1186 = vld [vmem:[#allocation4 + $0x88] sm:$0xff]
    %v1187 = vld [vmem:[#allocation4 + $0x90] sm:$0xff]
    %v1188 = vld [vmem:[#allocation4 + $0x98] sm:$0xff]
    %v1189 = vld [vmem:[#allocation4 + $0xa0] sm:$0xff]
    %v1190 = vld [vmem:[#allocation4 + $0xa8] sm:$0xff]
    %v1191 = vld [vmem:[#allocation4 + $0xb0] sm:$0xff]
    %v1192 = vld [vmem:[#allocation4 + $0xb8] sm:$0xff]
    %v1193 = vld [vmem:[#allocation4 + $0xc0] sm:$0xff]
    %v1194 = vld [vmem:[#allocation4 + $0xc8] sm:$0xff]
    %v1195 = vld [vmem:[#allocation4 + $0xd0] sm:$0xff]
    %v1196 = vld [vmem:[#allocation4 + $0xd8] sm:$0xff]
    %v1197 = vld [vmem:[#allocation4 + $0xe0] sm:$0xff]
    %v1198 = vld [vmem:[#allocation4 + $0xe8] sm:$0xff]
    %v1199 = vld [vmem:[#allocation4 + $0xf0] sm:$0xff]
    %v1200 = vld [vmem:[#allocation4 + $0xf8] sm:$0xff]
    %v1201 = vld [vmem:[%s703] ss:$8 sm:$0x3]
    %v1203 = vlaneseq
    %v1204 = vshrl.u32 %v1203, 7
    %v1205 = vsub.s32 0, %v1204
    %v1206 = vrot.slane %v1201, %v1205
    %v1207 = vlaneseq
    %v1208 = vshrl.u32 %v1207, 7
    %v1209 = vsub.s32 1, %v1208
    %v1210 = vrot.slane %v1201, %v1209
    %v1214 = vsel %vm243, %v1184, 0
    %1216 = vmatprep.subr.mxu0 0.0
    %1217 = vmatpush1.msra.mxu0 0.0
    %1218 = vmatprep.subr.mxu0 0.0
    %1219 = vmatpush1.msra.mxu0 0.0
    %1220 = vmatprep.subr.mxu0 0.0
    %1221 = vmatpush1.msra.mxu0 0.0
    %1222 = vmatprep.subr.mxu0 0.0
    %1223 = vmatpush1.msra.mxu0 0.0
    %1224 = vmatprep.subr.mxu0 0.0
    %1225 = vmatpush1.msra.mxu0 0.0
    %1226 = vmatprep.subr.mxu0 0.0
    %1227 = vmatpush1.msra.mxu0 0.0
    %1228 = vmatprep.subr.mxu0 0.0
    %1229 = vmatpush1.msra.mxu0 0.0
    %1230 = vmatprep.subr.mxu0 0.0
    %1231 = vmatpush1.msra.mxu0 0.0
    %1232 = vmatprep.subr.mxu0 %v1200
    %1233 = vmatpush1.msra.mxu0 %v1199
    %1234 = vmatprep.subr.mxu0 %v1198
    %1235 = vmatpush1.msra.mxu0 %v1197
    %1236 = vmatprep.subr.mxu0 %v1196
    %1237 = vmatpush1.msra.mxu0 %v1195
    %1238 = vmatprep.subr.mxu0 %v1194
    %1239 = vmatpush1.msra.mxu0 %v1193
    %1240 = vmatprep.subr.mxu0 %v1192
    %1241 = vmatpush1.msra.mxu0 %v1191
    %1242 = vmatprep.subr.mxu0 %v1190
    %1243 = vmatpush1.msra.mxu0 %v1189
    %1244 = vmatprep.subr.mxu0 %v1188
    %1245 = vmatpush1.msra.mxu0 %v1187
    %1246 = vmatprep.subr.mxu0 %v1186
    %1247 = vmatpush1.msra.mxu0 %v1185
    %1248 = vmatprep.subr.mxu0 0.0
    %1249 = vmatpush2.msra.mxu0 0.0
    %1250 = vmatprep.subr.mxu0 0.0
    %1251 = vmatpush2.msra.mxu0 0.0
    %1252 = vmatprep.subr.mxu0 0.0
    %1253 = vmatpush2.msra.mxu0 0.0
    %1254 = vmatprep.subr.mxu0 0.0
    %1255 = vmatpush2.msra.mxu0 0.0
    %1256 = vmatprep.subr.mxu0 0.0
    %1257 = vmatpush2.msra.mxu0 0.0
    %1258 = vmatprep.subr.mxu0 0.0
    %1259 = vmatpush2.msra.mxu0 0.0
    %1260 = vmatprep.subr.mxu0 0.0
    %1261 = vmatpush2.msra.mxu0 0.0
    %1262 = vmatprep.subr.mxu0 0.0
    %1263 = vmatpush2.msra.mxu0 0.0
    %1264 = vmatprep.subr.mxu0 0.0
    %1265 = vmatpush2.msra.mxu0 0.0
    %1266 = vmatprep.subr.mxu0 0.0
    %1267 = vmatpush2.msra.mxu0 0.0
    %1268 = vmatprep.subr.mxu0 0.0
    %1269 = vmatpush2.msra.mxu0 0.0
    %1270 = vmatprep.subr.mxu0 0.0
    %1271 = vmatpush2.msra.mxu0 0.0
    %1272 = vmatprep.subr.mxu0 0.0
    %1273 = vmatpush2.msra.mxu0 0.0
    %1274 = vmatprep.subr.mxu0 0.0
    %1275 = vmatpush2.msra.mxu0 0.0
    %1276 = vmatprep.subr.mxu0 0.0
    %1277 = vmatpush2.msra.mxu0 0.0
    %1278 = vmatprep.subr.mxu0 0.0
    %1279 = vmatpush2.msra.mxu0 0.0
    %1280 = vmatprep.mubr.f32.mxu0 0.0
    %1281 = vmatmul.mubr.f32.gmra.mxu0 %v1214
    %v1282 = vpop.f32.mrf.mxu0
    %v1283 = vadd.f32 %v1206, %v1282
    %v1284 = vpop.f32.mrf.mxu0
    %v1285 = vadd.f32 %v1210, %v1284
    %1286 = vdwg.mxu0
    %v1287 = vld [vmem:[#allocation2 + $0x30] sm:$0xff]
    %v1288 = vld [vmem:[#allocation2 + $0x48] sm:$0xff]
    %v1289 = vadd.f32 %v1287, %v1283
    %v1290 = vxor.u32 %v1289, 2147483648
    %v1291 = vmul.f32 %v1290, 1.442695
    %v1292 = vpow.pop %v1291
    %v1293 = vadd.f32 %v1292, 1.0
    %v1294 = vrcp.pop %v1293
    %v1295 = vmul.f32 1.0, %v1294
    %1297 = vrot.lane.b32.xlu0 %v1283, 64
    %v1298 = vpop.permute.xlu0 %1297
    %v1300 = vmul.f32 %v1295, %v1298
    %1302 = vrot.lane.b32.xlu0 %v1300, 64
    %v1303 = vpop.permute.xlu0 %1302
    %v1305 = vadd.f32 %v1287, %v1303
    %v1306 = vtanh.pop %v1305
    %v1307 = vsub.f32 1.0, %v1295
    %1309 = vrot.lane.b32.xlu0 %v1306, 96
    %v1310 = vpop.permute.xlu0 %1309
    %v1312 = vmul.f32 %v1307, %v1310
    %1313 = vrot.lane.b32.xlu0 %v1184, 32
    %v1314 = vpop.permute.xlu0 %1313
    %v1316 = vmul.f32 %v1295, %v1314
    %v1317 = vadd.f32 %v1312, %v1316
    %v1318 = vadd.f32 %v1288, %v1285
    %v1319 = vxor.u32 %v1318, 2147483648
    %v1320 = vmul.f32 %v1319, 1.442695
    %v1321 = vpow.pop %v1320
    %v1322 = vadd.f32 %v1321, 1.0
    %v1323 = vrcp.pop %v1322
    %v1324 = vmul.f32 1.0, %v1323
    %1326 = vrot.lane.b32.xlu0 %v1285, 64
    %v1327 = vpop.permute.xlu0 %1326
    %v1329 = vmul.f32 %v1324, %v1327
    %1331 = vrot.lane.b32.xlu0 %v1329, 64
    %v1332 = vpop.permute.xlu0 %1331
    %v1334 = vadd.f32 %v1288, %v1332
    %v1335 = vtanh.pop %v1334
    %v1336 = vsub.f32 1.0, %v1324
    %1338 = vrot.lane.b32.xlu0 %v1335, 96
    %v1339 = vpop.permute.xlu0 %1338
    %v1341 = vmul.f32 %v1336, %v1339
    %v1342 = vmul.f32 %v1324, %v1184
    %v1343 = vadd.f32 %v1341, %v1342
    %1345 = vrot.lane.b32.xlu0 %v1317, 96
    %v1346 = vpop.permute.xlu0 %1345
    %1348 = vst.msk [vmem:[#allocation3 + $0x18] sm:$0xff] %vm848, %v1346
    %1349 = vst.msk [vmem:[#allocation3 + $0x20] sm:$0xff] %vm850, %v1343
    %v1350 = vsel %vm848, %v1346, %v1343
    %v1351 = vld [vmem:[#allocation4 + $0x80] sm:$0xff]
    %v1352 = vld [vmem:[#allocation4 + $0x88] sm:$0xff]
    %v1353 = vld [vmem:[#allocation4 + $0x90] sm:$0xff]
    %v1354 = vld [vmem:[#allocation4 + $0x98] sm:$0xff]
    %v1355 = vld [vmem:[#allocation4 + $0xa0] sm:$0xff]
    %v1356 = vld [vmem:[#allocation4 + $0xa8] sm:$0xff]
    %v1357 = vld [vmem:[#allocation4 + $0xb0] sm:$0xff]
    %v1358 = vld [vmem:[#allocation4 + $0xb8] sm:$0xff]
    %v1359 = vld [vmem:[#allocation4 + $0xc0] sm:$0xff]
    %v1360 = vld [vmem:[#allocation4 + $0xc8] sm:$0xff]
    %v1361 = vld [vmem:[#allocation4 + $0xd0] sm:$0xff]
    %v1362 = vld [vmem:[#allocation4 + $0xd8] sm:$0xff]
    %v1363 = vld [vmem:[#allocation4 + $0xe0] sm:$0xff]
    %v1364 = vld [vmem:[#allocation4 + $0xe8] sm:$0xff]
    %v1365 = vld [vmem:[#allocation4 + $0xf0] sm:$0xff]
    %v1366 = vld [vmem:[#allocation4 + $0xf8] sm:$0xff]
    %v1367 = vld [vmem:[%s703] ss:$8 sm:$0x3]
    %v1369 = vlaneseq
    %v1370 = vshrl.u32 %v1369, 7
    %v1371 = vsub.s32 0, %v1370
    %v1372 = vrot.slane %v1367, %v1371
    %v1373 = vlaneseq
    %v1374 = vshrl.u32 %v1373, 7
    %v1375 = vsub.s32 1, %v1374
    %v1376 = vrot.slane %v1367, %v1375
    %v1380 = vsel %vm243, %v1350, 0
    %1382 = vmatprep.subr.mxu0 0.0
    %1383 = vmatpush1.msra.mxu0 0.0
    %1384 = vmatprep.subr.mxu0 0.0
    %1385 = vmatpush1.msra.mxu0 0.0
    %1386 = vmatprep.subr.mxu0 0.0
    %1387 = vmatpush1.msra.mxu0 0.0
    %1388 = vmatprep.subr.mxu0 0.0
    %1389 = vmatpush1.msra.mxu0 0.0
    %1390 = vmatprep.subr.mxu0 0.0
    %1391 = vmatpush1.msra.mxu0 0.0
    %1392 = vmatprep.subr.mxu0 0.0
    %1393 = vmatpush1.msra.mxu0 0.0
    %1394 = vmatprep.subr.mxu0 0.0
    %1395 = vmatpush1.msra.mxu0 0.0
    %1396 = vmatprep.subr.mxu0 0.0
    %1397 = vmatpush1.msra.mxu0 0.0
    %1398 = vmatprep.subr.mxu0 %v1366
    %1399 = vmatpush1.msra.mxu0 %v1365
    %1400 = vmatprep.subr.mxu0 %v1364
    %1401 = vmatpush1.msra.mxu0 %v1363
    %1402 = vmatprep.subr.mxu0 %v1362
    %1403 = vmatpush1.msra.mxu0 %v1361
    %1404 = vmatprep.subr.mxu0 %v1360
    %1405 = vmatpush1.msra.mxu0 %v1359
    %1406 = vmatprep.subr.mxu0 %v1358
    %1407 = vmatpush1.msra.mxu0 %v1357
    %1408 = vmatprep.subr.mxu0 %v1356
    %1409 = vmatpush1.msra.mxu0 %v1355
    %1410 = vmatprep.subr.mxu0 %v1354
    %1411 = vmatpush1.msra.mxu0 %v1353
    %1412 = vmatprep.subr.mxu0 %v1352
    %1413 = vmatpush1.msra.mxu0 %v1351
    %1414 = vmatprep.subr.mxu0 0.0
    %1415 = vmatpush2.msra.mxu0 0.0
    %1416 = vmatprep.subr.mxu0 0.0
    %1417 = vmatpush2.msra.mxu0 0.0
    %1418 = vmatprep.subr.mxu0 0.0
    %1419 = vmatpush2.msra.mxu0 0.0
    %1420 = vmatprep.subr.mxu0 0.0
    %1421 = vmatpush2.msra.mxu0 0.0
    %1422 = vmatprep.subr.mxu0 0.0
    %1423 = vmatpush2.msra.mxu0 0.0
    %1424 = vmatprep.subr.mxu0 0.0
    %1425 = vmatpush2.msra.mxu0 0.0
    %1426 = vmatprep.subr.mxu0 0.0
    %1427 = vmatpush2.msra.mxu0 0.0
    %1428 = vmatprep.subr.mxu0 0.0
    %1429 = vmatpush2.msra.mxu0 0.0
    %1430 = vmatprep.subr.mxu0 0.0
    %1431 = vmatpush2.msra.mxu0 0.0
    %1432 = vmatprep.subr.mxu0 0.0
    %1433 = vmatpush2.msra.mxu0 0.0
    %1434 = vmatprep.subr.mxu0 0.0
    %1435 = vmatpush2.msra.mxu0 0.0
    %1436 = vmatprep.subr.mxu0 0.0
    %1437 = vmatpush2.msra.mxu0 0.0
    %1438 = vmatprep.subr.mxu0 0.0
    %1439 = vmatpush2.msra.mxu0 0.0
    %1440 = vmatprep.subr.mxu0 0.0
    %1441 = vmatpush2.msra.mxu0 0.0
    %1442 = vmatprep.subr.mxu0 0.0
    %1443 = vmatpush2.msra.mxu0 0.0
    %1444 = vmatprep.subr.mxu0 0.0
    %1445 = vmatpush2.msra.mxu0 0.0
    %1446 = vmatprep.mubr.f32.mxu0 0.0
    %1447 = vmatmul.mubr.f32.gmra.mxu0 %v1380
    %v1448 = vpop.f32.mrf.mxu0
    %v1449 = vadd.f32 %v1372, %v1448
    %v1450 = vpop.f32.mrf.mxu0
    %v1451 = vadd.f32 %v1376, %v1450
    %1452 = vdwg.mxu0
    %v1453 = vld [vmem:[#allocation2 + $0x40] sm:$0xff]
    %v1454 = vld [vmem:[#allocation2 + $0x38] sm:$0xff]
    %v1455 = vadd.f32 %v1453, %v1449
    %v1456 = vxor.u32 %v1455, 2147483648
    %v1457 = vmul.f32 %v1456, 1.442695
    %v1458 = vpow.pop %v1457
    %v1459 = vadd.f32 %v1458, 1.0
    %v1460 = vrcp.pop %v1459
    %v1461 = vmul.f32 1.0, %v1460
    %1463 = vrot.lane.b32.xlu0 %v1449, 64
    %v1464 = vpop.permute.xlu0 %1463
    %v1466 = vmul.f32 %v1461, %v1464
    %1468 = vrot.lane.b32.xlu0 %v1466, 64
    %v1469 = vpop.permute.xlu0 %1468
    %v1471 = vadd.f32 %v1453, %v1469
    %v1472 = vtanh.pop %v1471
    %v1473 = vsub.f32 1.0, %v1461
    %1475 = vrot.lane.b32.xlu0 %v1472, 96
    %v1476 = vpop.permute.xlu0 %1475
    %v1478 = vmul.f32 %v1473, %v1476
    %1479 = vrot.lane.b32.xlu0 %v1350, 32
    %v1480 = vpop.permute.xlu0 %1479
    %v1482 = vmul.f32 %v1461, %v1480
    %v1483 = vadd.f32 %v1478, %v1482
    %v1484 = vadd.f32 %v1454, %v1451
    %v1485 = vxor.u32 %v1484, 2147483648
    %v1486 = vmul.f32 %v1485, 1.442695
    %v1487 = vpow.pop %v1486
    %v1488 = vadd.f32 %v1487, 1.0
    %v1489 = vrcp.pop %v1488
    %v1490 = vmul.f32 1.0, %v1489
    %1492 = vrot.lane.b32.xlu0 %v1451, 64
    %v1493 = vpop.permute.xlu0 %1492
    %v1495 = vmul.f32 %v1490, %v1493
    %1497 = vrot.lane.b32.xlu0 %v1495, 64
    %v1498 = vpop.permute.xlu0 %1497
    %v1500 = vadd.f32 %v1454, %v1498
    %v1501 = vtanh.pop %v1500
    %v1502 = vsub.f32 1.0, %v1490
    %1504 = vrot.lane.b32.xlu0 %v1501, 96
    %v1505 = vpop.permute.xlu0 %1504
    %v1507 = vmul.f32 %v1502, %v1505
    %v1508 = vmul.f32 %v1490, %v1350
    %v1509 = vadd.f32 %v1507, %v1508
    %1511 = vrot.lane.b32.xlu0 %v1483, 96
    %v1512 = vpop.permute.xlu0 %1511
    %1514 = vst.msk [vmem:[#allocation3 + $0x20] sm:$0xff] %vm848, %v1512
    %1515 = vst.msk [vmem:[#allocation3 + $0x18] sm:$0xff] %vm850, %v1509
    %v1516 = vsel %vm848, %v1512, %v1509
    %v1517 = vld [vmem:[#allocation4 + $0x80] sm:$0xff]
    %v1518 = vld [vmem:[#allocation4 + $0x88] sm:$0xff]
    %v1519 = vld [vmem:[#allocation4 + $0x90] sm:$0xff]
    %v1520 = vld [vmem:[#allocation4 + $0x98] sm:$0xff]
    %v1521 = vld [vmem:[#allocation4 + $0xa0] sm:$0xff]
    %v1522 = vld [vmem:[#allocation4 + $0xa8] sm:$0xff]
    %v1523 = vld [vmem:[#allocation4 + $0xb0] sm:$0xff]
    %v1524 = vld [vmem:[#allocation4 + $0xb8] sm:$0xff]
    %v1525 = vld [vmem:[#allocation4 + $0xc0] sm:$0xff]
    %v1526 = vld [vmem:[#allocation4 + $0xc8] sm:$0xff]
    %v1527 = vld [vmem:[#allocation4 + $0xd0] sm:$0xff]
    %v1528 = vld [vmem:[#allocation4 + $0xd8] sm:$0xff]
    %v1529 = vld [vmem:[#allocation4 + $0xe0] sm:$0xff]
    %v1530 = vld [vmem:[#allocation4 + $0xe8] sm:$0xff]
    %v1531 = vld [vmem:[#allocation4 + $0xf0] sm:$0xff]
    %v1532 = vld [vmem:[#allocation4 + $0xf8] sm:$0xff]
    %v1533 = vld [vmem:[%s703] ss:$8 sm:$0x3]
    %v1535 = vlaneseq
    %v1536 = vshrl.u32 %v1535, 7
    %v1537 = vsub.s32 0, %v1536
    %v1538 = vrot.slane %v1533, %v1537
    %v1539 = vlaneseq
    %v1540 = vshrl.u32 %v1539, 7
    %v1541 = vsub.s32 1, %v1540
    %v1542 = vrot.slane %v1533, %v1541
    %v1546 = vsel %vm243, %v1516, 0
    %1548 = vmatprep.subr.mxu0 0.0
    %1549 = vmatpush1.msra.mxu0 0.0
    %1550 = vmatprep.subr.mxu0 0.0
    %1551 = vmatpush1.msra.mxu0 0.0
    %1552 = vmatprep.subr.mxu0 0.0
    %1553 = vmatpush1.msra.mxu0 0.0
    %1554 = vmatprep.subr.mxu0 0.0
    %1555 = vmatpush1.msra.mxu0 0.0
    %1556 = vmatprep.subr.mxu0 0.0
    %1557 = vmatpush1.msra.mxu0 0.0
    %1558 = vmatprep.subr.mxu0 0.0
    %1559 = vmatpush1.msra.mxu0 0.0
    %1560 = vmatprep.subr.mxu0 0.0
    %1561 = vmatpush1.msra.mxu0 0.0
    %1562 = vmatprep.subr.mxu0 0.0
    %1563 = vmatpush1.msra.mxu0 0.0
    %1564 = vmatprep.subr.mxu0 %v1532
    %1565 = vmatpush1.msra.mxu0 %v1531
    %1566 = vmatprep.subr.mxu0 %v1530
    %1567 = vmatpush1.msra.mxu0 %v1529
    %1568 = vmatprep.subr.mxu0 %v1528
    %1569 = vmatpush1.msra.mxu0 %v1527
    %1570 = vmatprep.subr.mxu0 %v1526
    %1571 = vmatpush1.msra.mxu0 %v1525
    %1572 = vmatprep.subr.mxu0 %v1524
    %1573 = vmatpush1.msra.mxu0 %v1523
    %1574 = vmatprep.subr.mxu0 %v1522
    %1575 = vmatpush1.msra.mxu0 %v1521
    %1576 = vmatprep.subr.mxu0 %v1520
    %1577 = vmatpush1.msra.mxu0 %v1519
    %1578 = vmatprep.subr.mxu0 %v1518
    %1579 = vmatpush1.msra.mxu0 %v1517
    %1580 = vmatprep.subr.mxu0 0.0
    %1581 = vmatpush2.msra.mxu0 0.0
    %1582 = vmatprep.subr.mxu0 0.0
    %1583 = vmatpush2.msra.mxu0 0.0
    %1584 = vmatprep.subr.mxu0 0.0
    %1585 = vmatpush2.msra.mxu0 0.0
    %1586 = vmatprep.subr.mxu0 0.0
    %1587 = vmatpush2.msra.mxu0 0.0
    %1588 = vmatprep.subr.mxu0 0.0
    %1589 = vmatpush2.msra.mxu0 0.0
    %1590 = vmatprep.subr.mxu0 0.0
    %1591 = vmatpush2.msra.mxu0 0.0
    %1592 = vmatprep.subr.mxu0 0.0
    %1593 = vmatpush2.msra.mxu0 0.0
    %1594 = vmatprep.subr.mxu0 0.0
    %1595 = vmatpush2.msra.mxu0 0.0
    %1596 = vmatprep.subr.mxu0 0.0
    %1597 = vmatpush2.msra.mxu0 0.0
    %1598 = vmatprep.subr.mxu0 0.0
    %1599 = vmatpush2.msra.mxu0 0.0
    %1600 = vmatprep.subr.mxu0 0.0
    %1601 = vmatpush2.msra.mxu0 0.0
    %1602 = vmatprep.subr.mxu0 0.0
    %1603 = vmatpush2.msra.mxu0 0.0
    %1604 = vmatprep.subr.mxu0 0.0
    %1605 = vmatpush2.msra.mxu0 0.0
    %1606 = vmatprep.subr.mxu0 0.0
    %1607 = vmatpush2.msra.mxu0 0.0
    %1608 = vmatprep.subr.mxu0 0.0
    %1609 = vmatpush2.msra.mxu0 0.0
    %1610 = vmatprep.subr.mxu0 0.0
    %1611 = vmatpush2.msra.mxu0 0.0
    %1612 = vmatprep.mubr.f32.mxu0 0.0
    %1613 = vmatmul.mubr.f32.gmra.mxu0 %v1546
    %v1614 = vpop.f32.mrf.mxu0
    %v1615 = vadd.f32 %v1538, %v1614
    %v1616 = vpop.f32.mrf.mxu0
    %v1617 = vadd.f32 %v1542, %v1616
    %1618 = vdwg.mxu0
    %v1619 = vld [vmem:[#allocation2 + $0x50] sm:$0xff]
    %v1620 = vld [vmem:[#allocation2 + $0x28] sm:$0xff]
    %v1621 = vadd.f32 %v1619, %v1615
    %v1622 = vxor.u32 %v1621, 2147483648
    %v1623 = vmul.f32 %v1622, 1.442695
    %v1624 = vpow.pop %v1623
    %v1625 = vadd.f32 %v1624, 1.0
    %v1626 = vrcp.pop %v1625
    %v1627 = vmul.f32 1.0, %v1626
    %1629 = vrot.lane.b32.xlu0 %v1615, 64
    %v1630 = vpop.permute.xlu0 %1629
    %v1632 = vmul.f32 %v1627, %v1630
    %1634 = vrot.lane.b32.xlu0 %v1632, 64
    %v1635 = vpop.permute.xlu0 %1634
    %v1637 = vadd.f32 %v1619, %v1635
    %v1638 = vtanh.pop %v1637
    %v1639 = vsub.f32 1.0, %v1627
    %1641 = vrot.lane.b32.xlu0 %v1638, 96
    %v1642 = vpop.permute.xlu0 %1641
    %v1644 = vmul.f32 %v1639, %v1642
    %1645 = vrot.lane.b32.xlu0 %v1516, 32
    %v1646 = vpop.permute.xlu0 %1645
    %v1648 = vmul.f32 %v1627, %v1646
    %v1649 = vadd.f32 %v1644, %v1648
    %v1650 = vadd.f32 %v1620, %v1617
    %v1651 = vxor.u32 %v1650, 2147483648
    %v1652 = vmul.f32 %v1651, 1.442695
    %v1653 = vpow.pop %v1652
    %v1654 = vadd.f32 %v1653, 1.0
    %v1655 = vrcp.pop %v1654
    %v1656 = vmul.f32 1.0, %v1655
    %1658 = vrot.lane.b32.xlu0 %v1617, 64
    %v1659 = vpop.permute.xlu0 %1658
    %v1661 = vmul.f32 %v1656, %v1659
    %1663 = vrot.lane.b32.xlu0 %v1661, 64
    %v1664 = vpop.permute.xlu0 %1663
    %v1666 = vadd.f32 %v1620, %v1664
    %v1667 = vtanh.pop %v1666
    %v1668 = vsub.f32 1.0, %v1656
    %1670 = vrot.lane.b32.xlu0 %v1667, 96
    %v1671 = vpop.permute.xlu0 %1670
    %v1673 = vmul.f32 %v1668, %v1671
    %v1674 = vmul.f32 %v1656, %v1516
    %v1675 = vadd.f32 %v1673, %v1674
    %1677 = vrot.lane.b32.xlu0 %v1649, 96
    %v1678 = vpop.permute.xlu0 %1677
    %1680 = vst.msk [vmem:[#allocation3 + $0x28] sm:$0xff] %vm848, %v1678
    %1681 = vst.msk [vmem:[#allocation3 + $0x10] sm:$0xff] %vm850, %v1675
    %v1682 = vsel %vm848, %v1678, %v1675
    %v1683 = vld [vmem:[#allocation4 + $0x80] sm:$0xff]
    %v1684 = vld [vmem:[#allocation4 + $0x88] sm:$0xff]
    %v1685 = vld [vmem:[#allocation4 + $0x90] sm:$0xff]
    %v1686 = vld [vmem:[#allocation4 + $0x98] sm:$0xff]
    %v1687 = vld [vmem:[#allocation4 + $0xa0] sm:$0xff]
    %v1688 = vld [vmem:[#allocation4 + $0xa8] sm:$0xff]
    %v1689 = vld [vmem:[#allocation4 + $0xb0] sm:$0xff]
    %v1690 = vld [vmem:[#allocation4 + $0xb8] sm:$0xff]
    %v1691 = vld [vmem:[#allocation4 + $0xc0] sm:$0xff]
    %v1692 = vld [vmem:[#allocation4 + $0xc8] sm:$0xff]
    %v1693 = vld [vmem:[#allocation4 + $0xd0] sm:$0xff]
    %v1694 = vld [vmem:[#allocation4 + $0xd8] sm:$0xff]
    %v1695 = vld [vmem:[#allocation4 + $0xe0] sm:$0xff]
    %v1696 = vld [vmem:[#allocation4 + $0xe8] sm:$0xff]
    %v1697 = vld [vmem:[#allocation4 + $0xf0] sm:$0xff]
    %v1698 = vld [vmem:[#allocation4 + $0xf8] sm:$0xff]
    %v1699 = vld [vmem:[%s703] ss:$8 sm:$0x3]
    %v1701 = vlaneseq
    %v1702 = vshrl.u32 %v1701, 7
    %v1703 = vsub.s32 0, %v1702
    %v1704 = vrot.slane %v1699, %v1703
    %v1705 = vlaneseq
    %v1706 = vshrl.u32 %v1705, 7
    %v1707 = vsub.s32 1, %v1706
    %v1708 = vrot.slane %v1699, %v1707
    %v1712 = vsel %vm243, %v1682, 0
    %1714 = vmatprep.subr.mxu0 0.0
    %1715 = vmatpush1.msra.mxu0 0.0
    %1716 = vmatprep.subr.mxu0 0.0
    %1717 = vmatpush1.msra.mxu0 0.0
    %1718 = vmatprep.subr.mxu0 0.0
    %1719 = vmatpush1.msra.mxu0 0.0
    %1720 = vmatprep.subr.mxu0 0.0
    %1721 = vmatpush1.msra.mxu0 0.0
    %1722 = vmatprep.subr.mxu0 0.0
    %1723 = vmatpush1.msra.mxu0 0.0
    %1724 = vmatprep.subr.mxu0 0.0
    %1725 = vmatpush1.msra.mxu0 0.0
    %1726 = vmatprep.subr.mxu0 0.0
    %1727 = vmatpush1.msra.mxu0 0.0
    %1728 = vmatprep.subr.mxu0 0.0
    %1729 = vmatpush1.msra.mxu0 0.0
    %1730 = vmatprep.subr.mxu0 %v1698
    %1731 = vmatpush1.msra.mxu0 %v1697
    %1732 = vmatprep.subr.mxu0 %v1696
    %1733 = vmatpush1.msra.mxu0 %v1695
    %1734 = vmatprep.subr.mxu0 %v1694
    %1735 = vmatpush1.msra.mxu0 %v1693
    %1736 = vmatprep.subr.mxu0 %v1692
    %1737 = vmatpush1.msra.mxu0 %v1691
    %1738 = vmatprep.subr.mxu0 %v1690
    %1739 = vmatpush1.msra.mxu0 %v1689
    %1740 = vmatprep.subr.mxu0 %v1688
    %1741 = vmatpush1.msra.mxu0 %v1687
    %1742 = vmatprep.subr.mxu0 %v1686
    %1743 = vmatpush1.msra.mxu0 %v1685
    %1744 = vmatprep.subr.mxu0 %v1684
    %1745 = vmatpush1.msra.mxu0 %v1683
    %1746 = vmatprep.subr.mxu0 0.0
    %1747 = vmatpush2.msra.mxu0 0.0
    %1748 = vmatprep.subr.mxu0 0.0
    %1749 = vmatpush2.msra.mxu0 0.0
    %1750 = vmatprep.subr.mxu0 0.0
    %1751 = vmatpush2.msra.mxu0 0.0
    %1752 = vmatprep.subr.mxu0 0.0
    %1753 = vmatpush2.msra.mxu0 0.0
    %1754 = vmatprep.subr.mxu0 0.0
    %1755 = vmatpush2.msra.mxu0 0.0
    %1756 = vmatprep.subr.mxu0 0.0
    %1757 = vmatpush2.msra.mxu0 0.0
    %1758 = vmatprep.subr.mxu0 0.0
    %1759 = vmatpush2.msra.mxu0 0.0
    %1760 = vmatprep.subr.mxu0 0.0
    %1761 = vmatpush2.msra.mxu0 0.0
    %1762 = vmatprep.subr.mxu0 0.0
    %1763 = vmatpush2.msra.mxu0 0.0
    %1764 = vmatprep.subr.mxu0 0.0
    %1765 = vmatpush2.msra.mxu0 0.0
    %1766 = vmatprep.subr.mxu0 0.0
    %1767 = vmatpush2.msra.mxu0 0.0
    %1768 = vmatprep.subr.mxu0 0.0
    %1769 = vmatpush2.msra.mxu0 0.0
    %1770 = vmatprep.subr.mxu0 0.0
    %1771 = vmatpush2.msra.mxu0 0.0
    %1772 = vmatprep.subr.mxu0 0.0
    %1773 = vmatpush2.msra.mxu0 0.0
    %1774 = vmatprep.subr.mxu0 0.0
    %1775 = vmatpush2.msra.mxu0 0.0
    %1776 = vmatprep.subr.mxu0 0.0
    %1777 = vmatpush2.msra.mxu0 0.0
    %1778 = vmatprep.mubr.f32.mxu0 0.0
    %1779 = vmatmul.mubr.f32.gmra.mxu0 %v1712
    %v1780 = vpop.f32.mrf.mxu0
    %v1781 = vadd.f32 %v1704, %v1780
    %v1782 = vpop.f32.mrf.mxu0
    %v1783 = vadd.f32 %v1708, %v1782
    %1784 = vdwg.mxu0
    %v1785 = vld [vmem:[#allocation2 + $0x60] sm:$0xff]
    %v1786 = vld [vmem:[#allocation2 + $0x18] sm:$0xff]
    %v1787 = vadd.f32 %v1785, %v1781
    %v1788 = vxor.u32 %v1787, 2147483648
    %v1789 = vmul.f32 %v1788, 1.442695
    %v1790 = vpow.pop %v1789
    %v1791 = vadd.f32 %v1790, 1.0
    %v1792 = vrcp.pop %v1791
    %v1793 = vmul.f32 1.0, %v1792
    %1795 = vrot.lane.b32.xlu0 %v1781, 64
    %v1796 = vpop.permute.xlu0 %1795
    %v1798 = vmul.f32 %v1793, %v1796
    %1800 = vrot.lane.b32.xlu0 %v1798, 64
    %v1801 = vpop.permute.xlu0 %1800
    %v1803 = vadd.f32 %v1785, %v1801
    %v1804 = vtanh.pop %v1803
    %v1805 = vsub.f32 1.0, %v1793
    %1807 = vrot.lane.b32.xlu0 %v1804, 96
    %v1808 = vpop.permute.xlu0 %1807
    %v1810 = vmul.f32 %v1805, %v1808
    %1811 = vrot.lane.b32.xlu0 %v1682, 32
    %v1812 = vpop.permute.xlu0 %1811
    %v1814 = vmul.f32 %v1793, %v1812
    %v1815 = vadd.f32 %v1810, %v1814
    %v1816 = vadd.f32 %v1786, %v1783
    %v1817 = vxor.u32 %v1816, 2147483648
    %v1818 = vmul.f32 %v1817, 1.442695
    %v1819 = vpow.pop %v1818
    %v1820 = vadd.f32 %v1819, 1.0
    %v1821 = vrcp.pop %v1820
    %v1822 = vmul.f32 1.0, %v1821
    %1824 = vrot.lane.b32.xlu0 %v1783, 64
    %v1825 = vpop.permute.xlu0 %1824
    %v1827 = vmul.f32 %v1822, %v1825
    %1829 = vrot.lane.b32.xlu0 %v1827, 64
    %v1830 = vpop.permute.xlu0 %1829
    %v1832 = vadd.f32 %v1786, %v1830
    %v1833 = vtanh.pop %v1832
    %v1834 = vsub.f32 1.0, %v1822
    %1836 = vrot.lane.b32.xlu0 %v1833, 96
    %v1837 = vpop.permute.xlu0 %1836
    %v1839 = vmul.f32 %v1834, %v1837
    %v1840 = vmul.f32 %v1822, %v1682
    %v1841 = vadd.f32 %v1839, %v1840
    %1843 = vrot.lane.b32.xlu0 %v1815, 96
    %v1844 = vpop.permute.xlu0 %1843
    %1846 = vst.msk [vmem:[#allocation3 + $0x30] sm:$0xff] %vm848, %v1844
    %1847 = vst.msk [vmem:[#allocation3 + $0x8] sm:$0xff] %vm850, %v1841
    %v1848 = vsel %vm848, %v1844, %v1841
    %v1849 = vld [vmem:[#allocation4 + $0x80] sm:$0xff]
    %v1850 = vld [vmem:[#allocation4 + $0x88] sm:$0xff]
    %v1851 = vld [vmem:[#allocation4 + $0x90] sm:$0xff]
    %v1852 = vld [vmem:[#allocation4 + $0x98] sm:$0xff]
    %v1853 = vld [vmem:[#allocation4 + $0xa0] sm:$0xff]
    %v1854 = vld [vmem:[#allocation4 + $0xa8] sm:$0xff]
    %v1855 = vld [vmem:[#allocation4 + $0xb0] sm:$0xff]
    %v1856 = vld [vmem:[#allocation4 + $0xb8] sm:$0xff]
    %v1857 = vld [vmem:[#allocation4 + $0xc0] sm:$0xff]
    %v1858 = vld [vmem:[#allocation4 + $0xc8] sm:$0xff]
    %v1859 = vld [vmem:[#allocation4 + $0xd0] sm:$0xff]
    %v1860 = vld [vmem:[#allocation4 + $0xd8] sm:$0xff]
    %v1861 = vld [vmem:[#allocation4 + $0xe0] sm:$0xff]
    %v1862 = vld [vmem:[#allocation4 + $0xe8] sm:$0xff]
    %v1863 = vld [vmem:[#allocation4 + $0xf0] sm:$0xff]
    %v1864 = vld [vmem:[#allocation4 + $0xf8] sm:$0xff]
    %v1865 = vld [vmem:[%s703] ss:$8 sm:$0x3]
    %v1867 = vlaneseq
    %v1868 = vshrl.u32 %v1867, 7
    %v1869 = vsub.s32 0, %v1868
    %v1870 = vrot.slane %v1865, %v1869
    %v1871 = vlaneseq
    %v1872 = vshrl.u32 %v1871, 7
    %v1873 = vsub.s32 1, %v1872
    %v1874 = vrot.slane %v1865, %v1873
    %v1878 = vsel %vm243, %v1848, 0
    %1880 = vmatprep.subr.mxu0 0.0
    %1881 = vmatpush1.msra.mxu0 0.0
    %1882 = vmatprep.subr.mxu0 0.0
    %1883 = vmatpush1.msra.mxu0 0.0
    %1884 = vmatprep.subr.mxu0 0.0
    %1885 = vmatpush1.msra.mxu0 0.0
    %1886 = vmatprep.subr.mxu0 0.0
    %1887 = vmatpush1.msra.mxu0 0.0
    %1888 = vmatprep.subr.mxu0 0.0
    %1889 = vmatpush1.msra.mxu0 0.0
    %1890 = vmatprep.subr.mxu0 0.0
    %1891 = vmatpush1.msra.mxu0 0.0
    %1892 = vmatprep.subr.mxu0 0.0
    %1893 = vmatpush1.msra.mxu0 0.0
    %1894 = vmatprep.subr.mxu0 0.0
    %1895 = vmatpush1.msra.mxu0 0.0
    %1896 = vmatprep.subr.mxu0 %v1864
    %1897 = vmatpush1.msra.mxu0 %v1863
    %1898 = vmatprep.subr.mxu0 %v1862
    %1899 = vmatpush1.msra.mxu0 %v1861
    %1900 = vmatprep.subr.mxu0 %v1860
    %1901 = vmatpush1.msra.mxu0 %v1859
    %1902 = vmatprep.subr.mxu0 %v1858
    %1903 = vmatpush1.msra.mxu0 %v1857
    %1904 = vmatprep.subr.mxu0 %v1856
    %1905 = vmatpush1.msra.mxu0 %v1855
    %1906 = vmatprep.subr.mxu0 %v1854
    %1907 = vmatpush1.msra.mxu0 %v1853
    %1908 = vmatprep.subr.mxu0 %v1852
    %1909 = vmatpush1.msra.mxu0 %v1851
    %1910 = vmatprep.subr.mxu0 %v1850
    %1911 = vmatpush1.msra.mxu0 %v1849
    %1912 = vmatprep.subr.mxu0 0.0
    %1913 = vmatpush2.msra.mxu0 0.0
    %1914 = vmatprep.subr.mxu0 0.0
    %1915 = vmatpush2.msra.mxu0 0.0
    %1916 = vmatprep.subr.mxu0 0.0
    %1917 = vmatpush2.msra.mxu0 0.0
    %1918 = vmatprep.subr.mxu0 0.0
    %1919 = vmatpush2.msra.mxu0 0.0
    %1920 = vmatprep.subr.mxu0 0.0
    %1921 = vmatpush2.msra.mxu0 0.0
    %1922 = vmatprep.subr.mxu0 0.0
    %1923 = vmatpush2.msra.mxu0 0.0
    %1924 = vmatprep.subr.mxu0 0.0
    %1925 = vmatpush2.msra.mxu0 0.0
    %1926 = vmatprep.subr.mxu0 0.0
    %1927 = vmatpush2.msra.mxu0 0.0
    %1928 = vmatprep.subr.mxu0 0.0
    %1929 = vmatpush2.msra.mxu0 0.0
    %1930 = vmatprep.subr.mxu0 0.0
    %1931 = vmatpush2.msra.mxu0 0.0
    %1932 = vmatprep.subr.mxu0 0.0
    %1933 = vmatpush2.msra.mxu0 0.0
    %1934 = vmatprep.subr.mxu0 0.0
    %1935 = vmatpush2.msra.mxu0 0.0
    %1936 = vmatprep.subr.mxu0 0.0
    %1937 = vmatpush2.msra.mxu0 0.0
    %1938 = vmatprep.subr.mxu0 0.0
    %1939 = vmatpush2.msra.mxu0 0.0
    %1940 = vmatprep.subr.mxu0 0.0
    %1941 = vmatpush2.msra.mxu0 0.0
    %1942 = vmatprep.subr.mxu0 0.0
    %1943 = vmatpush2.msra.mxu0 0.0
    %1944 = vmatprep.mubr.f32.mxu0 0.0
    %1945 = vmatmul.mubr.f32.gmra.mxu0 %v1878
    %v1946 = vpop.f32.mrf.mxu0
    %v1947 = vadd.f32 %v1870, %v1946
    %v1948 = vpop.f32.mrf.mxu0
    %v1949 = vadd.f32 %v1874, %v1948
    %1950 = vdwg.mxu0
    %v1951 = vld [vmem:[#allocation2 + $0x70] sm:$0xff]
    %v1952 = vld [vmem:[#allocation2 + $0x8] sm:$0xff]
    %v1953 = vadd.f32 %v1951, %v1947
    %v1954 = vxor.u32 %v1953, 2147483648
    %v1955 = vmul.f32 %v1954, 1.442695
    %v1956 = vpow.pop %v1955
    %v1957 = vadd.f32 %v1956, 1.0
    %v1958 = vrcp.pop %v1957
    %v1959 = vmul.f32 1.0, %v1958
    %1961 = vrot.lane.b32.xlu0 %v1947, 64
    %v1962 = vpop.permute.xlu0 %1961
    %v1964 = vmul.f32 %v1959, %v1962
    %1966 = vrot.lane.b32.xlu0 %v1964, 64
    %v1967 = vpop.permute.xlu0 %1966
    %v1969 = vadd.f32 %v1951, %v1967
    %v1970 = vtanh.pop %v1969
    %v1971 = vsub.f32 1.0, %v1959
    %1973 = vrot.lane.b32.xlu0 %v1970, 96
    %v1974 = vpop.permute.xlu0 %1973
    %v1976 = vmul.f32 %v1971, %v1974
    %1977 = vrot.lane.b32.xlu0 %v1848, 32
    %v1978 = vpop.permute.xlu0 %1977
    %v1980 = vmul.f32 %v1959, %v1978
    %v1981 = vadd.f32 %v1976, %v1980
    %v1982 = vadd.f32 %v1952, %v1949
    %v1983 = vxor.u32 %v1982, 2147483648
    %v1984 = vmul.f32 %v1983, 1.442695
    %v1985 = vpow.pop %v1984
    %v1986 = vadd.f32 %v1985, 1.0
    %v1987 = vrcp.pop %v1986
    %v1988 = vmul.f32 1.0, %v1987
    %1990 = vrot.lane.b32.xlu0 %v1949, 64
    %v1991 = vpop.permute.xlu0 %1990
    %v1993 = vmul.f32 %v1988, %v1991
    %1995 = vrot.lane.b32.xlu0 %v1993, 64
    %v1996 = vpop.permute.xlu0 %1995
    %v1998 = vadd.f32 %v1952, %v1996
    %v1999 = vtanh.pop %v1998
    %v2000 = vsub.f32 1.0, %v1988
    %2002 = vrot.lane.b32.xlu0 %v1999, 96
    %v2003 = vpop.permute.xlu0 %2002
    %v2005 = vmul.f32 %v2000, %v2003
    %v2006 = vmul.f32 %v1988, %v1848
    %v2007 = vadd.f32 %v2005, %v2006
    %2009 = vrot.lane.b32.xlu0 %v1981, 96
    %v2010 = vpop.permute.xlu0 %2009
    %2012 = vst.msk [vmem:[#allocation3 + $0x38] sm:$0xff] %vm848, %v2010
    %2013 = vst.msk [vmem:[#allocation3] sm:$0xff] %vm850, %v2007
    %v2014 = vld [vmem:[#allocation3] sm:$0xff]
    %v2015 = vld [vmem:[#allocation3 + $0x8] sm:$0xff]
    %v2016 = vld [vmem:[#allocation3 + $0x10] sm:$0xff]
    %v2017 = vld [vmem:[#allocation3 + $0x18] sm:$0xff]
    %v2018 = vld [vmem:[#allocation3 + $0x20] sm:$0xff]
    %v2019 = vld [vmem:[#allocation3 + $0x28] sm:$0xff]
    %v2020 = vld [vmem:[#allocation3 + $0x30] sm:$0xff]
    %v2021 = vld [vmem:[#allocation3 + $0x38] sm:$0xff]
    %v2022 = vld [vmem:[#allocation4 + $0x320] sm:$0xff]
    %v2023 = vld [vmem:[#allocation4 + $0x330] sm:$0xff]
    %v2024 = vld [vmem:[#allocation4 + $0x340] sm:$0xff]
    %v2025 = vld [vmem:[#allocation4 + $0x350] sm:$0xff]
    %v2026 = vld [vmem:[#allocation4 + $0x130] ss:$0 sm:$0xff]
    %v2028 = vsel %vm848, %v684, 0
    %2030 = vmatprep.subr.mxu0 0.0
    %2031 = vmatpush1.msra.mxu0 0.0
    %2032 = vmatprep.subr.mxu0 0.0
    %2033 = vmatpush1.msra.mxu0 0.0
    %2034 = vmatprep.subr.mxu0 0.0
    %2035 = vmatpush1.msra.mxu0 0.0
    %2036 = vmatprep.subr.mxu0 0.0
    %2037 = vmatpush1.msra.mxu0 0.0
    %2038 = vmatprep.subr.mxu0 0.0
    %2039 = vmatpush1.msra.mxu0 0.0
    %2040 = vmatprep.subr.mxu0 0.0
    %2041 = vmatpush1.msra.mxu0 0.0
    %2042 = vmatprep.subr.mxu0 0.0
    %2043 = vmatpush1.msra.mxu0 0.0
    %2044 = vmatprep.subr.mxu0 0.0
    %2045 = vmatpush1.msra.mxu0 0.0
    %2046 = vmatprep.subr.mxu0 0.0
    %2047 = vmatpush1.msra.mxu0 0.0
    %2048 = vmatprep.subr.mxu0 0.0
    %2049 = vmatpush1.msra.mxu0 0.0
    %2050 = vmatprep.subr.mxu0 0.0
    %2051 = vmatpush1.msra.mxu0 0.0
    %2052 = vmatprep.subr.mxu0 0.0
    %2053 = vmatpush1.msra.mxu0 0.0
    %2054 = vmatprep.subr.mxu0 0.0
    %2055 = vmatpush1.msra.mxu0 %v2025
    %2056 = vmatprep.subr.mxu0 0.0
    %2057 = vmatpush1.msra.mxu0 %v2024
    %2058 = vmatprep.subr.mxu0 0.0
    %2059 = vmatpush1.msra.mxu0 %v2023
    %2060 = vmatprep.subr.mxu0 0.0
    %2061 = vmatpush1.msra.mxu0 %v2022
    %2062 = vmatprep.subr.mxu0 0.0
    %2063 = vmatpush2.msra.mxu0 0.0
    %2064 = vmatprep.subr.mxu0 0.0
    %2065 = vmatpush2.msra.mxu0 0.0
    %2066 = vmatprep.subr.mxu0 0.0
    %2067 = vmatpush2.msra.mxu0 0.0
    %2068 = vmatprep.subr.mxu0 0.0
    %2069 = vmatpush2.msra.mxu0 0.0
    %2070 = vmatprep.subr.mxu0 0.0
    %2071 = vmatpush2.msra.mxu0 0.0
    %2072 = vmatprep.subr.mxu0 0.0
    %2073 = vmatpush2.msra.mxu0 0.0
    %2074 = vmatprep.subr.mxu0 0.0
    %2075 = vmatpush2.msra.mxu0 0.0
    %2076 = vmatprep.subr.mxu0 0.0
    %2077 = vmatpush2.msra.mxu0 0.0
    %2078 = vmatprep.subr.mxu0 0.0
    %2079 = vmatpush2.msra.mxu0 0.0
    %2080 = vmatprep.subr.mxu0 0.0
    %2081 = vmatpush2.msra.mxu0 0.0
    %2082 = vmatprep.subr.mxu0 0.0
    %2083 = vmatpush2.msra.mxu0 0.0
    %2084 = vmatprep.subr.mxu0 0.0
    %2085 = vmatpush2.msra.mxu0 0.0
    %2086 = vmatprep.subr.mxu0 0.0
    %2087 = vmatpush2.msra.mxu0 0.0
    %2088 = vmatprep.subr.mxu0 0.0
    %2089 = vmatpush2.msra.mxu0 0.0
    %2090 = vmatprep.subr.mxu0 0.0
    %2091 = vmatpush2.msra.mxu0 0.0
    %2092 = vmatprep.subr.mxu0 0.0
    %2093 = vmatpush2.msra.mxu0 0.0
    %2094 = vmatprep.mubr.f32.mxu0 0.0
    %2095 = vmatmul.mubr.f32.gmra.mxu0 %v2028
    %v2096 = vpop.f32.mrf.mxu0
    %v2097 = vadd.f32 %v2026, %v2096
    %v2098 = vpop.f32.mrf.mxu0
    %2099 = vdwg.mxu0
    %v2100 = vld [vmem:[#allocation4 + $0x360] sm:$0xff]
    %v2101 = vld [vmem:[#allocation4 + $0x370] sm:$0xff]
    %v2102 = vld [vmem:[#allocation4 + $0x380] sm:$0xff]
    %v2103 = vld [vmem:[#allocation4 + $0x390] sm:$0xff]
    %v2104 = vld [vmem:[#allocation4 + $0x3a0] sm:$0xff]
    %v2105 = vld [vmem:[#allocation4 + $0x3b0] sm:$0xff]
    %v2106 = vld [vmem:[#allocation4 + $0x3c0] sm:$0xff]
    %v2107 = vld [vmem:[#allocation4 + $0x3d0] sm:$0xff]
    %v2108 = vld [vmem:[#allocation4 + $0x140] ss:$0 sm:$0xff]
    %v2110 = vsel %vm243, %v2014, 0
    %v2113 = vsel %vm243, %v2015, 0
    %v2116 = vsel %vm243, %v2016, 0
    %v2119 = vsel %vm243, %v2017, 0
    %v2122 = vsel %vm243, %v2018, 0
    %v2125 = vsel %vm243, %v2019, 0
    %v2128 = vsel %vm243, %v2020, 0
    %v2131 = vsel %vm243, %v2021, 0
    %2133 = vmatprep.subr.mxu0 0.0
    %2134 = vmatpush1.msra.mxu0 0.0
    %2135 = vmatprep.subr.mxu0 0.0
    %2136 = vmatpush1.msra.mxu0 0.0
    %2137 = vmatprep.subr.mxu0 0.0
    %2138 = vmatpush1.msra.mxu0 0.0
    %2139 = vmatprep.subr.mxu0 0.0
    %2140 = vmatpush1.msra.mxu0 0.0
    %2141 = vmatprep.subr.mxu0 0.0
    %2142 = vmatpush1.msra.mxu0 0.0
    %2143 = vmatprep.subr.mxu0 0.0
    %2144 = vmatpush1.msra.mxu0 0.0
    %2145 = vmatprep.subr.mxu0 0.0
    %2146 = vmatpush1.msra.mxu0 0.0
    %2147 = vmatprep.subr.mxu0 0.0
    %2148 = vmatpush1.msra.mxu0 0.0
    %2149 = vmatprep.subr.mxu0 0.0
    %2150 = vmatpush1.msra.mxu0 %v2107
    %2151 = vmatprep.subr.mxu0 0.0
    %2152 = vmatpush1.msra.mxu0 %v2106
    %2153 = vmatprep.subr.mxu0 0.0
    %2154 = vmatpush1.msra.mxu0 %v2105
    %2155 = vmatprep.subr.mxu0 0.0
    %2156 = vmatpush1.msra.mxu0 %v2104
    %2157 = vmatprep.subr.mxu0 0.0
    %2158 = vmatpush1.msra.mxu0 %v2103
    %2159 = vmatprep.subr.mxu0 0.0
    %2160 = vmatpush1.msra.mxu0 %v2102
    %2161 = vmatprep.subr.mxu0 0.0
    %2162 = vmatpush1.msra.mxu0 %v2101
    %2163 = vmatprep.subr.mxu0 0.0
    %2164 = vmatpush1.msra.mxu0 %v2100
    %2165 = vmatprep.subr.mxu0 0.0
    %2166 = vmatpush2.msra.mxu0 0.0
    %2167 = vmatprep.subr.mxu0 0.0
    %2168 = vmatpush2.msra.mxu0 0.0
    %2169 = vmatprep.subr.mxu0 0.0
    %2170 = vmatpush2.msra.mxu0 0.0
    %2171 = vmatprep.subr.mxu0 0.0
    %2172 = vmatpush2.msra.mxu0 0.0
    %2173 = vmatprep.subr.mxu0 0.0
    %2174 = vmatpush2.msra.mxu0 0.0
    %2175 = vmatprep.subr.mxu0 0.0
    %2176 = vmatpush2.msra.mxu0 0.0
    %2177 = vmatprep.subr.mxu0 0.0
    %2178 = vmatpush2.msra.mxu0 0.0
    %2179 = vmatprep.subr.mxu0 0.0
    %2180 = vmatpush2.msra.mxu0 0.0
    %2181 = vmatprep.subr.mxu0 0.0
    %2182 = vmatpush2.msra.mxu0 0.0
    %2183 = vmatprep.subr.mxu0 0.0
    %2184 = vmatpush2.msra.mxu0 0.0
    %2185 = vmatprep.subr.mxu0 0.0
    %2186 = vmatpush2.msra.mxu0 0.0
    %2187 = vmatprep.subr.mxu0 0.0
    %2188 = vmatpush2.msra.mxu0 0.0
    %2189 = vmatprep.subr.mxu0 0.0
    %2190 = vmatpush2.msra.mxu0 0.0
    %2191 = vmatprep.subr.mxu0 0.0
    %2192 = vmatpush2.msra.mxu0 0.0
    %2193 = vmatprep.subr.mxu0 0.0
    %2194 = vmatpush2.msra.mxu0 0.0
    %2195 = vmatprep.subr.mxu0 0.0
    %2196 = vmatpush2.msra.mxu0 0.0
    %2197 = vmatprep.mubr.f32.mxu0 0.0
    %2198 = vmatmul.mubr.f32.gmra.mxu0 %v2110
    %v2199 = vpop.f32.mrf.mxu0
    %v2200 = vadd.f32 %v2108, %v2199
    %v2201 = vpop.f32.mrf.mxu0
    %2202 = vmatprep.mubr.f32.mxu0 0.0
    %2203 = vmatmul.mubr.f32.gmra.mxu0 %v2113
    %v2204 = vpop.f32.mrf.mxu0
    %v2205 = vadd.f32 %v2108, %v2204
    %v2206 = vpop.f32.mrf.mxu0
    %2207 = vmatprep.mubr.f32.mxu0 0.0
    %2208 = vmatmul.mubr.f32.gmra.mxu0 %v2116
    %v2209 = vpop.f32.mrf.mxu0
    %v2210 = vadd.f32 %v2108, %v2209
    %v2211 = vpop.f32.mrf.mxu0
    %2212 = vmatprep.mubr.f32.mxu0 0.0
    %2213 = vmatmul.mubr.f32.gmra.mxu0 %v2119
    %v2214 = vpop.f32.mrf.mxu0
    %v2215 = vadd.f32 %v2108, %v2214
    %v2216 = vpop.f32.mrf.mxu0
    %2217 = vmatprep.mubr.f32.mxu0 0.0
    %2218 = vmatmul.mubr.f32.gmra.mxu0 %v2122
    %v2219 = vpop.f32.mrf.mxu0
    %v2220 = vadd.f32 %v2108, %v2219
    %v2221 = vpop.f32.mrf.mxu0
    %2222 = vmatprep.mubr.f32.mxu0 0.0
    %2223 = vmatmul.mubr.f32.gmra.mxu0 %v2125
    %v2224 = vpop.f32.mrf.mxu0
    %v2225 = vadd.f32 %v2108, %v2224
    %v2226 = vpop.f32.mrf.mxu0
    %2227 = vmatprep.mubr.f32.mxu0 0.0
    %2228 = vmatmul.mubr.f32.gmra.mxu0 %v2128
    %v2229 = vpop.f32.mrf.mxu0
    %v2230 = vadd.f32 %v2108, %v2229
    %v2231 = vpop.f32.mrf.mxu0
    %2232 = vmatprep.mubr.f32.mxu0 0.0
    %2233 = vmatmul.mubr.f32.gmra.mxu0 %v2131
    %v2234 = vpop.f32.mrf.mxu0
    %v2235 = vadd.f32 %v2108, %v2234
    %v2236 = vpop.f32.mrf.mxu0
    %2237 = vdwg.mxu0
    %v2238 = vadd.f32 %v2200, %v2097
    %v2239 = vadd.f32 %v2205, %v2097
    %v2240 = vadd.f32 %v2210, %v2097
    %v2241 = vadd.f32 %v2215, %v2097
    %v2242 = vadd.f32 %v2220, %v2097
    %v2243 = vadd.f32 %v2225, %v2097
    %v2244 = vadd.f32 %v2230, %v2097
    %v2245 = vadd.f32 %v2235, %v2097
    %v2246 = vtanh.pop %v2238
    %v2247 = vtanh.pop %v2239
    %v2248 = vtanh.pop %v2240
    %v2249 = vtanh.pop %v2241
    %v2250 = vtanh.pop %v2242
    %v2251 = vtanh.pop %v2243
    %v2252 = vtanh.pop %v2244
    %v2253 = vtanh.pop %v2245
    %v2254 = vld [vmem:[#allocation4 + $0x150] ss:$0 sm:$0xff]
    %v2255 = vmul.f32 %v2246, %v2254
    %v2256 = vmul.f32 %v2247, %v2254
    %v2257 = vmul.f32 %v2248, %v2254
    %v2258 = vmul.f32 %v2249, %v2254
    %v2259 = vmul.f32 %v2250, %v2254
    %v2260 = vmul.f32 %v2251, %v2254
    %v2261 = vmul.f32 %v2252, %v2254
    %v2262 = vmul.f32 %v2253, %v2254
    %v2263 = vsel %vm848, %v2255, 0.0
    %2264 = vadd.xlane.f32.xlu0 %v2263
    %v2265 = vpop.xlane.xlu0 %2264
    %v2266 = vsel %vm848, %v2256, 0.0
    %2267 = vadd.xlane.f32.xlu0 %v2266
    %v2268 = vpop.xlane.xlu0 %2267
    %v2269 = vsel %vm848, %v2257, 0.0
    %2270 = vadd.xlane.f32.xlu0 %v2269
    %v2271 = vpop.xlane.xlu0 %2270
    %v2272 = vsel %vm848, %v2258, 0.0
    %2273 = vadd.xlane.f32.xlu0 %v2272
    %v2274 = vpop.xlane.xlu0 %2273
    %v2275 = vsel %vm848, %v2259, 0.0
    %2276 = vadd.xlane.f32.xlu0 %v2275
    %v2277 = vpop.xlane.xlu0 %2276
    %v2278 = vsel %vm848, %v2260, 0.0
    %2279 = vadd.xlane.f32.xlu0 %v2278
    %v2280 = vpop.xlane.xlu0 %2279
    %v2281 = vsel %vm848, %v2261, 0.0
    %2282 = vadd.xlane.f32.xlu0 %v2281
    %v2283 = vpop.xlane.xlu0 %2282
    %v2284 = vsel %vm848, %v2262, 0.0
    %2285 = vadd.xlane.f32.xlu0 %v2284
    %v2286 = vpop.xlane.xlu0 %2285
    %v2287 = vld [vmem:[#allocation4 + $0x1b0] ss:$0 sm:$0xff]
    %2289 = vset.pattern.permute.xlu0 0
    %2290 = vperm.xlu0 %2289, %v2287
    %v2291 = vpop.permute.xlu0 %2290
    %v2293 = vadd.f32 %v2265, %v2291
    %v2294 = vadd.f32 %v2268, %v2291
    %v2295 = vadd.f32 %v2271, %v2291
    %v2296 = vadd.f32 %v2274, %v2291
    %v2297 = vadd.f32 %v2277, %v2291
    %v2298 = vadd.f32 %v2280, %v2291
    %v2299 = vadd.f32 %v2283, %v2291
    %v2300 = vadd.f32 %v2286, %v2291
    %v2309 = vlaneseq
    %v2310 = vshrl.u32 %v2309, 7
    %v2311 = vsub.s32 %v29, %v2310
    %v2312 = vrot.slane %v2293, %v2311
    %v2313 = vlaneseq
    %v2314 = vshrl.u32 %v2313, 7
    %v2315 = vsub.s32 %v29, %v2314
    %v2316 = vrot.slane %v2294, %v2315
    %v2317 = vlaneseq
    %v2318 = vshrl.u32 %v2317, 7
    %v2319 = vsub.s32 %v29, %v2318
    %v2320 = vrot.slane %v2295, %v2319
    %v2321 = vlaneseq
    %v2322 = vshrl.u32 %v2321, 7
    %v2323 = vsub.s32 %v29, %v2322
    %v2324 = vrot.slane %v2296, %v2323
    %v2325 = vlaneseq
    %v2326 = vshrl.u32 %v2325, 7
    %v2327 = vsub.s32 %v29, %v2326
    %v2328 = vrot.slane %v2297, %v2327
    %v2329 = vlaneseq
    %v2330 = vshrl.u32 %v2329, 7
    %v2331 = vsub.s32 %v29, %v2330
    %v2332 = vrot.slane %v2298, %v2331
    %v2333 = vlaneseq
    %v2334 = vshrl.u32 %v2333, 7
    %v2335 = vsub.s32 %v29, %v2334
    %v2336 = vrot.slane %v2299, %v2335
    %v2337 = vlaneseq
    %v2338 = vshrl.u32 %v2337, 7
    %v2339 = vsub.s32 %v29, %v2338
    %v2340 = vrot.slane %v2300, %v2339
    %vm2341 = vcmask 1041409
    %v2342 = vsel %vm2341, %v2316, %v2312
    %vm2343 = vcmask 1042434
    %v2344 = vsel %vm2343, %v2320, %v2342
    %vm2345 = vcmask 1043459
    %v2346 = vsel %vm2345, %v2324, %v2344
    %vm2347 = vcmask 1044484
    %v2348 = vsel %vm2347, %v2328, %v2346
    %vm2349 = vcmask 1045509
    %v2350 = vsel %vm2349, %v2332, %v2348
    %vm2351 = vcmask 1046534
    %v2352 = vsel %vm2351, %v2336, %v2350
    %vm2353 = vcmask 1047559
    %v2354 = vsel %vm2353, %v2340, %v2352
    %2356 = vxpose.xlu0.b32.start [1/16] %v2354, 128
    %2357 = vxpose.xlu0.b32.cont [2/16] 0.0, 128
    %2358 = vxpose.xlu0.b32.cont [3/16] 0.0, 128
    %2359 = vxpose.xlu0.b32.cont [4/16] 0.0, 128
    %2360 = vxpose.xlu0.b32.cont [5/16] 0.0, 128
    %2361 = vxpose.xlu0.b32.cont [6/16] 0.0, 128
    %2362 = vxpose.xlu0.b32.cont [7/16] 0.0, 128
    %2363 = vxpose.xlu0.b32.cont [8/16] 0.0, 128
    %2364 = vxpose.xlu0.b32.cont [9/16] 0.0, 128
    %2365 = vxpose.xlu0.b32.cont [10/16] 0.0, 128
    %2366 = vxpose.xlu0.b32.cont [11/16] 0.0, 128
    %2367 = vxpose.xlu0.b32.cont [12/16] 0.0, 128
    %2368 = vxpose.xlu0.b32.cont [13/16] 0.0, 128
    %2369 = vxpose.xlu0.b32.cont [14/16] 0.0, 128
    %2370 = vxpose.xlu0.b32.cont [15/16] 0.0, 128
    %2371 = vxpose.xlu0.b32.end [16/16] 0.0, 128
    %v2372 = vpop.trf.xlu0
    %v2373 = vpop.trf.xlu0
    %v2374 = vpop.trf.xlu0
    %v2375 = vpop.trf.xlu0
    %v2376 = vpop.trf.xlu0
    %v2377 = vpop.trf.xlu0
    %v2378 = vpop.trf.xlu0
    %v2379 = vpop.trf.xlu0
    %v2380 = vpop.trf.xlu0
    %v2381 = vpop.trf.xlu0
    %v2382 = vpop.trf.xlu0
    %v2383 = vpop.trf.xlu0
    %v2384 = vpop.trf.xlu0
    %v2385 = vpop.trf.xlu0
    %v2386 = vpop.trf.xlu0
    %v2387 = vpop.trf.xlu0
    %vm2388 = vcmask 64512
    %v2389 = vsel %vm2388, %v2372, -inf
    %2390 = vmax.xlane.f32.xlu0 %v2389
    %v2391 = vpop.xlane.xlu0 %2390
    %v2392 = vsub.f32 %v2372, %v2391
    %v2393 = vmul.f32 %v2392, 1.442695
    %v2394 = vpow.pop %v2393
    %v2395 = vsel %vm2388, %v2394, 0.0
    %2396 = vadd.xlane.f32.xlu0 %v2395
    %v2397 = vpop.xlane.xlu0 %2396
    %v2398 = vrcp.pop %v2397
    %v2399 = vmul.f32 %v2394, %v2398
    %2401 = vset.pattern.permute.xlu0 0
    %2402 = vperm.xlu0 %2401, %v2399
    %v2403 = vpop.permute.xlu0 %2402
    %v2405 = vmul.f32 %v2403, %v2014
    %v2406 = vadd.f32 %v2405, 0.0
    %2407 = vset.pattern.permute.xlu0 1
    %2408 = vperm.xlu0 %2407, %v2399
    %v2409 = vpop.permute.xlu0 %2408
    %v2411 = vmul.f32 %v2409, %v2015
    %v2412 = vadd.f32 %v2406, %v2411
    %2413 = vset.pattern.permute.xlu0 2
    %2414 = vperm.xlu0 %2413, %v2399
    %v2415 = vpop.permute.xlu0 %2414
    %v2417 = vmul.f32 %v2415, %v2016
    %v2418 = vadd.f32 %v2412, %v2417
    %2419 = vset.pattern.permute.xlu0 3
    %2420 = vperm.xlu0 %2419, %v2399
    %v2421 = vpop.permute.xlu0 %2420
    %v2423 = vmul.f32 %v2421, %v2017
    %v2424 = vadd.f32 %v2418, %v2423
    %2425 = vset.pattern.permute.xlu0 4
    %2426 = vperm.xlu0 %2425, %v2399
    %v2427 = vpop.permute.xlu0 %2426
    %v2429 = vmul.f32 %v2427, %v2018
    %v2430 = vadd.f32 %v2424, %v2429
    %2431 = vset.pattern.permute.xlu0 5
    %2432 = vperm.xlu0 %2431, %v2399
    %v2433 = vpop.permute.xlu0 %2432
    %v2435 = vmul.f32 %v2433, %v2019
    %v2436 = vadd.f32 %v2430, %v2435
    %2437 = vset.pattern.permute.xlu0 6
    %2438 = vperm.xlu0 %2437, %v2399
    %v2439 = vpop.permute.xlu0 %2438
    %v2441 = vmul.f32 %v2439, %v2020
    %v2442 = vadd.f32 %v2436, %v2441
    %2443 = vset.pattern.permute.xlu0 7
    %2444 = vperm.xlu0 %2443, %v2399
    %v2445 = vpop.permute.xlu0 %2444
    %v2447 = vmul.f32 %v2445, %v2021
    %v2448 = vadd.f32 %v2442, %v2447
    %v2449 = vld [vmem:[#allocation4 + $0x3e0] sm:$0xff]
    %v2450 = vld [vmem:[#allocation4 + $0x3f0] sm:$0xff]
    %v2451 = vld [vmem:[#allocation4 + $0x400] sm:$0xff]
    %v2452 = vld [vmem:[#allocation4 + $0x410] sm:$0xff]
    %v2453 = vld [vmem:[#allocation4 + $0x160] ss:$0 sm:$0xff]
    %2454 = vmatprep.subr.mxu0 0.0
    %2455 = vmatpush1.msra.mxu0 0.0
    %2456 = vmatprep.subr.mxu0 0.0
    %2457 = vmatpush1.msra.mxu0 0.0
    %2458 = vmatprep.subr.mxu0 0.0
    %2459 = vmatpush1.msra.mxu0 0.0
    %2460 = vmatprep.subr.mxu0 0.0
    %2461 = vmatpush1.msra.mxu0 0.0
    %2462 = vmatprep.subr.mxu0 0.0
    %2463 = vmatpush1.msra.mxu0 0.0
    %2464 = vmatprep.subr.mxu0 0.0
    %2465 = vmatpush1.msra.mxu0 0.0
    %2466 = vmatprep.subr.mxu0 0.0
    %2467 = vmatpush1.msra.mxu0 0.0
    %2468 = vmatprep.subr.mxu0 0.0
    %2469 = vmatpush1.msra.mxu0 0.0
    %2470 = vmatprep.subr.mxu0 0.0
    %2471 = vmatpush1.msra.mxu0 0.0
    %2472 = vmatprep.subr.mxu0 0.0
    %2473 = vmatpush1.msra.mxu0 0.0
    %2474 = vmatprep.subr.mxu0 0.0
    %2475 = vmatpush1.msra.mxu0 0.0
    %2476 = vmatprep.subr.mxu0 0.0
    %2477 = vmatpush1.msra.mxu0 0.0
    %2478 = vmatprep.subr.mxu0 0.0
    %2479 = vmatpush1.msra.mxu0 %v2452
    %2480 = vmatprep.subr.mxu0 0.0
    %2481 = vmatpush1.msra.mxu0 %v2451
    %2482 = vmatprep.subr.mxu0 0.0
    %2483 = vmatpush1.msra.mxu0 %v2450
    %2484 = vmatprep.subr.mxu0 0.0
    %2485 = vmatpush1.msra.mxu0 %v2449
    %2486 = vmatprep.subr.mxu0 0.0
    %2487 = vmatpush2.msra.mxu0 0.0
    %2488 = vmatprep.subr.mxu0 0.0
    %2489 = vmatpush2.msra.mxu0 0.0
    %2490 = vmatprep.subr.mxu0 0.0
    %2491 = vmatpush2.msra.mxu0 0.0
    %2492 = vmatprep.subr.mxu0 0.0
    %2493 = vmatpush2.msra.mxu0 0.0
    %2494 = vmatprep.subr.mxu0 0.0
    %2495 = vmatpush2.msra.mxu0 0.0
    %2496 = vmatprep.subr.mxu0 0.0
    %2497 = vmatpush2.msra.mxu0 0.0
    %2498 = vmatprep.subr.mxu0 0.0
    %2499 = vmatpush2.msra.mxu0 0.0
    %2500 = vmatprep.subr.mxu0 0.0
    %2501 = vmatpush2.msra.mxu0 0.0
    %2502 = vmatprep.subr.mxu0 0.0
    %2503 = vmatpush2.msra.mxu0 0.0
    %2504 = vmatprep.subr.mxu0 0.0
    %2505 = vmatpush2.msra.mxu0 0.0
    %2506 = vmatprep.subr.mxu0 0.0
    %2507 = vmatpush2.msra.mxu0 0.0
    %2508 = vmatprep.subr.mxu0 0.0
    %2509 = vmatpush2.msra.mxu0 0.0
    %2510 = vmatprep.subr.mxu0 0.0
    %2511 = vmatpush2.msra.mxu0 0.0
    %2512 = vmatprep.subr.mxu0 0.0
    %2513 = vmatpush2.msra.mxu0 0.0
    %2514 = vmatprep.subr.mxu0 0.0
    %2515 = vmatpush2.msra.mxu0 0.0
    %2516 = vmatprep.subr.mxu0 0.0
    %2517 = vmatpush2.msra.mxu0 0.0
    %2518 = vmatprep.mubr.f32.mxu0 0.0
    %2519 = vmatmul.mubr.f32.gmra.mxu0 %v2028
    %v2520 = vpop.f32.mrf.mxu0
    %v2521 = vadd.f32 %v2453, %v2520
    %v2522 = vpop.f32.mrf.mxu0
    %2523 = vdwg.mxu0
    %v2524 = vld [vmem:[#allocation4 + $0x420] sm:$0xff]
    %v2525 = vld [vmem:[#allocation4 + $0x430] sm:$0xff]
    %v2526 = vld [vmem:[#allocation4 + $0x440] sm:$0xff]
    %v2527 = vld [vmem:[#allocation4 + $0x450] sm:$0xff]
    %v2528 = vld [vmem:[#allocation4 + $0x460] sm:$0xff]
    %v2529 = vld [vmem:[#allocation4 + $0x470] sm:$0xff]
    %v2530 = vld [vmem:[#allocation4 + $0x480] sm:$0xff]
    %v2531 = vld [vmem:[#allocation4 + $0x490] sm:$0xff]
    %v2532 = vld [vmem:[#allocation4 + $0x170] ss:$0 sm:$0xff]
    %v2534 = vsel %vm243, %v2448, 0
    %2536 = vmatprep.subr.mxu0 0.0
    %2537 = vmatpush1.msra.mxu0 0.0
    %2538 = vmatprep.subr.mxu0 0.0
    %2539 = vmatpush1.msra.mxu0 0.0
    %2540 = vmatprep.subr.mxu0 0.0
    %2541 = vmatpush1.msra.mxu0 0.0
    %2542 = vmatprep.subr.mxu0 0.0
    %2543 = vmatpush1.msra.mxu0 0.0
    %2544 = vmatprep.subr.mxu0 0.0
    %2545 = vmatpush1.msra.mxu0 0.0
    %2546 = vmatprep.subr.mxu0 0.0
    %2547 = vmatpush1.msra.mxu0 0.0
    %2548 = vmatprep.subr.mxu0 0.0
    %2549 = vmatpush1.msra.mxu0 0.0
    %2550 = vmatprep.subr.mxu0 0.0
    %2551 = vmatpush1.msra.mxu0 0.0
    %2552 = vmatprep.subr.mxu0 0.0
    %2553 = vmatpush1.msra.mxu0 %v2531
    %2554 = vmatprep.subr.mxu0 0.0
    %2555 = vmatpush1.msra.mxu0 %v2530
    %2556 = vmatprep.subr.mxu0 0.0
    %2557 = vmatpush1.msra.mxu0 %v2529
    %2558 = vmatprep.subr.mxu0 0.0
    %2559 = vmatpush1.msra.mxu0 %v2528
    %2560 = vmatprep.subr.mxu0 0.0
    %2561 = vmatpush1.msra.mxu0 %v2527
    %2562 = vmatprep.subr.mxu0 0.0
    %2563 = vmatpush1.msra.mxu0 %v2526
    %2564 = vmatprep.subr.mxu0 0.0
    %2565 = vmatpush1.msra.mxu0 %v2525
    %2566 = vmatprep.subr.mxu0 0.0
    %2567 = vmatpush1.msra.mxu0 %v2524
    %2568 = vmatprep.subr.mxu0 0.0
    %2569 = vmatpush2.msra.mxu0 0.0
    %2570 = vmatprep.subr.mxu0 0.0
    %2571 = vmatpush2.msra.mxu0 0.0
    %2572 = vmatprep.subr.mxu0 0.0
    %2573 = vmatpush2.msra.mxu0 0.0
    %2574 = vmatprep.subr.mxu0 0.0
    %2575 = vmatpush2.msra.mxu0 0.0
    %2576 = vmatprep.subr.mxu0 0.0
    %2577 = vmatpush2.msra.mxu0 0.0
    %2578 = vmatprep.subr.mxu0 0.0
    %2579 = vmatpush2.msra.mxu0 0.0
    %2580 = vmatprep.subr.mxu0 0.0
    %2581 = vmatpush2.msra.mxu0 0.0
    %2582 = vmatprep.subr.mxu0 0.0
    %2583 = vmatpush2.msra.mxu0 0.0
    %2584 = vmatprep.subr.mxu0 0.0
    %2585 = vmatpush2.msra.mxu0 0.0
    %2586 = vmatprep.subr.mxu0 0.0
    %2587 = vmatpush2.msra.mxu0 0.0
    %2588 = vmatprep.subr.mxu0 0.0
    %2589 = vmatpush2.msra.mxu0 0.0
    %2590 = vmatprep.subr.mxu0 0.0
    %2591 = vmatpush2.msra.mxu0 0.0
    %2592 = vmatprep.subr.mxu0 0.0
    %2593 = vmatpush2.msra.mxu0 0.0
    %2594 = vmatprep.subr.mxu0 0.0
    %2595 = vmatpush2.msra.mxu0 0.0
    %2596 = vmatprep.subr.mxu0 0.0
    %2597 = vmatpush2.msra.mxu0 0.0
    %2598 = vmatprep.subr.mxu0 0.0
    %2599 = vmatpush2.msra.mxu0 0.0
    %2600 = vmatprep.mubr.f32.mxu0 0.0
    %2601 = vmatmul.mubr.f32.gmra.mxu0 %v2534
    %v2602 = vpop.f32.mrf.mxu0
    %v2603 = vadd.f32 %v2532, %v2602
    %v2604 = vpop.f32.mrf.mxu0
    %2605 = vdwg.mxu0
    %v2606 = vadd.f32 %v2603, %v2521
    %v2607 = vtanh.pop %v2606
    %v2608 = vld [vmem:[#allocation4 + $0x180] ss:$0 sm:$0xff]
    %v2609 = vmul.f32 %v2607, %v2608
    %v2610 = vsel %vm848, %v2609, 0.0
    %2611 = vadd.xlane.f32.xlu0 %v2610
    %v2612 = vpop.xlane.xlu0 %2611
    %v2613 = vadd.f32 %v2612, %v2287
    %2615 = vrot.lane.b32.xlu0 %v2613, 127
    %v2616 = vpop.permute.xlu0 %2615
    %v2618 = vrot.slane %v2613, 2
    %v2620 = vrot.slane %v2613, 4
    %2621 = vrot.lane.b32.xlu0 %v2620, 1
    %v2622 = vpop.permute.xlu0 %2621
    %vm2624 = vcmask 7168
    %v2625 = vsel %vm2624, %v2616, %v2618
    %vm2626 = vcmask 15360
    %v2627 = vsel %vm2626, %v2625, %v2622
    %vm2628 = vcmask 17408
    %v2629 = vsel %vm2628, %v2627, -inf
    %2630 = vmax.xlane.f32.xlu0 %v2629
    %v2631 = vpop.xlane.xlu0 %2630
    %v2632 = vsub.f32 %v2627, %v2631
    %v2633 = vmul.f32 %v2632, 1.442695
    %v2634 = vpow.pop %v2633
    %v2635 = vsel %vm2628, %v2634, 0.0
    %2636 = vadd.xlane.f32.xlu0 %v2635
    %v2637 = vpop.xlane.xlu0 %2636
    %v2638 = vrcp.pop %v2637
    %v2639 = vmul.f32 %v2634, %v2638
    %2641 = vset.pattern.permute.xlu0 0
    %2642 = vperm.xlu0 %2641, %v2639
    %v2643 = vpop.permute.xlu0 %2642
    %v2645 = vmul.f32 %v2643, %v2448
    %v2646 = vadd.f32 %v2645, 0.0
    %2647 = vset.pattern.permute.xlu0 1
    %2648 = vperm.xlu0 %2647, %v2639
    %v2649 = vpop.permute.xlu0 %2648
    %v2651 = vrot.slane %v2448, 2
    %v2653 = vmul.f32 %v2649, %v2651
    %v2654 = vadd.f32 %v2646, %v2653
    %2655 = vset.pattern.permute.xlu0 2
    %2656 = vperm.xlu0 %2655, %v2639
    %v2657 = vpop.permute.xlu0 %2656
    %v2659 = vrot.slane %v2448, 4
    %v2661 = vmul.f32 %v2657, %v2659
    %v2662 = vadd.f32 %v2654, %v2661
    %v2663 = vld [vmem:[#allocation4 + $0x4a0] sm:$0xff]
    %v2664 = vld [vmem:[#allocation4 + $0x4b0] sm:$0xff]
    %v2665 = vld [vmem:[#allocation4 + $0x4c0] sm:$0xff]
    %v2666 = vld [vmem:[#allocation4 + $0x4d0] sm:$0xff]
    %v2667 = vld [vmem:[#allocation4 + $0x4e0] sm:$0xff]
    %v2668 = vld [vmem:[#allocation4 + $0x4f0] sm:$0xff]
    %v2669 = vld [vmem:[#allocation4 + $0x500] sm:$0xff]
    %v2670 = vld [vmem:[#allocation4 + $0x510] sm:$0xff]
    %v2671 = vld [vmem:[#allocation4 + $0x520] sm:$0xff]
    %v2672 = vld [vmem:[#allocation4 + $0x530] sm:$0xff]
    %v2673 = vld [vmem:[#allocation4 + $0x540] sm:$0xff]
    %v2674 = vld [vmem:[#allocation4 + $0x550] sm:$0xff]
    %2675 = vmatprep.subr.mxu0 0.0
    %2676 = vmatpush1.msra.mxu0 0.0
    %2677 = vmatprep.subr.mxu0 0.0
    %2678 = vmatpush1.msra.mxu0 0.0
    %2679 = vmatprep.subr.mxu0 0.0
    %2680 = vmatpush1.msra.mxu0 0.0
    %2681 = vmatprep.subr.mxu0 0.0
    %2682 = vmatpush1.msra.mxu0 0.0
    %2683 = vmatprep.subr.mxu0 0.0
    %2684 = vmatpush1.msra.mxu0 0.0
    %2685 = vmatprep.subr.mxu0 0.0
    %2686 = vmatpush1.msra.mxu0 0.0
    %2687 = vmatprep.subr.mxu0 0.0
    %2688 = vmatpush1.msra.mxu0 0.0
    %2689 = vmatprep.subr.mxu0 0.0
    %2690 = vmatpush1.msra.mxu0 0.0
    %2691 = vmatprep.subr.mxu0 0.0
    %2692 = vmatpush1.msra.mxu0 0.0
    %2693 = vmatprep.subr.mxu0 0.0
    %2694 = vmatpush1.msra.mxu0 0.0
    %2695 = vmatprep.subr.mxu0 0.0
    %2696 = vmatpush1.msra.mxu0 0.0
    %2697 = vmatprep.subr.mxu0 0.0
    %2698 = vmatpush1.msra.mxu0 0.0
    %2699 = vmatprep.subr.mxu0 0.0
    %2700 = vmatpush1.msra.mxu0 %v2674
    %2701 = vmatprep.subr.mxu0 0.0
    %2702 = vmatpush1.msra.mxu0 %v2673
    %2703 = vmatprep.subr.mxu0 0.0
    %2704 = vmatpush1.msra.mxu0 %v2672
    %2705 = vmatprep.subr.mxu0 0.0
    %2706 = vmatpush1.msra.mxu0 %v2671
    %2707 = vmatprep.subr.mxu0 0.0
    %2708 = vmatpush2.msra.mxu0 0.0
    %2709 = vmatprep.subr.mxu0 0.0
    %2710 = vmatpush2.msra.mxu0 0.0
    %2711 = vmatprep.subr.mxu0 0.0
    %2712 = vmatpush2.msra.mxu0 0.0
    %2713 = vmatprep.subr.mxu0 0.0
    %2714 = vmatpush2.msra.mxu0 0.0
    %2715 = vmatprep.subr.mxu0 0.0
    %2716 = vmatpush2.msra.mxu0 0.0
    %2717 = vmatprep.subr.mxu0 0.0
    %2718 = vmatpush2.msra.mxu0 0.0
    %2719 = vmatprep.subr.mxu0 0.0
    %2720 = vmatpush2.msra.mxu0 0.0
    %2721 = vmatprep.subr.mxu0 0.0
    %2722 = vmatpush2.msra.mxu0 0.0
    %2723 = vmatprep.subr.mxu0 0.0
    %2724 = vmatpush2.msra.mxu0 0.0
    %2725 = vmatprep.subr.mxu0 0.0
    %2726 = vmatpush2.msra.mxu0 0.0
    %2727 = vmatprep.subr.mxu0 0.0
    %2728 = vmatpush2.msra.mxu0 0.0
    %2729 = vmatprep.subr.mxu0 0.0
    %2730 = vmatpush2.msra.mxu0 0.0
    %2731 = vmatprep.subr.mxu0 0.0
    %2732 = vmatpush2.msra.mxu0 0.0
    %2733 = vmatprep.subr.mxu0 0.0
    %2734 = vmatpush2.msra.mxu0 0.0
    %2735 = vmatprep.subr.mxu0 0.0
    %2736 = vmatpush2.msra.mxu0 0.0
    %2737 = vmatprep.subr.mxu0 0.0
    %2738 = vmatpush2.msra.mxu0 0.0
    %2739 = vmatprep.mubr.f32.mxu0 0.0
    %2740 = vmatmul.mubr.f32.gmra.mxu0 %v2028
    %v2741 = vpop.f32.mrf.mxu0
    %v2742 = vadd.f32 0.0, %v2741
    %v2743 = vpop.f32.mrf.mxu0
    %2744 = vdwg.mxu0
    %v2746 = vsel %vm243, %v2662, 0
    %2748 = vmatprep.subr.mxu0 0.0
    %2749 = vmatpush1.msra.mxu0 0.0
    %2750 = vmatprep.subr.mxu0 0.0
    %2751 = vmatpush1.msra.mxu0 0.0
    %2752 = vmatprep.subr.mxu0 0.0
    %2753 = vmatpush1.msra.mxu0 0.0
    %2754 = vmatprep.subr.mxu0 0.0
    %2755 = vmatpush1.msra.mxu0 0.0
    %2756 = vmatprep.subr.mxu0 0.0
    %2757 = vmatpush1.msra.mxu0 0.0
    %2758 = vmatprep.subr.mxu0 0.0
    %2759 = vmatpush1.msra.mxu0 0.0
    %2760 = vmatprep.subr.mxu0 0.0
    %2761 = vmatpush1.msra.mxu0 0.0
    %2762 = vmatprep.subr.mxu0 0.0
    %2763 = vmatpush1.msra.mxu0 0.0
    %2764 = vmatprep.subr.mxu0 0.0
    %2765 = vmatpush1.msra.mxu0 %v2670
    %2766 = vmatprep.subr.mxu0 0.0
    %2767 = vmatpush1.msra.mxu0 %v2669
    %2768 = vmatprep.subr.mxu0 0.0
    %2769 = vmatpush1.msra.mxu0 %v2668
    %2770 = vmatprep.subr.mxu0 0.0
    %2771 = vmatpush1.msra.mxu0 %v2667
    %2772 = vmatprep.subr.mxu0 0.0
    %2773 = vmatpush1.msra.mxu0 %v2666
    %2774 = vmatprep.subr.mxu0 0.0
    %2775 = vmatpush1.msra.mxu0 %v2665
    %2776 = vmatprep.subr.mxu0 0.0
    %2777 = vmatpush1.msra.mxu0 %v2664
    %2778 = vmatprep.subr.mxu0 0.0
    %2779 = vmatpush1.msra.mxu0 %v2663
    %2780 = vmatprep.subr.mxu0 0.0
    %2781 = vmatpush2.msra.mxu0 0.0
    %2782 = vmatprep.subr.mxu0 0.0
    %2783 = vmatpush2.msra.mxu0 0.0
    %2784 = vmatprep.subr.mxu0 0.0
    %2785 = vmatpush2.msra.mxu0 0.0
    %2786 = vmatprep.subr.mxu0 0.0
    %2787 = vmatpush2.msra.mxu0 0.0
    %2788 = vmatprep.subr.mxu0 0.0
    %2789 = vmatpush2.msra.mxu0 0.0
    %2790 = vmatprep.subr.mxu0 0.0
    %2791 = vmatpush2.msra.mxu0 0.0
    %2792 = vmatprep.subr.mxu0 0.0
    %2793 = vmatpush2.msra.mxu0 0.0
    %2794 = vmatprep.subr.mxu0 0.0
    %2795 = vmatpush2.msra.mxu0 0.0
    %2796 = vmatprep.subr.mxu0 0.0
    %2797 = vmatpush2.msra.mxu0 0.0
    %2798 = vmatprep.subr.mxu0 0.0
    %2799 = vmatpush2.msra.mxu0 0.0
    %2800 = vmatprep.subr.mxu0 0.0
    %2801 = vmatpush2.msra.mxu0 0.0
    %2802 = vmatprep.subr.mxu0 0.0
    %2803 = vmatpush2.msra.mxu0 0.0
    %2804 = vmatprep.subr.mxu0 0.0
    %2805 = vmatpush2.msra.mxu0 0.0
    %2806 = vmatprep.subr.mxu0 0.0
    %2807 = vmatpush2.msra.mxu0 0.0
    %2808 = vmatprep.subr.mxu0 0.0
    %2809 = vmatpush2.msra.mxu0 0.0
    %2810 = vmatprep.subr.mxu0 0.0
    %2811 = vmatpush2.msra.mxu0 0.0
    %2812 = vmatprep.mubr.f32.mxu0 0.0
    %2813 = vmatmul.mubr.f32.gmra.mxu0 %v2746
    %v2814 = vpop.f32.mrf.mxu0
    %v2815 = vadd.f32 %v2742, %v2814
    %v2816 = vpop.f32.mrf.mxu0
    %2817 = vdwg.mxu0
    %v2818 = vld [vmem:[#allocation4 + $0x190] ss:$0 sm:$0xff]
    %v2819 = vadd.f32 %v2815, %v2818
    %v2820 = vtanh.pop %v2819
    %v2821 = vld [vmem:[#allocation4 + $0x1a0] ss:$0 sm:$0xff]
    %v2822 = vmul.f32 %v2820, %v2821
    %vm2823 = vcmask 254976
    %v2824 = vsel %vm2823, %v2822, 0.0
    %2825 = vadd.xlane.f32.xlu0 %v2824
    %v2826 = vpop.xlane.xlu0 %2825
    %v2827 = vadd.f32 %v2826, %v2287
    %2828 = vst [vmem:[%s3] sm:$0xff] 0.0
    %2829 = vst.msk [vmem:[%s3] sm:$0xff] %vm2388, %v2399
    %2830 = vrot.lane.b32.xlu0 %v2639, 8
    %v2831 = vpop.permute.xlu0 %2830
    %vm2833 = vcmask 83008
    %2834 = vst.msk [vmem:[%s3] sm:$0x3] %vm2833, %v2831
    %2836 = vrot.lane.b32.xlu0 %v2827, 9
    %v2837 = vpop.permute.xlu0 %2836
    %vm2839 = vcmask 91224
    %2840 = vst.msk [vmem:[%s3] sm:$0x3] %vm2839, %v2837
    // Predicated region
    $region18: #{_lambda_.1} parent=1 // pred_check
      _
    $region19: #{_lambda_.1} parent=1 // pred_check_branch
      %2842 = sbr.rel (0) target = $region21
    $region20: #{_lambda_.1} parent=1 // pred_region
      _
    $region21: #{_lambda_.1} parent=1 // pred_fallthru
      _
    // Predicated region
    $region22: #{_lambda_.1} parent=1 // pred_check
      _
    $region23: #{_lambda_.1} parent=1 // pred_check_branch
      %2844 = sbr.rel (0) target = $region25
    $region24: #{_lambda_.1} parent=1 // pred_region
      _
    $region25: #{_lambda_.1} parent=1 // pred_fallthru
      _
    %2845 = vsyncpa [#allocation5], 1

</llo_original>
